<compile_context>
chip_gen: v7x
topology: tpu7x:2x2x1
jax: 0.10.0
libtpu: 0.0.40
codegen_flags: <defaults>
</compile_context>

<pallas_src>
import math

import jax
import jax.numpy as jnp
from jax.experimental import pallas as pl
from jax.experimental.pallas import tpu as pltpu

# Small, forward-consistent sizes.
B, S, D, H, DFF, N_LAYERS = 2, 8, 32, 4, 64, 2
DH = D // H
EPS = 1e-5  # nn.LayerNorm default

# Rows of the packed per-layer vector slab (shape (N_LAYERS + 1, NROWS, DFF)).
ROW_BQ, ROW_BK, ROW_BV, ROW_BO = 0, 1, 2, 3
ROW_B1, ROW_B2 = 4, 5
ROW_LN1_G, ROW_LN1_B, ROW_LN2_G, ROW_LN2_B = 6, 7, 8, 9
NROWS = 10
# Slot N_LAYERS of the slab holds the Encoder's trailing LayerNorm params.
ROW_FIN_G, ROW_FIN_B = 0, 1


def _layernorm(v, g, b):
    mu = jnp.mean(v, axis=-1, keepdims=True)
    var = jnp.mean((v - mu) ** 2, axis=-1, keepdims=True)  # biased, like PyTorch LN
    return g * (v - mu) * jax.lax.rsqrt(var + EPS) + b


def encoder_kernel(x_ref, bias_ref, wqkvo_ref, w1_ref, w2_ref, vec_ref, o_ref):
    """Fully fused Encoder forward: all layers + final LayerNorm, whole batch."""
    x2 = x_ref[...]                       # (B*S, D) activations
    bias = bias_ref[...]                  # (1, B, S, S) additive mask bias (host-built)

    for l in range(N_LAYERS):             # static unroll (N_LAYERS=2, grid-less)
        vec = vec_ref[l]                  # (NROWS, DFF) packed per-layer vectors
        bq = vec[ROW_BQ:ROW_BQ + 1, :D]   # already scaled by 1/sqrt(DH)
        bk = vec[ROW_BK:ROW_BK + 1, :D]
        bv = vec[ROW_BV:ROW_BV + 1, :D]
        bo = vec[ROW_BO:ROW_BO + 1, :D]
        b1 = vec[ROW_B1:ROW_B1 + 1, :DFF]
        b2 = vec[ROW_B2:ROW_B2 + 1, :D]
        ln1_g = vec[ROW_LN1_G:ROW_LN1_G + 1, :D]
        ln1_b = vec[ROW_LN1_B:ROW_LN1_B + 1, :D]
        ln2_g = vec[ROW_LN2_G:ROW_LN2_G + 1, :D]
        ln2_b = vec[ROW_LN2_B:ROW_LN2_B + 1, :D]

        # ---- self-attention sublayer: x + MHA(LN(x), mask) ----
        xn = _layernorm(x2, ln1_g, ln1_b)                       # (B*S, D)
        # Three full-block projections (no lane-slicing of a fused QKV output).
        # 1/sqrt(DH) is folded into wqkvo[l, 0] / bq at parameter-prep time.
        q = jnp.dot(xn, wqkvo_ref[l, 0], preferred_element_type=jnp.float32) + bq
        k = jnp.dot(xn, wqkvo_ref[l, 1], preferred_element_type=jnp.float32) + bk
        v = jnp.dot(xn, wqkvo_ref[l, 2], preferred_element_type=jnp.float32) + bv
        q3 = q.reshape(B, S, D)
        k3 = k.reshape(B, S, D)
        v3 = v.reshape(B, S, D)

        # Head-batched operands (head-major: index n = h*B + b), so both
        # attention matmuls are single batched dot_generals over N = H*B.
        qh = jnp.concatenate([q3[:, :, h * DH:(h + 1) * DH] for h in range(H)], axis=0)
        kh = jnp.concatenate([k3[:, :, h * DH:(h + 1) * DH] for h in range(H)], axis=0)
        vh = jnp.concatenate([v3[:, :, h * DH:(h + 1) * DH] for h in range(H)], axis=0)

        s = jnp.einsum('nqd,nkd->nqk', qh, kh,
                       preferred_element_type=jnp.float32)      # (H*B, S, S)
        # Broadcast-add the precomputed additive mask bias (leading reshapes
        # keep the last two dims and are free).
        s = (s.reshape(H, B, S, S) + bias).reshape(H * B, S, S)
        s = s - jnp.max(s, axis=-1, keepdims=True)              # stable softmax
        p = jnp.exp(s)
        p = p / jnp.sum(p, axis=-1, keepdims=True)              # exact normalization

        ctx = jnp.einsum('nqk,nkd->nqd', p, vh,
                         preferred_element_type=jnp.float32)    # (H*B, S, DH)
        attn = jnp.concatenate([ctx[h * B:(h + 1) * B] for h in range(H)], axis=-1)
        attn = attn.reshape(B * S, D)
        attn = jnp.dot(attn, wqkvo_ref[l, 3],
                       preferred_element_type=jnp.float32) + bo
        x2 = x2 + attn                                          # residual (dropout = id)

        # ---- feed-forward sublayer: x + FFN(LN(x)) ----
        xn2 = _layernorm(x2, ln2_g, ln2_b)
        h1 = jnp.maximum(
            jnp.dot(xn2, w1_ref[l], preferred_element_type=jnp.float32) + b1, 0.0)
        ff = jnp.dot(h1, w2_ref[l], preferred_element_type=jnp.float32) + b2
        x2 = x2 + ff

    # ---- Encoder's trailing nn.LayerNorm([layer.size]) ----
    fin = vec_ref[N_LAYERS]
    o_ref[...] = _layernorm(x2, fin[ROW_FIN_G:ROW_FIN_G + 1, :D],
                            fin[ROW_FIN_B:ROW_FIN_B + 1, :D])


def encoder_forward(x, mask, wqkvo, w1, w2, vec):
    # Additive attention bias built once on the host side of the kernel
    # (removes the in-kernel compare+select; `> 0.5` is robust per review).
    bias = jnp.where(mask > 0.5, jnp.float32(0.0), jnp.float32(-1e9))[None]  # (1,B,S,S)
    vmem = pl.BlockSpec(memory_space=pltpu.MemorySpace.VMEM)
    out2d = pl.pallas_call(
        encoder_kernel,
        out_shape=jax.ShapeDtypeStruct((B * S, D), jnp.float32),
        in_specs=[vmem] * 6,
        out_specs=vmem,
        compiler_params=pltpu.CompilerParams(vmem_limit_bytes=32 * 1024 * 1024),
    )(x.reshape(B * S, D), bias, wqkvo, w1, w2, vec)
    return out2d.reshape(B, S, D)


def make_params(key):
    kw = jax.random.split(key, 10)
    scale = 1.0 / math.sqrt(DH)

    wq = 0.02 * jax.random.normal(kw[0], (N_LAYERS, D, D), jnp.float32)
    wk = 0.02 * jax.random.normal(kw[1], (N_LAYERS, D, D), jnp.float32)
    wv = 0.02 * jax.random.normal(kw[2], (N_LAYERS, D, D), jnp.float32)
    wo = 0.02 * jax.random.normal(kw[3], (N_LAYERS, D, D), jnp.float32)
    w1 = 0.02 * jax.random.normal(kw[4], (N_LAYERS, D, DFF), jnp.float32)
    w2 = 0.02 * jax.random.normal(kw[5], (N_LAYERS, DFF, D), jnp.float32)

    bq = 0.01 * jax.random.normal(kw[6], (N_LAYERS, D), jnp.float32)
    bk = 0.01 * jax.random.normal(kw[7], (N_LAYERS, D), jnp.float32)
    bv = 0.01 * jax.random.normal(kw[8], (N_LAYERS, D), jnp.float32)
    bo = 0.01 * jax.random.normal(kw[9], (N_LAYERS, D), jnp.float32)
    b1 = jnp.zeros((N_LAYERS, DFF), jnp.float32)
    b2 = jnp.zeros((N_LAYERS, D), jnp.float32)

    # Packed weight slab: [Wq (pre-scaled by 1/sqrt(DH)), Wk, Wv, Wo].
    wqkvo = jnp.stack([wq * scale, wk, wv, wo], axis=1)   # (N_LAYERS, 4, D, D)

    # Packed per-layer vector slab + final LayerNorm in slot N_LAYERS.
    vec = jnp.zeros((N_LAYERS + 1, NROWS, DFF), jnp.float32)
    vec = vec.at[:N_LAYERS, ROW_BQ, :D].set(bq * scale)   # scale folded here too
    vec = vec.at[:N_LAYERS, ROW_BK, :D].set(bk)
    vec = vec.at[:N_LAYERS, ROW_BV, :D].set(bv)
    vec = vec.at[:N_LAYERS, ROW_BO, :D].set(bo)
    vec = vec.at[:N_LAYERS, ROW_B1, :DFF].set(b1)
    vec = vec.at[:N_LAYERS, ROW_B2, :D].set(b2)
    vec = vec.at[:N_LAYERS, ROW_LN1_G, :D].set(1.0)       # LayerNorm gammas = 1
    vec = vec.at[:N_LAYERS, ROW_LN2_G, :D].set(1.0)       # (betas stay 0)
    vec = vec.at[N_LAYERS, ROW_FIN_G, :D].set(1.0)        # final LayerNorm gamma

    return wqkvo, w1, w2, vec


if __name__ == "__main__":
    key = jax.random.PRNGKey(0)
    kx, kp = jax.random.split(key)
    x = jax.random.normal(kx, (B, S, D), jnp.float32)

    # Padding mask: batch 0 fully visible, batch 1 has the last 2 key positions masked.
    mask = jnp.ones((B, S, S), jnp.float32)
    mask = mask.at[1, :, S - 2:].set(0.0)

    params = make_params(kp)
    out = jax.jit(encoder_forward)(x, mask, *params)
    jax.block_until_ready(out)
    assert out.shape == (B, S, D)
    assert bool(jnp.all(jnp.isfinite(out)))
    print("KERNEL_OK")
</pallas_src>

<mosaic_0001>
module attributes {stable_mosaic.version = 11 : i64} {
  func.func @encoder_kernel(%arg0: memref<16x32xf32, #tpu.memory_space<vmem>>, %arg1: memref<1x2x8x8xf32, #tpu.memory_space<vmem>>, %arg2: memref<2x4x32x32xf32, #tpu.memory_space<vmem>>, %arg3: memref<2x32x64xf32, #tpu.memory_space<vmem>>, %arg4: memref<2x64x32xf32, #tpu.memory_space<vmem>>, %arg5: memref<3x10x64xf32, #tpu.memory_space<vmem>>, %arg6: memref<16x32xf32, #tpu.memory_space<vmem>>) attributes {dimension_semantics = [], scalar_prefetch = 0 : i64, scratch_operands = 0 : i64, tpu.core_type = #tpu.core_type<tc>} {
    %c0 = arith.constant 0 : index
    %c0_0 = arith.constant 0 : index
    %0 = vector.load %arg0[%c0, %c0_0] : memref<16x32xf32, #tpu.memory_space<vmem>>, vector<16x32xf32>
    %c0_1 = arith.constant 0 : index
    %c0_2 = arith.constant 0 : index
    %c0_3 = arith.constant 0 : index
    %c0_4 = arith.constant 0 : index
    %1 = vector.load %arg1[%c0_1, %c0_2, %c0_3, %c0_4] : memref<1x2x8x8xf32, #tpu.memory_space<vmem>>, vector<1x2x8x8xf32>
    %c0_5 = arith.constant 0 : index
    %c0_6 = arith.constant 0 : index
    %c0_7 = arith.constant 0 : index
    %2 = vector.load %arg5[%c0_5, %c0_6, %c0_7] : memref<3x10x64xf32, #tpu.memory_space<vmem>>, vector<1x10x64xf32>
    %3 = vector.shape_cast %2 : vector<1x10x64xf32> to vector<10x64xf32>
    %4 = vector.extract_strided_slice %3 {offsets = [0, 0], sizes = [1, 32], strides = [1, 1]} : vector<10x64xf32> to vector<1x32xf32>
    %5 = vector.extract_strided_slice %3 {offsets = [1, 0], sizes = [1, 32], strides = [1, 1]} : vector<10x64xf32> to vector<1x32xf32>
    %6 = vector.extract_strided_slice %3 {offsets = [2, 0], sizes = [1, 32], strides = [1, 1]} : vector<10x64xf32> to vector<1x32xf32>
    %7 = vector.extract_strided_slice %3 {offsets = [3, 0], sizes = [1, 32], strides = [1, 1]} : vector<10x64xf32> to vector<1x32xf32>
    %8 = vector.extract_strided_slice %3 {offsets = [4, 0], sizes = [1, 64], strides = [1, 1]} : vector<10x64xf32> to vector<1x64xf32>
    %9 = vector.extract_strided_slice %3 {offsets = [5, 0], sizes = [1, 32], strides = [1, 1]} : vector<10x64xf32> to vector<1x32xf32>
    %10 = vector.extract_strided_slice %3 {offsets = [6, 0], sizes = [1, 32], strides = [1, 1]} : vector<10x64xf32> to vector<1x32xf32>
    %11 = vector.extract_strided_slice %3 {offsets = [7, 0], sizes = [1, 32], strides = [1, 1]} : vector<10x64xf32> to vector<1x32xf32>
    %12 = vector.extract_strided_slice %3 {offsets = [8, 0], sizes = [1, 32], strides = [1, 1]} : vector<10x64xf32> to vector<1x32xf32>
    %13 = vector.extract_strided_slice %3 {offsets = [9, 0], sizes = [1, 32], strides = [1, 1]} : vector<10x64xf32> to vector<1x32xf32>
    %cst = arith.constant dense<0.000000e+00> : vector<16xf32>
    %14 = vector.multi_reduction <add>, %0, %cst [1] : vector<16x32xf32> to vector<16xf32>
    %15 = vector.shape_cast %14 : vector<16xf32> to vector<16x1xf32>
    %cst_8 = arith.constant 3.200000e+01 : f32
    %16 = vector.broadcast %cst_8 : f32 to vector<16x1xf32>
    %17 = arith.divf %15, %16 : vector<16x1xf32>
    %18 = vector.broadcast %17 : vector<16x1xf32> to vector<16x32xf32>
    %19 = arith.subf %0, %18 : vector<16x32xf32>
    %20 = arith.mulf %19, %19 : vector<16x32xf32>
    %cst_9 = arith.constant dense<0.000000e+00> : vector<16xf32>
    %21 = vector.multi_reduction <add>, %20, %cst_9 [1] : vector<16x32xf32> to vector<16xf32>
    %22 = vector.shape_cast %21 : vector<16xf32> to vector<16x1xf32>
    %cst_10 = arith.constant 3.200000e+01 : f32
    %23 = vector.broadcast %cst_10 : f32 to vector<16x1xf32>
    %24 = arith.divf %22, %23 : vector<16x1xf32>
    %25 = vector.broadcast %17 : vector<16x1xf32> to vector<16x32xf32>
    %26 = arith.subf %0, %25 : vector<16x32xf32>
    %27 = vector.broadcast %10 : vector<1x32xf32> to vector<16x32xf32>
    %28 = arith.mulf %27, %26 : vector<16x32xf32>
    %cst_11 = arith.constant 9.99999974E-6 : f32
    %29 = vector.broadcast %cst_11 : f32 to vector<16x1xf32>
    %30 = arith.addf %24, %29 : vector<16x1xf32>
    %31 = math.rsqrt %30 : vector<16x1xf32>
    %32 = vector.broadcast %31 : vector<16x1xf32> to vector<16x32xf32>
    %33 = arith.mulf %28, %32 : vector<16x32xf32>
    %34 = vector.broadcast %11 : vector<1x32xf32> to vector<16x32xf32>
    %35 = arith.addf %33, %34 : vector<16x32xf32>
    %c0_12 = arith.constant 0 : index
    %c0_13 = arith.constant 0 : index
    %c0_14 = arith.constant 0 : index
    %c0_15 = arith.constant 0 : index
    %36 = vector.load %arg2[%c0_12, %c0_13, %c0_14, %c0_15] : memref<2x4x32x32xf32, #tpu.memory_space<vmem>>, vector<1x1x32x32xf32>
    %37 = vector.shape_cast %36 : vector<1x1x32x32xf32> to vector<32x32xf32>
    %cst_16 = arith.constant dense<0.000000e+00> : vector<16x32xf32>
    %38 = tpu.matmul %35, %37, %cst_16 {dimension_numbers = #tpu.dot_dimension_numbers<[1], [0], [0], [1], [0, 0, 1, 1], [], []>} : vector<16x32xf32>, vector<32x32xf32>, vector<16x32xf32> -> vector<16x32xf32>
    %39 = vector.broadcast %4 : vector<1x32xf32> to vector<16x32xf32>
    %40 = arith.addf %38, %39 : vector<16x32xf32>
    %c0_17 = arith.constant 0 : index
    %c1 = arith.constant 1 : index
    %c0_18 = arith.constant 0 : index
    %c0_19 = arith.constant 0 : index
    %41 = vector.load %arg2[%c0_17, %c1, %c0_18, %c0_19] : memref<2x4x32x32xf32, #tpu.memory_space<vmem>>, vector<1x1x32x32xf32>
    %42 = vector.shape_cast %41 : vector<1x1x32x32xf32> to vector<32x32xf32>
    %cst_20 = arith.constant dense<0.000000e+00> : vector<16x32xf32>
    %43 = tpu.matmul %35, %42, %cst_20 {dimension_numbers = #tpu.dot_dimension_numbers<[1], [0], [0], [1], [0, 0, 1, 1], [], []>} : vector<16x32xf32>, vector<32x32xf32>, vector<16x32xf32> -> vector<16x32xf32>
    %44 = vector.broadcast %5 : vector<1x32xf32> to vector<16x32xf32>
    %45 = arith.addf %43, %44 : vector<16x32xf32>
    %c0_21 = arith.constant 0 : index
    %c2 = arith.constant 2 : index
    %c0_22 = arith.constant 0 : index
    %c0_23 = arith.constant 0 : index
    %46 = vector.load %arg2[%c0_21, %c2, %c0_22, %c0_23] : memref<2x4x32x32xf32, #tpu.memory_space<vmem>>, vector<1x1x32x32xf32>
    %47 = vector.shape_cast %46 : vector<1x1x32x32xf32> to vector<32x32xf32>
    %cst_24 = arith.constant dense<0.000000e+00> : vector<16x32xf32>
    %48 = tpu.matmul %35, %47, %cst_24 {dimension_numbers = #tpu.dot_dimension_numbers<[1], [0], [0], [1], [0, 0, 1, 1], [], []>} : vector<16x32xf32>, vector<32x32xf32>, vector<16x32xf32> -> vector<16x32xf32>
    %49 = vector.broadcast %6 : vector<1x32xf32> to vector<16x32xf32>
    %50 = arith.addf %48, %49 : vector<16x32xf32>
    %51 = vector.shape_cast %40 : vector<16x32xf32> to vector<2x8x32xf32>
    %52 = vector.shape_cast %45 : vector<16x32xf32> to vector<2x8x32xf32>
    %53 = vector.shape_cast %50 : vector<16x32xf32> to vector<2x8x32xf32>
    %54 = vector.extract_strided_slice %51 {offsets = [0, 0, 0], sizes = [2, 8, 8], strides = [1, 1, 1]} : vector<2x8x32xf32> to vector<2x8x8xf32>
    %55 = vector.extract_strided_slice %51 {offsets = [0, 0, 8], sizes = [2, 8, 8], strides = [1, 1, 1]} : vector<2x8x32xf32> to vector<2x8x8xf32>
    %56 = vector.extract_strided_slice %51 {offsets = [0, 0, 16], sizes = [2, 8, 8], strides = [1, 1, 1]} : vector<2x8x32xf32> to vector<2x8x8xf32>
    %57 = vector.extract_strided_slice %51 {offsets = [0, 0, 24], sizes = [2, 8, 8], strides = [1, 1, 1]} : vector<2x8x32xf32> to vector<2x8x8xf32>
    %58 = tpu.concatenate %54, %55, %56, %57 in 0 : vector<2x8x8xf32>, vector<2x8x8xf32>, vector<2x8x8xf32>, vector<2x8x8xf32> -> vector<8x8x8xf32>
    %59 = vector.extract_strided_slice %52 {offsets = [0, 0, 0], sizes = [2, 8, 8], strides = [1, 1, 1]} : vector<2x8x32xf32> to vector<2x8x8xf32>
    %60 = vector.extract_strided_slice %52 {offsets = [0, 0, 8], sizes = [2, 8, 8], strides = [1, 1, 1]} : vector<2x8x32xf32> to vector<2x8x8xf32>
    %61 = vector.extract_strided_slice %52 {offsets = [0, 0, 16], sizes = [2, 8, 8], strides = [1, 1, 1]} : vector<2x8x32xf32> to vector<2x8x8xf32>
    %62 = vector.extract_strided_slice %52 {offsets = [0, 0, 24], sizes = [2, 8, 8], strides = [1, 1, 1]} : vector<2x8x32xf32> to vector<2x8x8xf32>
    %63 = tpu.concatenate %59, %60, %61, %62 in 0 : vector<2x8x8xf32>, vector<2x8x8xf32>, vector<2x8x8xf32>, vector<2x8x8xf32> -> vector<8x8x8xf32>
    %64 = vector.extract_strided_slice %53 {offsets = [0, 0, 0], sizes = [2, 8, 8], strides = [1, 1, 1]} : vector<2x8x32xf32> to vector<2x8x8xf32>
    %65 = vector.extract_strided_slice %53 {offsets = [0, 0, 8], sizes = [2, 8, 8], strides = [1, 1, 1]} : vector<2x8x32xf32> to vector<2x8x8xf32>
    %66 = vector.extract_strided_slice %53 {offsets = [0, 0, 16], sizes = [2, 8, 8], strides = [1, 1, 1]} : vector<2x8x32xf32> to vector<2x8x8xf32>
    %67 = vector.extract_strided_slice %53 {offsets = [0, 0, 24], sizes = [2, 8, 8], strides = [1, 1, 1]} : vector<2x8x32xf32> to vector<2x8x8xf32>
    %68 = tpu.concatenate %64, %65, %66, %67 in 0 : vector<2x8x8xf32>, vector<2x8x8xf32>, vector<2x8x8xf32>, vector<2x8x8xf32> -> vector<8x8x8xf32>
    "tpu.trace_start"() <{level = 10 : i32, message = "nqd,nkd->nqk"}> : () -> ()
    %cst_25 = arith.constant dense<0.000000e+00> : vector<8x8x8xf32>
    %69 = tpu.matmul %58, %63, %cst_25 {dimension_numbers = #tpu.dot_dimension_numbers<[2], [2], [1], [1], [0, 0, 0, 1, 1, 1], [0], [0]>} : vector<8x8x8xf32>, vector<8x8x8xf32>, vector<8x8x8xf32> -> vector<8x8x8xf32>
    "tpu.trace_stop"() : () -> ()
    %70 = vector.shape_cast %69 : vector<8x8x8xf32> to vector<4x2x8x8xf32>
    %71 = vector.broadcast %1 : vector<1x2x8x8xf32> to vector<4x2x8x8xf32>
    %72 = arith.addf %70, %71 : vector<4x2x8x8xf32>
    %73 = vector.shape_cast %72 : vector<4x2x8x8xf32> to vector<8x8x8xf32>
    %cst_26 = arith.constant dense<0xFF800000> : vector<8x8xf32>
    %74 = vector.multi_reduction <maximumf>, %73, %cst_26 [2] : vector<8x8x8xf32> to vector<8x8xf32>
    %75 = vector.shape_cast %74 : vector<8x8xf32> to vector<8x8x1xf32>
    %76 = vector.broadcast %75 : vector<8x8x1xf32> to vector<8x8x8xf32>
    %77 = arith.subf %73, %76 : vector<8x8x8xf32>
    %78 = math.exp %77 : vector<8x8x8xf32>
    %cst_27 = arith.constant dense<0.000000e+00> : vector<8x8xf32>
    %79 = vector.multi_reduction <add>, %78, %cst_27 [2] : vector<8x8x8xf32> to vector<8x8xf32>
    %80 = vector.shape_cast %79 : vector<8x8xf32> to vector<8x8x1xf32>
    %81 = vector.broadcast %80 : vector<8x8x1xf32> to vector<8x8x8xf32>
    %82 = arith.divf %78, %81 : vector<8x8x8xf32>
    "tpu.trace_start"() <{level = 10 : i32, message = "nqk,nkd->nqd"}> : () -> ()
    %cst_28 = arith.constant dense<0.000000e+00> : vector<8x8x8xf32>
    %83 = tpu.matmul %82, %68, %cst_28 {dimension_numbers = #tpu.dot_dimension_numbers<[2], [1], [1], [2], [0, 0, 0, 1, 1, 2], [0], [0]>} : vector<8x8x8xf32>, vector<8x8x8xf32>, vector<8x8x8xf32> -> vector<8x8x8xf32>
    "tpu.trace_stop"() : () -> ()
    %84 = vector.extract_strided_slice %83 {offsets = [0, 0, 0], sizes = [2, 8, 8], strides = [1, 1, 1]} : vector<8x8x8xf32> to vector<2x8x8xf32>
    %85 = vector.extract_strided_slice %83 {offsets = [2, 0, 0], sizes = [2, 8, 8], strides = [1, 1, 1]} : vector<8x8x8xf32> to vector<2x8x8xf32>
    %86 = vector.extract_strided_slice %83 {offsets = [4, 0, 0], sizes = [2, 8, 8], strides = [1, 1, 1]} : vector<8x8x8xf32> to vector<2x8x8xf32>
    %87 = vector.extract_strided_slice %83 {offsets = [6, 0, 0], sizes = [2, 8, 8], strides = [1, 1, 1]} : vector<8x8x8xf32> to vector<2x8x8xf32>
    %88 = tpu.concatenate %84, %85, %86, %87 in 2 : vector<2x8x8xf32>, vector<2x8x8xf32>, vector<2x8x8xf32>, vector<2x8x8xf32> -> vector<2x8x32xf32>
    %89 = vector.shape_cast %88 : vector<2x8x32xf32> to vector<16x32xf32>
    %c0_29 = arith.constant 0 : index
    %c3 = arith.constant 3 : index
    %c0_30 = arith.constant 0 : index
    %c0_31 = arith.constant 0 : index
    %90 = vector.load %arg2[%c0_29, %c3, %c0_30, %c0_31] : memref<2x4x32x32xf32, #tpu.memory_space<vmem>>, vector<1x1x32x32xf32>
    %91 = vector.shape_cast %90 : vector<1x1x32x32xf32> to vector<32x32xf32>
    %cst_32 = arith.constant dense<0.000000e+00> : vector<16x32xf32>
    %92 = tpu.matmul %89, %91, %cst_32 {dimension_numbers = #tpu.dot_dimension_numbers<[1], [0], [0], [1], [0, 0, 1, 1], [], []>} : vector<16x32xf32>, vector<32x32xf32>, vector<16x32xf32> -> vector<16x32xf32>
    %93 = vector.broadcast %7 : vector<1x32xf32> to vector<16x32xf32>
    %94 = arith.addf %92, %93 : vector<16x32xf32>
    %95 = arith.addf %0, %94 : vector<16x32xf32>
    %cst_33 = arith.constant dense<0.000000e+00> : vector<16xf32>
    %96 = vector.multi_reduction <add>, %95, %cst_33 [1] : vector<16x32xf32> to vector<16xf32>
    %97 = vector.shape_cast %96 : vector<16xf32> to vector<16x1xf32>
    %cst_34 = arith.constant 3.200000e+01 : f32
    %98 = vector.broadcast %cst_34 : f32 to vector<16x1xf32>
    %99 = arith.divf %97, %98 : vector<16x1xf32>
    %100 = vector.broadcast %99 : vector<16x1xf32> to vector<16x32xf32>
    %101 = arith.subf %95, %100 : vector<16x32xf32>
    %102 = arith.mulf %101, %101 : vector<16x32xf32>
    %cst_35 = arith.constant dense<0.000000e+00> : vector<16xf32>
    %103 = vector.multi_reduction <add>, %102, %cst_35 [1] : vector<16x32xf32> to vector<16xf32>
    %104 = vector.shape_cast %103 : vector<16xf32> to vector<16x1xf32>
    %cst_36 = arith.constant 3.200000e+01 : f32
    %105 = vector.broadcast %cst_36 : f32 to vector<16x1xf32>
    %106 = arith.divf %104, %105 : vector<16x1xf32>
    %107 = vector.broadcast %99 : vector<16x1xf32> to vector<16x32xf32>
    %108 = arith.subf %95, %107 : vector<16x32xf32>
    %109 = vector.broadcast %12 : vector<1x32xf32> to vector<16x32xf32>
    %110 = arith.mulf %109, %108 : vector<16x32xf32>
    %cst_37 = arith.constant 9.99999974E-6 : f32
    %111 = vector.broadcast %cst_37 : f32 to vector<16x1xf32>
    %112 = arith.addf %106, %111 : vector<16x1xf32>
    %113 = math.rsqrt %112 : vector<16x1xf32>
    %114 = vector.broadcast %113 : vector<16x1xf32> to vector<16x32xf32>
    %115 = arith.mulf %110, %114 : vector<16x32xf32>
    %116 = vector.broadcast %13 : vector<1x32xf32> to vector<16x32xf32>
    %117 = arith.addf %115, %116 : vector<16x32xf32>
    %c0_38 = arith.constant 0 : index
    %c0_39 = arith.constant 0 : index
    %c0_40 = arith.constant 0 : index
    %118 = vector.load %arg3[%c0_38, %c0_39, %c0_40] : memref<2x32x64xf32, #tpu.memory_space<vmem>>, vector<1x32x64xf32>
    %119 = vector.shape_cast %118 : vector<1x32x64xf32> to vector<32x64xf32>
    %cst_41 = arith.constant dense<0.000000e+00> : vector<16x64xf32>
    %120 = tpu.matmul %117, %119, %cst_41 {dimension_numbers = #tpu.dot_dimension_numbers<[1], [0], [0], [1], [0, 0, 1, 1], [], []>} : vector<16x32xf32>, vector<32x64xf32>, vector<16x64xf32> -> vector<16x64xf32>
    %121 = vector.broadcast %8 : vector<1x64xf32> to vector<16x64xf32>
    %122 = arith.addf %120, %121 : vector<16x64xf32>
    %cst_42 = arith.constant 0.000000e+00 : f32
    %123 = vector.broadcast %cst_42 : f32 to vector<16x64xf32>
    %124 = arith.maximumf %122, %123 : vector<16x64xf32>
    %c0_43 = arith.constant 0 : index
    %c0_44 = arith.constant 0 : index
    %c0_45 = arith.constant 0 : index
    %125 = vector.load %arg4[%c0_43, %c0_44, %c0_45] : memref<2x64x32xf32, #tpu.memory_space<vmem>>, vector<1x64x32xf32>
    %126 = vector.shape_cast %125 : vector<1x64x32xf32> to vector<64x32xf32>
    %cst_46 = arith.constant dense<0.000000e+00> : vector<16x32xf32>
    %127 = tpu.matmul %124, %126, %cst_46 {dimension_numbers = #tpu.dot_dimension_numbers<[1], [0], [0], [1], [0, 0, 1, 1], [], []>} : vector<16x64xf32>, vector<64x32xf32>, vector<16x32xf32> -> vector<16x32xf32>
    %128 = vector.broadcast %9 : vector<1x32xf32> to vector<16x32xf32>
    %129 = arith.addf %127, %128 : vector<16x32xf32>
    %130 = arith.addf %95, %129 : vector<16x32xf32>
    %c1_47 = arith.constant 1 : index
    %c0_48 = arith.constant 0 : index
    %c0_49 = arith.constant 0 : index
    %131 = vector.load %arg5[%c1_47, %c0_48, %c0_49] : memref<3x10x64xf32, #tpu.memory_space<vmem>>, vector<1x10x64xf32>
    %132 = vector.shape_cast %131 : vector<1x10x64xf32> to vector<10x64xf32>
    %133 = vector.extract_strided_slice %132 {offsets = [0, 0], sizes = [1, 32], strides = [1, 1]} : vector<10x64xf32> to vector<1x32xf32>
    %134 = vector.extract_strided_slice %132 {offsets = [1, 0], sizes = [1, 32], strides = [1, 1]} : vector<10x64xf32> to vector<1x32xf32>
    %135 = vector.extract_strided_slice %132 {offsets = [2, 0], sizes = [1, 32], strides = [1, 1]} : vector<10x64xf32> to vector<1x32xf32>
    %136 = vector.extract_strided_slice %132 {offsets = [3, 0], sizes = [1, 32], strides = [1, 1]} : vector<10x64xf32> to vector<1x32xf32>
    %137 = vector.extract_strided_slice %132 {offsets = [4, 0], sizes = [1, 64], strides = [1, 1]} : vector<10x64xf32> to vector<1x64xf32>
    %138 = vector.extract_strided_slice %132 {offsets = [5, 0], sizes = [1, 32], strides = [1, 1]} : vector<10x64xf32> to vector<1x32xf32>
    %139 = vector.extract_strided_slice %132 {offsets = [6, 0], sizes = [1, 32], strides = [1, 1]} : vector<10x64xf32> to vector<1x32xf32>
    %140 = vector.extract_strided_slice %132 {offsets = [7, 0], sizes = [1, 32], strides = [1, 1]} : vector<10x64xf32> to vector<1x32xf32>
    %141 = vector.extract_strided_slice %132 {offsets = [8, 0], sizes = [1, 32], strides = [1, 1]} : vector<10x64xf32> to vector<1x32xf32>
    %142 = vector.extract_strided_slice %132 {offsets = [9, 0], sizes = [1, 32], strides = [1, 1]} : vector<10x64xf32> to vector<1x32xf32>
    %cst_50 = arith.constant dense<0.000000e+00> : vector<16xf32>
    %143 = vector.multi_reduction <add>, %130, %cst_50 [1] : vector<16x32xf32> to vector<16xf32>
    %144 = vector.shape_cast %143 : vector<16xf32> to vector<16x1xf32>
    %cst_51 = arith.constant 3.200000e+01 : f32
    %145 = vector.broadcast %cst_51 : f32 to vector<16x1xf32>
    %146 = arith.divf %144, %145 : vector<16x1xf32>
    %147 = vector.broadcast %146 : vector<16x1xf32> to vector<16x32xf32>
    %148 = arith.subf %130, %147 : vector<16x32xf32>
    %149 = arith.mulf %148, %148 : vector<16x32xf32>
    %cst_52 = arith.constant dense<0.000000e+00> : vector<16xf32>
    %150 = vector.multi_reduction <add>, %149, %cst_52 [1] : vector<16x32xf32> to vector<16xf32>
    %151 = vector.shape_cast %150 : vector<16xf32> to vector<16x1xf32>
    %cst_53 = arith.constant 3.200000e+01 : f32
    %152 = vector.broadcast %cst_53 : f32 to vector<16x1xf32>
    %153 = arith.divf %151, %152 : vector<16x1xf32>
    %154 = vector.broadcast %146 : vector<16x1xf32> to vector<16x32xf32>
    %155 = arith.subf %130, %154 : vector<16x32xf32>
    %156 = vector.broadcast %139 : vector<1x32xf32> to vector<16x32xf32>
    %157 = arith.mulf %156, %155 : vector<16x32xf32>
    %cst_54 = arith.constant 9.99999974E-6 : f32
    %158 = vector.broadcast %cst_54 : f32 to vector<16x1xf32>
    %159 = arith.addf %153, %158 : vector<16x1xf32>
    %160 = math.rsqrt %159 : vector<16x1xf32>
    %161 = vector.broadcast %160 : vector<16x1xf32> to vector<16x32xf32>
    %162 = arith.mulf %157, %161 : vector<16x32xf32>
    %163 = vector.broadcast %140 : vector<1x32xf32> to vector<16x32xf32>
    %164 = arith.addf %162, %163 : vector<16x32xf32>
    %c1_55 = arith.constant 1 : index
    %c0_56 = arith.constant 0 : index
    %c0_57 = arith.constant 0 : index
    %c0_58 = arith.constant 0 : index
    %165 = vector.load %arg2[%c1_55, %c0_56, %c0_57, %c0_58] : memref<2x4x32x32xf32, #tpu.memory_space<vmem>>, vector<1x1x32x32xf32>
    %166 = vector.shape_cast %165 : vector<1x1x32x32xf32> to vector<32x32xf32>
    %cst_59 = arith.constant dense<0.000000e+00> : vector<16x32xf32>
    %167 = tpu.matmul %164, %166, %cst_59 {dimension_numbers = #tpu.dot_dimension_numbers<[1], [0], [0], [1], [0, 0, 1, 1], [], []>} : vector<16x32xf32>, vector<32x32xf32>, vector<16x32xf32> -> vector<16x32xf32>
    %168 = vector.broadcast %133 : vector<1x32xf32> to vector<16x32xf32>
    %169 = arith.addf %167, %168 : vector<16x32xf32>
    %c1_60 = arith.constant 1 : index
    %c1_61 = arith.constant 1 : index
    %c0_62 = arith.constant 0 : index
    %c0_63 = arith.constant 0 : index
    %170 = vector.load %arg2[%c1_60, %c1_61, %c0_62, %c0_63] : memref<2x4x32x32xf32, #tpu.memory_space<vmem>>, vector<1x1x32x32xf32>
    %171 = vector.shape_cast %170 : vector<1x1x32x32xf32> to vector<32x32xf32>
    %cst_64 = arith.constant dense<0.000000e+00> : vector<16x32xf32>
    %172 = tpu.matmul %164, %171, %cst_64 {dimension_numbers = #tpu.dot_dimension_numbers<[1], [0], [0], [1], [0, 0, 1, 1], [], []>} : vector<16x32xf32>, vector<32x32xf32>, vector<16x32xf32> -> vector<16x32xf32>
    %173 = vector.broadcast %134 : vector<1x32xf32> to vector<16x32xf32>
    %174 = arith.addf %172, %173 : vector<16x32xf32>
    %c1_65 = arith.constant 1 : index
    %c2_66 = arith.constant 2 : index
    %c0_67 = arith.constant 0 : index
    %c0_68 = arith.constant 0 : index
    %175 = vector.load %arg2[%c1_65, %c2_66, %c0_67, %c0_68] : memref<2x4x32x32xf32, #tpu.memory_space<vmem>>, vector<1x1x32x32xf32>
    %176 = vector.shape_cast %175 : vector<1x1x32x32xf32> to vector<32x32xf32>
    %cst_69 = arith.constant dense<0.000000e+00> : vector<16x32xf32>
    %177 = tpu.matmul %164, %176, %cst_69 {dimension_numbers = #tpu.dot_dimension_numbers<[1], [0], [0], [1], [0, 0, 1, 1], [], []>} : vector<16x32xf32>, vector<32x32xf32>, vector<16x32xf32> -> vector<16x32xf32>
    %178 = vector.broadcast %135 : vector<1x32xf32> to vector<16x32xf32>
    %179 = arith.addf %177, %178 : vector<16x32xf32>
    %180 = vector.shape_cast %169 : vector<16x32xf32> to vector<2x8x32xf32>
    %181 = vector.shape_cast %174 : vector<16x32xf32> to vector<2x8x32xf32>
    %182 = vector.shape_cast %179 : vector<16x32xf32> to vector<2x8x32xf32>
    %183 = vector.extract_strided_slice %180 {offsets = [0, 0, 0], sizes = [2, 8, 8], strides = [1, 1, 1]} : vector<2x8x32xf32> to vector<2x8x8xf32>
    %184 = vector.extract_strided_slice %180 {offsets = [0, 0, 8], sizes = [2, 8, 8], strides = [1, 1, 1]} : vector<2x8x32xf32> to vector<2x8x8xf32>
    %185 = vector.extract_strided_slice %180 {offsets = [0, 0, 16], sizes = [2, 8, 8], strides = [1, 1, 1]} : vector<2x8x32xf32> to vector<2x8x8xf32>
    %186 = vector.extract_strided_slice %180 {offsets = [0, 0, 24], sizes = [2, 8, 8], strides = [1, 1, 1]} : vector<2x8x32xf32> to vector<2x8x8xf32>
    %187 = tpu.concatenate %183, %184, %185, %186 in 0 : vector<2x8x8xf32>, vector<2x8x8xf32>, vector<2x8x8xf32>, vector<2x8x8xf32> -> vector<8x8x8xf32>
    %188 = vector.extract_strided_slice %181 {offsets = [0, 0, 0], sizes = [2, 8, 8], strides = [1, 1, 1]} : vector<2x8x32xf32> to vector<2x8x8xf32>
    %189 = vector.extract_strided_slice %181 {offsets = [0, 0, 8], sizes = [2, 8, 8], strides = [1, 1, 1]} : vector<2x8x32xf32> to vector<2x8x8xf32>
    %190 = vector.extract_strided_slice %181 {offsets = [0, 0, 16], sizes = [2, 8, 8], strides = [1, 1, 1]} : vector<2x8x32xf32> to vector<2x8x8xf32>
    %191 = vector.extract_strided_slice %181 {offsets = [0, 0, 24], sizes = [2, 8, 8], strides = [1, 1, 1]} : vector<2x8x32xf32> to vector<2x8x8xf32>
    %192 = tpu.concatenate %188, %189, %190, %191 in 0 : vector<2x8x8xf32>, vector<2x8x8xf32>, vector<2x8x8xf32>, vector<2x8x8xf32> -> vector<8x8x8xf32>
    %193 = vector.extract_strided_slice %182 {offsets = [0, 0, 0], sizes = [2, 8, 8], strides = [1, 1, 1]} : vector<2x8x32xf32> to vector<2x8x8xf32>
    %194 = vector.extract_strided_slice %182 {offsets = [0, 0, 8], sizes = [2, 8, 8], strides = [1, 1, 1]} : vector<2x8x32xf32> to vector<2x8x8xf32>
    %195 = vector.extract_strided_slice %182 {offsets = [0, 0, 16], sizes = [2, 8, 8], strides = [1, 1, 1]} : vector<2x8x32xf32> to vector<2x8x8xf32>
    %196 = vector.extract_strided_slice %182 {offsets = [0, 0, 24], sizes = [2, 8, 8], strides = [1, 1, 1]} : vector<2x8x32xf32> to vector<2x8x8xf32>
    %197 = tpu.concatenate %193, %194, %195, %196 in 0 : vector<2x8x8xf32>, vector<2x8x8xf32>, vector<2x8x8xf32>, vector<2x8x8xf32> -> vector<8x8x8xf32>
    "tpu.trace_start"() <{level = 10 : i32, message = "nqd,nkd->nqk"}> : () -> ()
    %cst_70 = arith.constant dense<0.000000e+00> : vector<8x8x8xf32>
    %198 = tpu.matmul %187, %192, %cst_70 {dimension_numbers = #tpu.dot_dimension_numbers<[2], [2], [1], [1], [0, 0, 0, 1, 1, 1], [0], [0]>} : vector<8x8x8xf32>, vector<8x8x8xf32>, vector<8x8x8xf32> -> vector<8x8x8xf32>
    "tpu.trace_stop"() : () -> ()
    %199 = vector.shape_cast %198 : vector<8x8x8xf32> to vector<4x2x8x8xf32>
    %200 = vector.broadcast %1 : vector<1x2x8x8xf32> to vector<4x2x8x8xf32>
    %201 = arith.addf %199, %200 : vector<4x2x8x8xf32>
    %202 = vector.shape_cast %201 : vector<4x2x8x8xf32> to vector<8x8x8xf32>
    %cst_71 = arith.constant dense<0xFF800000> : vector<8x8xf32>
    %203 = vector.multi_reduction <maximumf>, %202, %cst_71 [2] : vector<8x8x8xf32> to vector<8x8xf32>
    %204 = vector.shape_cast %203 : vector<8x8xf32> to vector<8x8x1xf32>
    %205 = vector.broadcast %204 : vector<8x8x1xf32> to vector<8x8x8xf32>
    %206 = arith.subf %202, %205 : vector<8x8x8xf32>
    %207 = math.exp %206 : vector<8x8x8xf32>
    %cst_72 = arith.constant dense<0.000000e+00> : vector<8x8xf32>
    %208 = vector.multi_reduction <add>, %207, %cst_72 [2] : vector<8x8x8xf32> to vector<8x8xf32>
    %209 = vector.shape_cast %208 : vector<8x8xf32> to vector<8x8x1xf32>
    %210 = vector.broadcast %209 : vector<8x8x1xf32> to vector<8x8x8xf32>
    %211 = arith.divf %207, %210 : vector<8x8x8xf32>
    "tpu.trace_start"() <{level = 10 : i32, message = "nqk,nkd->nqd"}> : () -> ()
    %cst_73 = arith.constant dense<0.000000e+00> : vector<8x8x8xf32>
    %212 = tpu.matmul %211, %197, %cst_73 {dimension_numbers = #tpu.dot_dimension_numbers<[2], [1], [1], [2], [0, 0, 0, 1, 1, 2], [0], [0]>} : vector<8x8x8xf32>, vector<8x8x8xf32>, vector<8x8x8xf32> -> vector<8x8x8xf32>
    "tpu.trace_stop"() : () -> ()
    %213 = vector.extract_strided_slice %212 {offsets = [0, 0, 0], sizes = [2, 8, 8], strides = [1, 1, 1]} : vector<8x8x8xf32> to vector<2x8x8xf32>
    %214 = vector.extract_strided_slice %212 {offsets = [2, 0, 0], sizes = [2, 8, 8], strides = [1, 1, 1]} : vector<8x8x8xf32> to vector<2x8x8xf32>
    %215 = vector.extract_strided_slice %212 {offsets = [4, 0, 0], sizes = [2, 8, 8], strides = [1, 1, 1]} : vector<8x8x8xf32> to vector<2x8x8xf32>
    %216 = vector.extract_strided_slice %212 {offsets = [6, 0, 0], sizes = [2, 8, 8], strides = [1, 1, 1]} : vector<8x8x8xf32> to vector<2x8x8xf32>
    %217 = tpu.concatenate %213, %214, %215, %216 in 2 : vector<2x8x8xf32>, vector<2x8x8xf32>, vector<2x8x8xf32>, vector<2x8x8xf32> -> vector<2x8x32xf32>
    %218 = vector.shape_cast %217 : vector<2x8x32xf32> to vector<16x32xf32>
    %c1_74 = arith.constant 1 : index
    %c3_75 = arith.constant 3 : index
    %c0_76 = arith.constant 0 : index
    %c0_77 = arith.constant 0 : index
    %219 = vector.load %arg2[%c1_74, %c3_75, %c0_76, %c0_77] : memref<2x4x32x32xf32, #tpu.memory_space<vmem>>, vector<1x1x32x32xf32>
    %220 = vector.shape_cast %219 : vector<1x1x32x32xf32> to vector<32x32xf32>
    %cst_78 = arith.constant dense<0.000000e+00> : vector<16x32xf32>
    %221 = tpu.matmul %218, %220, %cst_78 {dimension_numbers = #tpu.dot_dimension_numbers<[1], [0], [0], [1], [0, 0, 1, 1], [], []>} : vector<16x32xf32>, vector<32x32xf32>, vector<16x32xf32> -> vector<16x32xf32>
    %222 = vector.broadcast %136 : vector<1x32xf32> to vector<16x32xf32>
    %223 = arith.addf %221, %222 : vector<16x32xf32>
    %224 = arith.addf %130, %223 : vector<16x32xf32>
    %cst_79 = arith.constant dense<0.000000e+00> : vector<16xf32>
    %225 = vector.multi_reduction <add>, %224, %cst_79 [1] : vector<16x32xf32> to vector<16xf32>
    %226 = vector.shape_cast %225 : vector<16xf32> to vector<16x1xf32>
    %cst_80 = arith.constant 3.200000e+01 : f32
    %227 = vector.broadcast %cst_80 : f32 to vector<16x1xf32>
    %228 = arith.divf %226, %227 : vector<16x1xf32>
    %229 = vector.broadcast %228 : vector<16x1xf32> to vector<16x32xf32>
    %230 = arith.subf %224, %229 : vector<16x32xf32>
    %231 = arith.mulf %230, %230 : vector<16x32xf32>
    %cst_81 = arith.constant dense<0.000000e+00> : vector<16xf32>
    %232 = vector.multi_reduction <add>, %231, %cst_81 [1] : vector<16x32xf32> to vector<16xf32>
    %233 = vector.shape_cast %232 : vector<16xf32> to vector<16x1xf32>
    %cst_82 = arith.constant 3.200000e+01 : f32
    %234 = vector.broadcast %cst_82 : f32 to vector<16x1xf32>
    %235 = arith.divf %233, %234 : vector<16x1xf32>
    %236 = vector.broadcast %228 : vector<16x1xf32> to vector<16x32xf32>
    %237 = arith.subf %224, %236 : vector<16x32xf32>
    %238 = vector.broadcast %141 : vector<1x32xf32> to vector<16x32xf32>
    %239 = arith.mulf %238, %237 : vector<16x32xf32>
    %cst_83 = arith.constant 9.99999974E-6 : f32
    %240 = vector.broadcast %cst_83 : f32 to vector<16x1xf32>
    %241 = arith.addf %235, %240 : vector<16x1xf32>
    %242 = math.rsqrt %241 : vector<16x1xf32>
    %243 = vector.broadcast %242 : vector<16x1xf32> to vector<16x32xf32>
    %244 = arith.mulf %239, %243 : vector<16x32xf32>
    %245 = vector.broadcast %142 : vector<1x32xf32> to vector<16x32xf32>
    %246 = arith.addf %244, %245 : vector<16x32xf32>
    %c1_84 = arith.constant 1 : index
    %c0_85 = arith.constant 0 : index
    %c0_86 = arith.constant 0 : index
    %247 = vector.load %arg3[%c1_84, %c0_85, %c0_86] : memref<2x32x64xf32, #tpu.memory_space<vmem>>, vector<1x32x64xf32>
    %248 = vector.shape_cast %247 : vector<1x32x64xf32> to vector<32x64xf32>
    %cst_87 = arith.constant dense<0.000000e+00> : vector<16x64xf32>
    %249 = tpu.matmul %246, %248, %cst_87 {dimension_numbers = #tpu.dot_dimension_numbers<[1], [0], [0], [1], [0, 0, 1, 1], [], []>} : vector<16x32xf32>, vector<32x64xf32>, vector<16x64xf32> -> vector<16x64xf32>
    %250 = vector.broadcast %137 : vector<1x64xf32> to vector<16x64xf32>
    %251 = arith.addf %249, %250 : vector<16x64xf32>
    %cst_88 = arith.constant 0.000000e+00 : f32
    %252 = vector.broadcast %cst_88 : f32 to vector<16x64xf32>
    %253 = arith.maximumf %251, %252 : vector<16x64xf32>
    %c1_89 = arith.constant 1 : index
    %c0_90 = arith.constant 0 : index
    %c0_91 = arith.constant 0 : index
    %254 = vector.load %arg4[%c1_89, %c0_90, %c0_91] : memref<2x64x32xf32, #tpu.memory_space<vmem>>, vector<1x64x32xf32>
    %255 = vector.shape_cast %254 : vector<1x64x32xf32> to vector<64x32xf32>
    %cst_92 = arith.constant dense<0.000000e+00> : vector<16x32xf32>
    %256 = tpu.matmul %253, %255, %cst_92 {dimension_numbers = #tpu.dot_dimension_numbers<[1], [0], [0], [1], [0, 0, 1, 1], [], []>} : vector<16x64xf32>, vector<64x32xf32>, vector<16x32xf32> -> vector<16x32xf32>
    %257 = vector.broadcast %138 : vector<1x32xf32> to vector<16x32xf32>
    %258 = arith.addf %256, %257 : vector<16x32xf32>
    %259 = arith.addf %224, %258 : vector<16x32xf32>
    %c2_93 = arith.constant 2 : index
    %c0_94 = arith.constant 0 : index
    %c0_95 = arith.constant 0 : index
    %260 = vector.load %arg5[%c2_93, %c0_94, %c0_95] : memref<3x10x64xf32, #tpu.memory_space<vmem>>, vector<1x10x64xf32>
    %261 = vector.shape_cast %260 : vector<1x10x64xf32> to vector<10x64xf32>
    %262 = vector.extract_strided_slice %261 {offsets = [0, 0], sizes = [1, 32], strides = [1, 1]} : vector<10x64xf32> to vector<1x32xf32>
    %263 = vector.extract_strided_slice %261 {offsets = [1, 0], sizes = [1, 32], strides = [1, 1]} : vector<10x64xf32> to vector<1x32xf32>
    %cst_96 = arith.constant dense<0.000000e+00> : vector<16xf32>
    %264 = vector.multi_reduction <add>, %259, %cst_96 [1] : vector<16x32xf32> to vector<16xf32>
    %265 = vector.shape_cast %264 : vector<16xf32> to vector<16x1xf32>
    %cst_97 = arith.constant 3.200000e+01 : f32
    %266 = vector.broadcast %cst_97 : f32 to vector<16x1xf32>
    %267 = arith.divf %265, %266 : vector<16x1xf32>
    %268 = vector.broadcast %267 : vector<16x1xf32> to vector<16x32xf32>
    %269 = arith.subf %259, %268 : vector<16x32xf32>
    %270 = arith.mulf %269, %269 : vector<16x32xf32>
    %cst_98 = arith.constant dense<0.000000e+00> : vector<16xf32>
    %271 = vector.multi_reduction <add>, %270, %cst_98 [1] : vector<16x32xf32> to vector<16xf32>
    %272 = vector.shape_cast %271 : vector<16xf32> to vector<16x1xf32>
    %cst_99 = arith.constant 3.200000e+01 : f32
    %273 = vector.broadcast %cst_99 : f32 to vector<16x1xf32>
    %274 = arith.divf %272, %273 : vector<16x1xf32>
    %275 = vector.broadcast %267 : vector<16x1xf32> to vector<16x32xf32>
    %276 = arith.subf %259, %275 : vector<16x32xf32>
    %277 = vector.broadcast %262 : vector<1x32xf32> to vector<16x32xf32>
    %278 = arith.mulf %277, %276 : vector<16x32xf32>
    %cst_100 = arith.constant 9.99999974E-6 : f32
    %279 = vector.broadcast %cst_100 : f32 to vector<16x1xf32>
    %280 = arith.addf %274, %279 : vector<16x1xf32>
    %281 = math.rsqrt %280 : vector<16x1xf32>
    %282 = vector.broadcast %281 : vector<16x1xf32> to vector<16x32xf32>
    %283 = arith.mulf %278, %282 : vector<16x32xf32>
    %284 = vector.broadcast %263 : vector<1x32xf32> to vector<16x32xf32>
    %285 = arith.addf %283, %284 : vector<16x32xf32>
    %c0_101 = arith.constant 0 : index
    %c0_102 = arith.constant 0 : index
    %286 = vector.load %arg6[%c0_101, %c0_102] : memref<16x32xf32, #tpu.memory_space<vmem>>, vector<16x32xf32>
    tpu.vector_store %arg6[%c0_101, %c0_102], %285 {strides = array<i32>} : memref<16x32xf32, #tpu.memory_space<vmem>>, vector<16x32xf32>,
    return
  }
}

</mosaic_0001>

<llo_original>
// kernel: encoder_forward.1
$region0: #{encoder_forward.1}
  #allocation0 [shape = 'u32[]', space=smem, size = 0x4, offset = 0x4, fixed_abs, tag = 'smem constant byte address 0x4 - core index']
  #allocation1 [shape = 'u32[144,128]{1,0:T(1,128)}', space=vmem, size = 0x12000, scoped, tag = 'internal scratch']
  %s0 = inlined_call_operand.hbm [shape: f32[16,32], index: 0, kind: input, shape index: {}]
  %s1 = inlined_call_operand.vmem [shape: f32[1,2,8,8], index: 1, kind: input, shape index: {}]
  %s2 = inlined_call_operand.vmem [shape: f32[2,4,32,32], index: 2, kind: input, shape index: {}]
  %s3 = inlined_call_operand.hbm [shape: f32[2,32,64], index: 3, kind: input, shape index: {}]
  %s4 = inlined_call_operand.vmem [shape: f32[2,64,32], index: 4, kind: input, shape index: {}]
  %s5 = inlined_call_operand.vmem [shape: f32[3,10,64], index: 5, kind: input, shape index: {}]
  %s6 = inlined_call_operand.hbm [shape: f32[16,32], index: 6, kind: output, shape index: {}]
  %s7 = sld [smem:[#allocation0]]
  $region42: #{encoder_forward.1} parent=0
    _
  %s9 = ssub.s32 1, %s7
  %s10 = scalar_select 0, %s9, %s7
  $region1: #{encoder_forward.1} parent=0
    #allocation2 [shape = 'u8[8192]{0}', space=vmem, size = 0x2000, scoped, tag = 'input window, operand 0, single buffered']
    #allocation3 [shape = 's32[1]{0}', space=sflag, size = 0x4, scoped, tag = 'scoped memory for encoder_forward.1']
    #allocation4 [shape = 's32[1]{0}', space=sflag, size = 0x4, scoped, tag = 'scoped memory for encoder_forward.1']
    #allocation5 [shape = 'u8[32768]{0}', space=vmem, size = 0x8000, scoped, tag = 'input window, operand 3, single buffered']
    #allocation6 [shape = 's32[1]{0}', space=sflag, size = 0x4, scoped, tag = 'scoped memory for encoder_forward.1']
    #allocation7 [shape = 'u8[8192]{0}', space=vmem, size = 0x2000, scoped, tag = 'output window, operand 0, single buffered']
    %11 = vsyncpa [#allocation3], 0
    %12 = vsyncpa [#allocation6], 0
    %13 = vsyncpa [#allocation4], 0
    // Predicated region
    $region2: #{encoder_forward.1} parent=1 // pred_check
      _
    $region3: #{encoder_forward.1} parent=1 // pred_check_branch
      %15 = sbr.rel (0) target = $region5
    $region4: #{encoder_forward.1} parent=1 // pred_region
      %s17 = ssub.s32 256, 256
      %18 = vsyncadd [#allocation3], %s17
      %s19 = sshll.u32 [#allocation2], 4
      %s20 = int_to_ptr.vmem [resolvable:$true] %s19
      %25 = dma.hbm_to_vmem [thread:$0]  %s0, 256, %s20, [#allocation3], 128, 128, 8
    $region5: #{encoder_forward.1} parent=1 // pred_fallthru
      _
    // Predicated region
    $region6: #{encoder_forward.1} parent=1 // pred_check
      _
    $region7: #{encoder_forward.1} parent=1 // pred_check_branch
      %27 = sbr.rel (0) target = $region9
    $region8: #{encoder_forward.1} parent=1 // pred_region
      _
    $region9: #{encoder_forward.1} parent=1 // pred_fallthru
      _
    // Predicated region
    $region10: #{encoder_forward.1} parent=1 // pred_check
      _
    $region11: #{encoder_forward.1} parent=1 // pred_check_branch
      %29 = sbr.rel (0) target = $region13
    $region12: #{encoder_forward.1} parent=1 // pred_region
      _
    $region13: #{encoder_forward.1} parent=1 // pred_fallthru
      _
    // Predicated region
    $region14: #{encoder_forward.1} parent=1 // pred_check
      _
    $region15: #{encoder_forward.1} parent=1 // pred_check_branch
      %31 = sbr.rel (0) target = $region17
    $region16: #{encoder_forward.1} parent=1 // pred_region
      %s33 = ssub.s32 1024, 1024
      %34 = vsyncadd [#allocation6], %s33
      %s35 = sshll.u32 [#allocation5], 4
      %s36 = int_to_ptr.vmem [resolvable:$true] %s35
      %41 = dma.hbm_to_vmem [thread:$0]  %s3, 1024, %s36, [#allocation6], 128, 128, 8
    $region17: #{encoder_forward.1} parent=1 // pred_fallthru
      _
    // Predicated region
    $region18: #{encoder_forward.1} parent=1 // pred_check
      _
    $region19: #{encoder_forward.1} parent=1 // pred_check_branch
      %43 = sbr.rel (0) target = $region21
    $region20: #{encoder_forward.1} parent=1 // pred_region
      _
    $region21: #{encoder_forward.1} parent=1 // pred_fallthru
      _
    // Predicated region
    $region22: #{encoder_forward.1} parent=1 // pred_check
      _
    $region23: #{encoder_forward.1} parent=1 // pred_check_branch
      %45 = sbr.rel (0) target = $region25
    $region24: #{encoder_forward.1} parent=1 // pred_region
      _
    $region25: #{encoder_forward.1} parent=1 // pred_fallthru
      _
    // Predicated region
    $region26: #{encoder_forward.1} parent=1 // pred_check
      _
    $region27: #{encoder_forward.1} parent=1 // pred_check_branch
      %47 = sbr.rel (0) target = $region29
    $region28: #{encoder_forward.1} parent=1 // pred_region
      %48 = dma.done [#allocation3], 256
    $region29: #{encoder_forward.1} parent=1 // pred_fallthru
      _
    // Predicated region
    $region30: #{encoder_forward.1} parent=1 // pred_check
      _
    $region31: #{encoder_forward.1} parent=1 // pred_check_branch
      %50 = sbr.rel (0) target = $region33
    $region32: #{encoder_forward.1} parent=1 // pred_region
      %51 = dma.done [#allocation6], 1024
    $region33: #{encoder_forward.1} parent=1 // pred_fallthru
      _
    %v52 = vld [vmem:[#allocation2] sm:$0xff]
    %v53 = vld [vmem:[#allocation2 + $0x8] sm:$0xff]
    %v54 = vld [vmem:[%s1] sm:$0xff]
    %v55 = vld [vmem:[%s1 + $0x8] sm:$0xff]
    %v56 = vld [vmem:[%s5] sm:$0xff]
    %v57 = vld [vmem:[%s5 + $0x8] sm:$0x3]
    %vm58 = vcmask 261120
    %v59 = vsel %vm58, %v52, 0.0
    %60 = vadd.xlane.f32.xlu0 %v59
    %v61 = vpop.xlane.xlu0 %60
    %v62 = vsel %vm58, %v53, 0.0
    %63 = vadd.xlane.f32.xlu0 %v62
    %v64 = vpop.xlane.xlu0 %63
    %v65 = vrcp.pop 32.0
    %v66 = vmul.f32 %v61, %v65
    %v67 = vmul.f32 %v64, %v65
    %v68 = vsub.f32 %v52, %v66
    %v69 = vsub.f32 %v53, %v67
    %v70 = vmul.f32 %v68, %v68
    %v71 = vmul.f32 %v69, %v69
    %v72 = vsel %vm58, %v70, 0.0
    %73 = vadd.xlane.f32.xlu0 %v72
    %v74 = vpop.xlane.xlu0 %73
    %v75 = vsel %vm58, %v71, 0.0
    %76 = vadd.xlane.f32.xlu0 %v75
    %v77 = vpop.xlane.xlu0 %76
    %v78 = vmul.f32 %v74, %v65
    %v79 = vmul.f32 %v77, %v65
    %v80 = vlaneseq
    %v81 = vshrl.u32 %v80, 7
    %v82 = vsub.s32 6, %v81
    %v83 = vrot.slane %v56, %v82
    %v84 = vmul.f32 %v83, %v68
    %v85 = vmul.f32 %v83, %v69
    %v86 = vadd.f32 %v78, 1e-05
    %v87 = vadd.f32 %v79, 1e-05
    %v88 = vrsqrt.pop %v86
    %v89 = vrsqrt.pop %v87
    %v90 = vmul.f32 %v84, %v88
    %v91 = vmul.f32 %v85, %v89
    %v92 = vlaneseq
    %v93 = vshrl.u32 %v92, 7
    %v94 = vsub.s32 7, %v93
    %v95 = vrot.slane %v56, %v94
    %v96 = vadd.f32 %v90, %v95
    %v97 = vadd.f32 %v91, %v95
    %v98 = vld [vmem:[%s2] sm:$0xff]
    %v99 = vld [vmem:[%s2 + $0x8] sm:$0xff]
    %v100 = vld [vmem:[%s2 + $0x10] sm:$0xff]
    %v101 = vld [vmem:[%s2 + $0x18] sm:$0xff]
    %v102 = vlaneseq
    %v103 = vshrl.u32 %v102, 7
    %v104 = vsub.s32 0, %v103
    %v105 = vrot.slane %v56, %v104
    %v107 = vsel %vm58, %v96, 0
    %v110 = vsel %vm58, %v97, 0
    %112 = vmatprep.subr.mxu0 0.0
    %113 = vmatpush1.msra.mxu0 %v98
    %114 = vmatprep.subr.mxu0 0.0
    %115 = vmatpush1.msra.mxu0 %v99
    %116 = vmatprep.subr.mxu0 0.0
    %117 = vmatpush1.msra.mxu0 %v100
    %118 = vmatprep.subr.mxu0 0.0
    %119 = vmatpush1.msra.mxu0 %v101
    %120 = vmatprep.subr.mxu0 0.0
    %121 = vmatpush1.msra.mxu0 0.0
    %122 = vmatprep.subr.mxu0 0.0
    %123 = vmatpush1.msra.mxu0 0.0
    %124 = vmatprep.subr.mxu0 0.0
    %125 = vmatpush1.msra.mxu0 0.0
    %126 = vmatprep.subr.mxu0 0.0
    %127 = vmatpush1.msra.mxu0 0.0
    %128 = vmatprep.subr.mxu0 0.0
    %129 = vmatpush1.msra.mxu0 0.0
    %130 = vmatprep.subr.mxu0 0.0
    %131 = vmatpush1.msra.mxu0 0.0
    %132 = vmatprep.subr.mxu0 0.0
    %133 = vmatpush1.msra.mxu0 0.0
    %134 = vmatprep.subr.mxu0 0.0
    %135 = vmatpush1.msra.mxu0 0.0
    %136 = vmatprep.subr.mxu0 0.0
    %137 = vmatpush1.msra.mxu0 0.0
    %138 = vmatprep.subr.mxu0 0.0
    %139 = vmatpush1.msra.mxu0 0.0
    %140 = vmatprep.subr.mxu0 0.0
    %141 = vmatpush1.msra.mxu0 0.0
    %142 = vmatprep.subr.mxu0 0.0
    %143 = vmatpush1.msra.mxu0 0.0
    %144 = vmatprep.subr.mxu0 0.0
    %145 = vmatpush1.msra.mxu0 0.0
    %146 = vmatprep.subr.mxu0 0.0
    %147 = vmatpush1.msra.mxu0 0.0
    %148 = vmatprep.subr.mxu0 0.0
    %149 = vmatpush1.msra.mxu0 0.0
    %150 = vmatprep.subr.mxu0 0.0
    %151 = vmatpush1.msra.mxu0 0.0
    %152 = vmatprep.subr.mxu0 0.0
    %153 = vmatpush1.msra.mxu0 0.0
    %154 = vmatprep.subr.mxu0 0.0
    %155 = vmatpush1.msra.mxu0 0.0
    %156 = vmatprep.subr.mxu0 0.0
    %157 = vmatpush1.msra.mxu0 0.0
    %158 = vmatprep.subr.mxu0 0.0
    %159 = vmatpush1.msra.mxu0 0.0
    %160 = vmatprep.subr.mxu0 0.0
    %161 = vmatpush1.msra.mxu0 0.0
    %162 = vmatprep.subr.mxu0 0.0
    %163 = vmatpush1.msra.mxu0 0.0
    %164 = vmatprep.subr.mxu0 0.0
    %165 = vmatpush1.msra.mxu0 0.0
    %166 = vmatprep.subr.mxu0 0.0
    %167 = vmatpush1.msra.mxu0 0.0
    %168 = vmatprep.subr.mxu0 0.0
    %169 = vmatpush1.msra.mxu0 0.0
    %170 = vmatprep.subr.mxu0 0.0
    %171 = vmatpush1.msra.mxu0 0.0
    %172 = vmatprep.subr.mxu0 0.0
    %173 = vmatpush1.msra.mxu0 0.0
    %174 = vmatprep.subr.mxu0 0.0
    %175 = vmatpush1.msra.mxu0 0.0
    %176 = vmatprep.mubr.f32.mxu0 0.0
    %177 = vmatmul.mubr.f32.gmra.mrb[0].mxu0 %v107
    %v178 = vpop.f32.mrb[0].mxu0
    %v179 = vadd.f32 %v105, %v178
    %v180 = vpop.f32.mrb[0].mxu0
    %181 = vmatprep.mubr.f32.mxu0 0.0
    %182 = vmatmul.mubr.f32.gmra.mrb[0].mxu0 %v110
    %v183 = vpop.f32.mrb[0].mxu0
    %v184 = vadd.f32 %v105, %v183
    %v185 = vpop.f32.mrb[0].mxu0
    %186 = vdwg.mxu0
    %s187 = scalar_lea.vmem %s2, 32
    %v188 = vld [vmem:[%s187] sm:$0xff]
    %v189 = vld [vmem:[%s187 + $0x8] sm:$0xff]
    %v190 = vld [vmem:[%s187 + $0x10] sm:$0xff]
    %v191 = vld [vmem:[%s187 + $0x18] sm:$0xff]
    %v192 = vlaneseq
    %v193 = vshrl.u32 %v192, 7
    %v194 = vsub.s32 1, %v193
    %v195 = vrot.slane %v56, %v194
    %196 = vmatprep.subr.mxu0 0.0
    %197 = vmatpush1.msra.mxu0 %v188
    %198 = vmatprep.subr.mxu0 0.0
    %199 = vmatpush1.msra.mxu0 %v189
    %200 = vmatprep.subr.mxu0 0.0
    %201 = vmatpush1.msra.mxu0 %v190
    %202 = vmatprep.subr.mxu0 0.0
    %203 = vmatpush1.msra.mxu0 %v191
    %204 = vmatprep.subr.mxu0 0.0
    %205 = vmatpush1.msra.mxu0 0.0
    %206 = vmatprep.subr.mxu0 0.0
    %207 = vmatpush1.msra.mxu0 0.0
    %208 = vmatprep.subr.mxu0 0.0
    %209 = vmatpush1.msra.mxu0 0.0
    %210 = vmatprep.subr.mxu0 0.0
    %211 = vmatpush1.msra.mxu0 0.0
    %212 = vmatprep.subr.mxu0 0.0
    %213 = vmatpush1.msra.mxu0 0.0
    %214 = vmatprep.subr.mxu0 0.0
    %215 = vmatpush1.msra.mxu0 0.0
    %216 = vmatprep.subr.mxu0 0.0
    %217 = vmatpush1.msra.mxu0 0.0
    %218 = vmatprep.subr.mxu0 0.0
    %219 = vmatpush1.msra.mxu0 0.0
    %220 = vmatprep.subr.mxu0 0.0
    %221 = vmatpush1.msra.mxu0 0.0
    %222 = vmatprep.subr.mxu0 0.0
    %223 = vmatpush1.msra.mxu0 0.0
    %224 = vmatprep.subr.mxu0 0.0
    %225 = vmatpush1.msra.mxu0 0.0
    %226 = vmatprep.subr.mxu0 0.0
    %227 = vmatpush1.msra.mxu0 0.0
    %228 = vmatprep.subr.mxu0 0.0
    %229 = vmatpush1.msra.mxu0 0.0
    %230 = vmatprep.subr.mxu0 0.0
    %231 = vmatpush1.msra.mxu0 0.0
    %232 = vmatprep.subr.mxu0 0.0
    %233 = vmatpush1.msra.mxu0 0.0
    %234 = vmatprep.subr.mxu0 0.0
    %235 = vmatpush1.msra.mxu0 0.0
    %236 = vmatprep.subr.mxu0 0.0
    %237 = vmatpush1.msra.mxu0 0.0
    %238 = vmatprep.subr.mxu0 0.0
    %239 = vmatpush1.msra.mxu0 0.0
    %240 = vmatprep.subr.mxu0 0.0
    %241 = vmatpush1.msra.mxu0 0.0
    %242 = vmatprep.subr.mxu0 0.0
    %243 = vmatpush1.msra.mxu0 0.0
    %244 = vmatprep.subr.mxu0 0.0
    %245 = vmatpush1.msra.mxu0 0.0
    %246 = vmatprep.subr.mxu0 0.0
    %247 = vmatpush1.msra.mxu0 0.0
    %248 = vmatprep.subr.mxu0 0.0
    %249 = vmatpush1.msra.mxu0 0.0
    %250 = vmatprep.subr.mxu0 0.0
    %251 = vmatpush1.msra.mxu0 0.0
    %252 = vmatprep.subr.mxu0 0.0
    %253 = vmatpush1.msra.mxu0 0.0
    %254 = vmatprep.subr.mxu0 0.0
    %255 = vmatpush1.msra.mxu0 0.0
    %256 = vmatprep.subr.mxu0 0.0
    %257 = vmatpush1.msra.mxu0 0.0
    %258 = vmatprep.subr.mxu0 0.0
    %259 = vmatpush1.msra.mxu0 0.0
    %260 = vmatprep.mubr.f32.mxu0 0.0
    %261 = vmatmul.mubr.f32.gmra.mrb[0].mxu0 %v107
    %v262 = vpop.f32.mrb[0].mxu0
    %v263 = vadd.f32 %v195, %v262
    %v264 = vpop.f32.mrb[0].mxu0
    %265 = vmatprep.mubr.f32.mxu0 0.0
    %266 = vmatmul.mubr.f32.gmra.mrb[0].mxu0 %v110
    %v267 = vpop.f32.mrb[0].mxu0
    %v268 = vadd.f32 %v195, %v267
    %v269 = vpop.f32.mrb[0].mxu0
    %270 = vdwg.mxu0
    %s271 = scalar_lea.vmem %s2, 64
    %v272 = vld [vmem:[%s271] sm:$0xff]
    %v273 = vld [vmem:[%s271 + $0x8] sm:$0xff]
    %v274 = vld [vmem:[%s271 + $0x10] sm:$0xff]
    %v275 = vld [vmem:[%s271 + $0x18] sm:$0xff]
    %v276 = vlaneseq
    %v277 = vshrl.u32 %v276, 7
    %v278 = vsub.s32 2, %v277
    %v279 = vrot.slane %v56, %v278
    %280 = vmatprep.subr.mxu0 0.0
    %281 = vmatpush1.msra.mxu0 %v272
    %282 = vmatprep.subr.mxu0 0.0
    %283 = vmatpush1.msra.mxu0 %v273
    %284 = vmatprep.subr.mxu0 0.0
    %285 = vmatpush1.msra.mxu0 %v274
    %286 = vmatprep.subr.mxu0 0.0
    %287 = vmatpush1.msra.mxu0 %v275
    %288 = vmatprep.subr.mxu0 0.0
    %289 = vmatpush1.msra.mxu0 0.0
    %290 = vmatprep.subr.mxu0 0.0
    %291 = vmatpush1.msra.mxu0 0.0
    %292 = vmatprep.subr.mxu0 0.0
    %293 = vmatpush1.msra.mxu0 0.0
    %294 = vmatprep.subr.mxu0 0.0
    %295 = vmatpush1.msra.mxu0 0.0
    %296 = vmatprep.subr.mxu0 0.0
    %297 = vmatpush1.msra.mxu0 0.0
    %298 = vmatprep.subr.mxu0 0.0
    %299 = vmatpush1.msra.mxu0 0.0
    %300 = vmatprep.subr.mxu0 0.0
    %301 = vmatpush1.msra.mxu0 0.0
    %302 = vmatprep.subr.mxu0 0.0
    %303 = vmatpush1.msra.mxu0 0.0
    %304 = vmatprep.subr.mxu0 0.0
    %305 = vmatpush1.msra.mxu0 0.0
    %306 = vmatprep.subr.mxu0 0.0
    %307 = vmatpush1.msra.mxu0 0.0
    %308 = vmatprep.subr.mxu0 0.0
    %309 = vmatpush1.msra.mxu0 0.0
    %310 = vmatprep.subr.mxu0 0.0
    %311 = vmatpush1.msra.mxu0 0.0
    %312 = vmatprep.subr.mxu0 0.0
    %313 = vmatpush1.msra.mxu0 0.0
    %314 = vmatprep.subr.mxu0 0.0
    %315 = vmatpush1.msra.mxu0 0.0
    %316 = vmatprep.subr.mxu0 0.0
    %317 = vmatpush1.msra.mxu0 0.0
    %318 = vmatprep.subr.mxu0 0.0
    %319 = vmatpush1.msra.mxu0 0.0
    %320 = vmatprep.subr.mxu0 0.0
    %321 = vmatpush1.msra.mxu0 0.0
    %322 = vmatprep.subr.mxu0 0.0
    %323 = vmatpush1.msra.mxu0 0.0
    %324 = vmatprep.subr.mxu0 0.0
    %325 = vmatpush1.msra.mxu0 0.0
    %326 = vmatprep.subr.mxu0 0.0
    %327 = vmatpush1.msra.mxu0 0.0
    %328 = vmatprep.subr.mxu0 0.0
    %329 = vmatpush1.msra.mxu0 0.0
    %330 = vmatprep.subr.mxu0 0.0
    %331 = vmatpush1.msra.mxu0 0.0
    %332 = vmatprep.subr.mxu0 0.0
    %333 = vmatpush1.msra.mxu0 0.0
    %334 = vmatprep.subr.mxu0 0.0
    %335 = vmatpush1.msra.mxu0 0.0
    %336 = vmatprep.subr.mxu0 0.0
    %337 = vmatpush1.msra.mxu0 0.0
    %338 = vmatprep.subr.mxu0 0.0
    %339 = vmatpush1.msra.mxu0 0.0
    %340 = vmatprep.subr.mxu0 0.0
    %341 = vmatpush1.msra.mxu0 0.0
    %342 = vmatprep.subr.mxu0 0.0
    %343 = vmatpush1.msra.mxu0 0.0
    %344 = vmatprep.mubr.f32.mxu0 0.0
    %345 = vmatmul.mubr.f32.gmra.mrb[0].mxu0 %v107
    %v346 = vpop.f32.mrb[0].mxu0
    %v347 = vadd.f32 %v279, %v346
    %v348 = vpop.f32.mrb[0].mxu0
    %349 = vmatprep.mubr.f32.mxu0 0.0
    %350 = vmatmul.mubr.f32.gmra.mrb[0].mxu0 %v110
    %v351 = vpop.f32.mrb[0].mxu0
    %v352 = vadd.f32 %v279, %v351
    %v353 = vpop.f32.mrb[0].mxu0
    %354 = vdwg.mxu0
    %357 = vrot.lane.b32.xlu0 %v179, 120
    %v358 = vpop.permute.xlu0 %357
    %359 = vrot.lane.b32.xlu0 %v184, 120
    %v360 = vpop.permute.xlu0 %359
    %361 = vrot.lane.b32.xlu0 %v179, 112
    %v362 = vpop.permute.xlu0 %361
    %363 = vrot.lane.b32.xlu0 %v184, 112
    %v364 = vpop.permute.xlu0 %363
    %365 = vrot.lane.b32.xlu0 %v179, 104
    %v366 = vpop.permute.xlu0 %365
    %367 = vrot.lane.b32.xlu0 %v184, 104
    %v368 = vpop.permute.xlu0 %367
    %371 = vrot.lane.b32.xlu0 %v263, 120
    %v372 = vpop.permute.xlu0 %371
    %373 = vrot.lane.b32.xlu0 %v268, 120
    %v374 = vpop.permute.xlu0 %373
    %375 = vrot.lane.b32.xlu0 %v263, 112
    %v376 = vpop.permute.xlu0 %375
    %377 = vrot.lane.b32.xlu0 %v268, 112
    %v378 = vpop.permute.xlu0 %377
    %379 = vrot.lane.b32.xlu0 %v263, 104
    %v380 = vpop.permute.xlu0 %379
    %381 = vrot.lane.b32.xlu0 %v268, 104
    %v382 = vpop.permute.xlu0 %381
    %385 = vrot.lane.b32.xlu0 %v347, 120
    %v386 = vpop.permute.xlu0 %385
    %387 = vrot.lane.b32.xlu0 %v352, 120
    %v388 = vpop.permute.xlu0 %387
    %391 = vrot.lane.b32.xlu0 %v347, 112
    %v392 = vpop.permute.xlu0 %391
    %393 = vrot.lane.b32.xlu0 %v352, 112
    %v394 = vpop.permute.xlu0 %393
    %397 = vrot.lane.b32.xlu0 %v347, 104
    %v398 = vpop.permute.xlu0 %397
    %399 = vrot.lane.b32.xlu0 %v352, 104
    %v400 = vpop.permute.xlu0 %399
    %vm403 = vcmask 64512
    %v404 = vsel %vm403, %v179, 0
    %v406 = vsel %vm403, %v263, 0
    %408 = vmatprep.subr.mxu0 0.0
    %409 = vmatpush1.xpose.msra.mxu0 %v406
    %410 = vmatprep.subr.mxu0 0.0
    %411 = vmatpush1.xpose.msra.mxu0 0.0
    %412 = vmatprep.subr.mxu0 0.0
    %413 = vmatpush1.xpose.msra.mxu0 0.0
    %414 = vmatprep.subr.mxu0 0.0
    %415 = vmatpush1.xpose.msra.mxu0 0.0
    %416 = vmatprep.subr.mxu0 0.0
    %417 = vmatpush1.xpose.msra.mxu0 0.0
    %418 = vmatprep.subr.mxu0 0.0
    %419 = vmatpush1.xpose.msra.mxu0 0.0
    %420 = vmatprep.subr.mxu0 0.0
    %421 = vmatpush1.xpose.msra.mxu0 0.0
    %422 = vmatprep.subr.mxu0 0.0
    %423 = vmatpush1.xpose.msra.mxu0 0.0
    %424 = vmatprep.subr.mxu0 0.0
    %425 = vmatpush1.xpose.msra.mxu0 0.0
    %426 = vmatprep.subr.mxu0 0.0
    %427 = vmatpush1.xpose.msra.mxu0 0.0
    %428 = vmatprep.subr.mxu0 0.0
    %429 = vmatpush1.xpose.msra.mxu0 0.0
    %430 = vmatprep.subr.mxu0 0.0
    %431 = vmatpush1.xpose.msra.mxu0 0.0
    %432 = vmatprep.subr.mxu0 0.0
    %433 = vmatpush1.xpose.msra.mxu0 0.0
    %434 = vmatprep.subr.mxu0 0.0
    %435 = vmatpush1.xpose.msra.mxu0 0.0
    %436 = vmatprep.subr.mxu0 0.0
    %437 = vmatpush1.xpose.msra.mxu0 0.0
    %438 = vmatprep.subr.mxu0 0.0
    %439 = vmatpush1.xpose.msra.mxu0 0.0
    %440 = vmatprep.subr.mxu0 0.0
    %441 = vmatpush1.xpose.msra.mxu0 0.0
    %442 = vmatprep.subr.mxu0 0.0
    %443 = vmatpush1.xpose.msra.mxu0 0.0
    %444 = vmatprep.subr.mxu0 0.0
    %445 = vmatpush1.xpose.msra.mxu0 0.0
    %446 = vmatprep.subr.mxu0 0.0
    %447 = vmatpush1.xpose.msra.mxu0 0.0
    %448 = vmatprep.subr.mxu0 0.0
    %449 = vmatpush1.xpose.msra.mxu0 0.0
    %450 = vmatprep.subr.mxu0 0.0
    %451 = vmatpush1.xpose.msra.mxu0 0.0
    %452 = vmatprep.subr.mxu0 0.0
    %453 = vmatpush1.xpose.msra.mxu0 0.0
    %454 = vmatprep.subr.mxu0 0.0
    %455 = vmatpush1.xpose.msra.mxu0 0.0
    %456 = vmatprep.subr.mxu0 0.0
    %457 = vmatpush1.xpose.msra.mxu0 0.0
    %458 = vmatprep.subr.mxu0 0.0
    %459 = vmatpush1.xpose.msra.mxu0 0.0
    %460 = vmatprep.subr.mxu0 0.0
    %461 = vmatpush1.xpose.msra.mxu0 0.0
    %462 = vmatprep.subr.mxu0 0.0
    %463 = vmatpush1.xpose.msra.mxu0 0.0
    %464 = vmatprep.subr.mxu0 0.0
    %465 = vmatpush1.xpose.msra.mxu0 0.0
    %466 = vmatprep.subr.mxu0 0.0
    %467 = vmatpush1.xpose.msra.mxu0 0.0
    %468 = vmatprep.subr.mxu0 0.0
    %469 = vmatpush1.xpose.msra.mxu0 0.0
    %470 = vmatprep.subr.mxu0 0.0
    %471 = vmatpush1.xpose.msra.mxu0 0.0
    %472 = vmatprep.mubr.f32.mxu0 0.0
    %473 = vmatmul.mubr.f32.gmra.mrb[0].mxu0 %v404
    %v474 = vpop.f32.mrb[0].mxu0
    %v475 = vadd.f32 0.0, %v474
    %v476 = vpop.f32.mrb[0].mxu0
    %477 = vdwg.mxu0
    %v478 = vsel %vm403, %v184, 0
    %v480 = vsel %vm403, %v268, 0
    %482 = vmatprep.subr.mxu0 0.0
    %483 = vmatpush1.xpose.msra.mxu0 %v480
    %484 = vmatprep.subr.mxu0 0.0
    %485 = vmatpush1.xpose.msra.mxu0 0.0
    %486 = vmatprep.subr.mxu0 0.0
    %487 = vmatpush1.xpose.msra.mxu0 0.0
    %488 = vmatprep.subr.mxu0 0.0
    %489 = vmatpush1.xpose.msra.mxu0 0.0
    %490 = vmatprep.subr.mxu0 0.0
    %491 = vmatpush1.xpose.msra.mxu0 0.0
    %492 = vmatprep.subr.mxu0 0.0
    %493 = vmatpush1.xpose.msra.mxu0 0.0
    %494 = vmatprep.subr.mxu0 0.0
    %495 = vmatpush1.xpose.msra.mxu0 0.0
    %496 = vmatprep.subr.mxu0 0.0
    %497 = vmatpush1.xpose.msra.mxu0 0.0
    %498 = vmatprep.subr.mxu0 0.0
    %499 = vmatpush1.xpose.msra.mxu0 0.0
    %500 = vmatprep.subr.mxu0 0.0
    %501 = vmatpush1.xpose.msra.mxu0 0.0
    %502 = vmatprep.subr.mxu0 0.0
    %503 = vmatpush1.xpose.msra.mxu0 0.0
    %504 = vmatprep.subr.mxu0 0.0
    %505 = vmatpush1.xpose.msra.mxu0 0.0
    %506 = vmatprep.subr.mxu0 0.0
    %507 = vmatpush1.xpose.msra.mxu0 0.0
    %508 = vmatprep.subr.mxu0 0.0
    %509 = vmatpush1.xpose.msra.mxu0 0.0
    %510 = vmatprep.subr.mxu0 0.0
    %511 = vmatpush1.xpose.msra.mxu0 0.0
    %512 = vmatprep.subr.mxu0 0.0
    %513 = vmatpush1.xpose.msra.mxu0 0.0
    %514 = vmatprep.subr.mxu0 0.0
    %515 = vmatpush1.xpose.msra.mxu0 0.0
    %516 = vmatprep.subr.mxu0 0.0
    %517 = vmatpush1.xpose.msra.mxu0 0.0
    %518 = vmatprep.subr.mxu0 0.0
    %519 = vmatpush1.xpose.msra.mxu0 0.0
    %520 = vmatprep.subr.mxu0 0.0
    %521 = vmatpush1.xpose.msra.mxu0 0.0
    %522 = vmatprep.subr.mxu0 0.0
    %523 = vmatpush1.xpose.msra.mxu0 0.0
    %524 = vmatprep.subr.mxu0 0.0
    %525 = vmatpush1.xpose.msra.mxu0 0.0
    %526 = vmatprep.subr.mxu0 0.0
    %527 = vmatpush1.xpose.msra.mxu0 0.0
    %528 = vmatprep.subr.mxu0 0.0
    %529 = vmatpush1.xpose.msra.mxu0 0.0
    %530 = vmatprep.subr.mxu0 0.0
    %531 = vmatpush1.xpose.msra.mxu0 0.0
    %532 = vmatprep.subr.mxu0 0.0
    %533 = vmatpush1.xpose.msra.mxu0 0.0
    %534 = vmatprep.subr.mxu0 0.0
    %535 = vmatpush1.xpose.msra.mxu0 0.0
    %536 = vmatprep.subr.mxu0 0.0
    %537 = vmatpush1.xpose.msra.mxu0 0.0
    %538 = vmatprep.subr.mxu0 0.0
    %539 = vmatpush1.xpose.msra.mxu0 0.0
    %540 = vmatprep.subr.mxu0 0.0
    %541 = vmatpush1.xpose.msra.mxu0 0.0
    %542 = vmatprep.subr.mxu0 0.0
    %543 = vmatpush1.xpose.msra.mxu0 0.0
    %544 = vmatprep.subr.mxu0 0.0
    %545 = vmatpush1.xpose.msra.mxu0 0.0
    %546 = vmatprep.mubr.f32.mxu0 0.0
    %547 = vmatmul.mubr.f32.gmra.mrb[0].mxu0 %v478
    %v548 = vpop.f32.mrb[0].mxu0
    %v549 = vadd.f32 0.0, %v548
    %v550 = vpop.f32.mrb[0].mxu0
    %551 = vdwg.mxu0
    %v552 = vsel %vm403, %v358, 0
    %v554 = vsel %vm403, %v372, 0
    %556 = vmatprep.subr.mxu0 0.0
    %557 = vmatpush1.xpose.msra.mxu0 %v554
    %558 = vmatprep.subr.mxu0 0.0
    %559 = vmatpush1.xpose.msra.mxu0 0.0
    %560 = vmatprep.subr.mxu0 0.0
    %561 = vmatpush1.xpose.msra.mxu0 0.0
    %562 = vmatprep.subr.mxu0 0.0
    %563 = vmatpush1.xpose.msra.mxu0 0.0
    %564 = vmatprep.subr.mxu0 0.0
    %565 = vmatpush1.xpose.msra.mxu0 0.0
    %566 = vmatprep.subr.mxu0 0.0
    %567 = vmatpush1.xpose.msra.mxu0 0.0
    %568 = vmatprep.subr.mxu0 0.0
    %569 = vmatpush1.xpose.msra.mxu0 0.0
    %570 = vmatprep.subr.mxu0 0.0
    %571 = vmatpush1.xpose.msra.mxu0 0.0
    %572 = vmatprep.subr.mxu0 0.0
    %573 = vmatpush1.xpose.msra.mxu0 0.0
    %574 = vmatprep.subr.mxu0 0.0
    %575 = vmatpush1.xpose.msra.mxu0 0.0
    %576 = vmatprep.subr.mxu0 0.0
    %577 = vmatpush1.xpose.msra.mxu0 0.0
    %578 = vmatprep.subr.mxu0 0.0
    %579 = vmatpush1.xpose.msra.mxu0 0.0
    %580 = vmatprep.subr.mxu0 0.0
    %581 = vmatpush1.xpose.msra.mxu0 0.0
    %582 = vmatprep.subr.mxu0 0.0
    %583 = vmatpush1.xpose.msra.mxu0 0.0
    %584 = vmatprep.subr.mxu0 0.0
    %585 = vmatpush1.xpose.msra.mxu0 0.0
    %586 = vmatprep.subr.mxu0 0.0
    %587 = vmatpush1.xpose.msra.mxu0 0.0
    %588 = vmatprep.subr.mxu0 0.0
    %589 = vmatpush1.xpose.msra.mxu0 0.0
    %590 = vmatprep.subr.mxu0 0.0
    %591 = vmatpush1.xpose.msra.mxu0 0.0
    %592 = vmatprep.subr.mxu0 0.0
    %593 = vmatpush1.xpose.msra.mxu0 0.0
    %594 = vmatprep.subr.mxu0 0.0
    %595 = vmatpush1.xpose.msra.mxu0 0.0
    %596 = vmatprep.subr.mxu0 0.0
    %597 = vmatpush1.xpose.msra.mxu0 0.0
    %598 = vmatprep.subr.mxu0 0.0
    %599 = vmatpush1.xpose.msra.mxu0 0.0
    %600 = vmatprep.subr.mxu0 0.0
    %601 = vmatpush1.xpose.msra.mxu0 0.0
    %602 = vmatprep.subr.mxu0 0.0
    %603 = vmatpush1.xpose.msra.mxu0 0.0
    %604 = vmatprep.subr.mxu0 0.0
    %605 = vmatpush1.xpose.msra.mxu0 0.0
    %606 = vmatprep.subr.mxu0 0.0
    %607 = vmatpush1.xpose.msra.mxu0 0.0
    %608 = vmatprep.subr.mxu0 0.0
    %609 = vmatpush1.xpose.msra.mxu0 0.0
    %610 = vmatprep.subr.mxu0 0.0
    %611 = vmatpush1.xpose.msra.mxu0 0.0
    %612 = vmatprep.subr.mxu0 0.0
    %613 = vmatpush1.xpose.msra.mxu0 0.0
    %614 = vmatprep.subr.mxu0 0.0
    %615 = vmatpush1.xpose.msra.mxu0 0.0
    %616 = vmatprep.subr.mxu0 0.0
    %617 = vmatpush1.xpose.msra.mxu0 0.0
    %618 = vmatprep.subr.mxu0 0.0
    %619 = vmatpush1.xpose.msra.mxu0 0.0
    %620 = vmatprep.mubr.f32.mxu0 0.0
    %621 = vmatmul.mubr.f32.gmra.mrb[0].mxu0 %v552
    %v622 = vpop.f32.mrb[0].mxu0
    %v623 = vadd.f32 0.0, %v622
    %v624 = vpop.f32.mrb[0].mxu0
    %625 = vdwg.mxu0
    %v626 = vsel %vm403, %v360, 0
    %v628 = vsel %vm403, %v374, 0
    %630 = vmatprep.subr.mxu0 0.0
    %631 = vmatpush1.xpose.msra.mxu0 %v628
    %632 = vmatprep.subr.mxu0 0.0
    %633 = vmatpush1.xpose.msra.mxu0 0.0
    %634 = vmatprep.subr.mxu0 0.0
    %635 = vmatpush1.xpose.msra.mxu0 0.0
    %636 = vmatprep.subr.mxu0 0.0
    %637 = vmatpush1.xpose.msra.mxu0 0.0
    %638 = vmatprep.subr.mxu0 0.0
    %639 = vmatpush1.xpose.msra.mxu0 0.0
    %640 = vmatprep.subr.mxu0 0.0
    %641 = vmatpush1.xpose.msra.mxu0 0.0
    %642 = vmatprep.subr.mxu0 0.0
    %643 = vmatpush1.xpose.msra.mxu0 0.0
    %644 = vmatprep.subr.mxu0 0.0
    %645 = vmatpush1.xpose.msra.mxu0 0.0
    %646 = vmatprep.subr.mxu0 0.0
    %647 = vmatpush1.xpose.msra.mxu0 0.0
    %648 = vmatprep.subr.mxu0 0.0
    %649 = vmatpush1.xpose.msra.mxu0 0.0
    %650 = vmatprep.subr.mxu0 0.0
    %651 = vmatpush1.xpose.msra.mxu0 0.0
    %652 = vmatprep.subr.mxu0 0.0
    %653 = vmatpush1.xpose.msra.mxu0 0.0
    %654 = vmatprep.subr.mxu0 0.0
    %655 = vmatpush1.xpose.msra.mxu0 0.0
    %656 = vmatprep.subr.mxu0 0.0
    %657 = vmatpush1.xpose.msra.mxu0 0.0
    %658 = vmatprep.subr.mxu0 0.0
    %659 = vmatpush1.xpose.msra.mxu0 0.0
    %660 = vmatprep.subr.mxu0 0.0
    %661 = vmatpush1.xpose.msra.mxu0 0.0
    %662 = vmatprep.subr.mxu0 0.0
    %663 = vmatpush1.xpose.msra.mxu0 0.0
    %664 = vmatprep.subr.mxu0 0.0
    %665 = vmatpush1.xpose.msra.mxu0 0.0
    %666 = vmatprep.subr.mxu0 0.0
    %667 = vmatpush1.xpose.msra.mxu0 0.0
    %668 = vmatprep.subr.mxu0 0.0
    %669 = vmatpush1.xpose.msra.mxu0 0.0
    %670 = vmatprep.subr.mxu0 0.0
    %671 = vmatpush1.xpose.msra.mxu0 0.0
    %672 = vmatprep.subr.mxu0 0.0
    %673 = vmatpush1.xpose.msra.mxu0 0.0
    %674 = vmatprep.subr.mxu0 0.0
    %675 = vmatpush1.xpose.msra.mxu0 0.0
    %676 = vmatprep.subr.mxu0 0.0
    %677 = vmatpush1.xpose.msra.mxu0 0.0
    %678 = vmatprep.subr.mxu0 0.0
    %679 = vmatpush1.xpose.msra.mxu0 0.0
    %680 = vmatprep.subr.mxu0 0.0
    %681 = vmatpush1.xpose.msra.mxu0 0.0
    %682 = vmatprep.subr.mxu0 0.0
    %683 = vmatpush1.xpose.msra.mxu0 0.0
    %684 = vmatprep.subr.mxu0 0.0
    %685 = vmatpush1.xpose.msra.mxu0 0.0
    %686 = vmatprep.subr.mxu0 0.0
    %687 = vmatpush1.xpose.msra.mxu0 0.0
    %688 = vmatprep.subr.mxu0 0.0
    %689 = vmatpush1.xpose.msra.mxu0 0.0
    %690 = vmatprep.subr.mxu0 0.0
    %691 = vmatpush1.xpose.msra.mxu0 0.0
    %692 = vmatprep.subr.mxu0 0.0
    %693 = vmatpush1.xpose.msra.mxu0 0.0
    %694 = vmatprep.mubr.f32.mxu0 0.0
    %695 = vmatmul.mubr.f32.gmra.mrb[0].mxu0 %v626
    %v696 = vpop.f32.mrb[0].mxu0
    %v697 = vadd.f32 0.0, %v696
    %v698 = vpop.f32.mrb[0].mxu0
    %699 = vdwg.mxu0
    %v700 = vsel %vm403, %v362, 0
    %v702 = vsel %vm403, %v376, 0
    %704 = vmatprep.subr.mxu0 0.0
    %705 = vmatpush1.xpose.msra.mxu0 %v702
    %706 = vmatprep.subr.mxu0 0.0
    %707 = vmatpush1.xpose.msra.mxu0 0.0
    %708 = vmatprep.subr.mxu0 0.0
    %709 = vmatpush1.xpose.msra.mxu0 0.0
    %710 = vmatprep.subr.mxu0 0.0
    %711 = vmatpush1.xpose.msra.mxu0 0.0
    %712 = vmatprep.subr.mxu0 0.0
    %713 = vmatpush1.xpose.msra.mxu0 0.0
    %714 = vmatprep.subr.mxu0 0.0
    %715 = vmatpush1.xpose.msra.mxu0 0.0
    %716 = vmatprep.subr.mxu0 0.0
    %717 = vmatpush1.xpose.msra.mxu0 0.0
    %718 = vmatprep.subr.mxu0 0.0
    %719 = vmatpush1.xpose.msra.mxu0 0.0
    %720 = vmatprep.subr.mxu0 0.0
    %721 = vmatpush1.xpose.msra.mxu0 0.0
    %722 = vmatprep.subr.mxu0 0.0
    %723 = vmatpush1.xpose.msra.mxu0 0.0
    %724 = vmatprep.subr.mxu0 0.0
    %725 = vmatpush1.xpose.msra.mxu0 0.0
    %726 = vmatprep.subr.mxu0 0.0
    %727 = vmatpush1.xpose.msra.mxu0 0.0
    %728 = vmatprep.subr.mxu0 0.0
    %729 = vmatpush1.xpose.msra.mxu0 0.0
    %730 = vmatprep.subr.mxu0 0.0
    %731 = vmatpush1.xpose.msra.mxu0 0.0
    %732 = vmatprep.subr.mxu0 0.0
    %733 = vmatpush1.xpose.msra.mxu0 0.0
    %734 = vmatprep.subr.mxu0 0.0
    %735 = vmatpush1.xpose.msra.mxu0 0.0
    %736 = vmatprep.subr.mxu0 0.0
    %737 = vmatpush1.xpose.msra.mxu0 0.0
    %738 = vmatprep.subr.mxu0 0.0
    %739 = vmatpush1.xpose.msra.mxu0 0.0
    %740 = vmatprep.subr.mxu0 0.0
    %741 = vmatpush1.xpose.msra.mxu0 0.0
    %742 = vmatprep.subr.mxu0 0.0
    %743 = vmatpush1.xpose.msra.mxu0 0.0
    %744 = vmatprep.subr.mxu0 0.0
    %745 = vmatpush1.xpose.msra.mxu0 0.0
    %746 = vmatprep.subr.mxu0 0.0
    %747 = vmatpush1.xpose.msra.mxu0 0.0
    %748 = vmatprep.subr.mxu0 0.0
    %749 = vmatpush1.xpose.msra.mxu0 0.0
    %750 = vmatprep.subr.mxu0 0.0
    %751 = vmatpush1.xpose.msra.mxu0 0.0
    %752 = vmatprep.subr.mxu0 0.0
    %753 = vmatpush1.xpose.msra.mxu0 0.0
    %754 = vmatprep.subr.mxu0 0.0
    %755 = vmatpush1.xpose.msra.mxu0 0.0
    %756 = vmatprep.subr.mxu0 0.0
    %757 = vmatpush1.xpose.msra.mxu0 0.0
    %758 = vmatprep.subr.mxu0 0.0
    %759 = vmatpush1.xpose.msra.mxu0 0.0
    %760 = vmatprep.subr.mxu0 0.0
    %761 = vmatpush1.xpose.msra.mxu0 0.0
    %762 = vmatprep.subr.mxu0 0.0
    %763 = vmatpush1.xpose.msra.mxu0 0.0
    %764 = vmatprep.subr.mxu0 0.0
    %765 = vmatpush1.xpose.msra.mxu0 0.0
    %766 = vmatprep.subr.mxu0 0.0
    %767 = vmatpush1.xpose.msra.mxu0 0.0
    %768 = vmatprep.mubr.f32.mxu0 0.0
    %769 = vmatmul.mubr.f32.gmra.mrb[0].mxu0 %v700
    %v770 = vpop.f32.mrb[0].mxu0
    %v771 = vadd.f32 0.0, %v770
    %v772 = vpop.f32.mrb[0].mxu0
    %773 = vdwg.mxu0
    %v774 = vsel %vm403, %v364, 0
    %v776 = vsel %vm403, %v378, 0
    %778 = vmatprep.subr.mxu0 0.0
    %779 = vmatpush1.xpose.msra.mxu0 %v776
    %780 = vmatprep.subr.mxu0 0.0
    %781 = vmatpush1.xpose.msra.mxu0 0.0
    %782 = vmatprep.subr.mxu0 0.0
    %783 = vmatpush1.xpose.msra.mxu0 0.0
    %784 = vmatprep.subr.mxu0 0.0
    %785 = vmatpush1.xpose.msra.mxu0 0.0
    %786 = vmatprep.subr.mxu0 0.0
    %787 = vmatpush1.xpose.msra.mxu0 0.0
    %788 = vmatprep.subr.mxu0 0.0
    %789 = vmatpush1.xpose.msra.mxu0 0.0
    %790 = vmatprep.subr.mxu0 0.0
    %791 = vmatpush1.xpose.msra.mxu0 0.0
    %792 = vmatprep.subr.mxu0 0.0
    %793 = vmatpush1.xpose.msra.mxu0 0.0
    %794 = vmatprep.subr.mxu0 0.0
    %795 = vmatpush1.xpose.msra.mxu0 0.0
    %796 = vmatprep.subr.mxu0 0.0
    %797 = vmatpush1.xpose.msra.mxu0 0.0
    %798 = vmatprep.subr.mxu0 0.0
    %799 = vmatpush1.xpose.msra.mxu0 0.0
    %800 = vmatprep.subr.mxu0 0.0
    %801 = vmatpush1.xpose.msra.mxu0 0.0
    %802 = vmatprep.subr.mxu0 0.0
    %803 = vmatpush1.xpose.msra.mxu0 0.0
    %804 = vmatprep.subr.mxu0 0.0
    %805 = vmatpush1.xpose.msra.mxu0 0.0
    %806 = vmatprep.subr.mxu0 0.0
    %807 = vmatpush1.xpose.msra.mxu0 0.0
    %808 = vmatprep.subr.mxu0 0.0
    %809 = vmatpush1.xpose.msra.mxu0 0.0
    %810 = vmatprep.subr.mxu0 0.0
    %811 = vmatpush1.xpose.msra.mxu0 0.0
    %812 = vmatprep.subr.mxu0 0.0
    %813 = vmatpush1.xpose.msra.mxu0 0.0
    %814 = vmatprep.subr.mxu0 0.0
    %815 = vmatpush1.xpose.msra.mxu0 0.0
    %816 = vmatprep.subr.mxu0 0.0
    %817 = vmatpush1.xpose.msra.mxu0 0.0
    %818 = vmatprep.subr.mxu0 0.0
    %819 = vmatpush1.xpose.msra.mxu0 0.0
    %820 = vmatprep.subr.mxu0 0.0
    %821 = vmatpush1.xpose.msra.mxu0 0.0
    %822 = vmatprep.subr.mxu0 0.0
    %823 = vmatpush1.xpose.msra.mxu0 0.0
    %824 = vmatprep.subr.mxu0 0.0
    %825 = vmatpush1.xpose.msra.mxu0 0.0
    %826 = vmatprep.subr.mxu0 0.0
    %827 = vmatpush1.xpose.msra.mxu0 0.0
    %828 = vmatprep.subr.mxu0 0.0
    %829 = vmatpush1.xpose.msra.mxu0 0.0
    %830 = vmatprep.subr.mxu0 0.0
    %831 = vmatpush1.xpose.msra.mxu0 0.0
    %832 = vmatprep.subr.mxu0 0.0
    %833 = vmatpush1.xpose.msra.mxu0 0.0
    %834 = vmatprep.subr.mxu0 0.0
    %835 = vmatpush1.xpose.msra.mxu0 0.0
    %836 = vmatprep.subr.mxu0 0.0
    %837 = vmatpush1.xpose.msra.mxu0 0.0
    %838 = vmatprep.subr.mxu0 0.0
    %839 = vmatpush1.xpose.msra.mxu0 0.0
    %840 = vmatprep.subr.mxu0 0.0
    %841 = vmatpush1.xpose.msra.mxu0 0.0
    %842 = vmatprep.mubr.f32.mxu0 0.0
    %843 = vmatmul.mubr.f32.gmra.mrb[0].mxu0 %v774
    %v844 = vpop.f32.mrb[0].mxu0
    %v845 = vadd.f32 0.0, %v844
    %v846 = vpop.f32.mrb[0].mxu0
    %847 = vdwg.mxu0
    %v848 = vsel %vm403, %v366, 0
    %v850 = vsel %vm403, %v380, 0
    %852 = vmatprep.subr.mxu0 0.0
    %853 = vmatpush1.xpose.msra.mxu0 %v850
    %854 = vmatprep.subr.mxu0 0.0
    %855 = vmatpush1.xpose.msra.mxu0 0.0
    %856 = vmatprep.subr.mxu0 0.0
    %857 = vmatpush1.xpose.msra.mxu0 0.0
    %858 = vmatprep.subr.mxu0 0.0
    %859 = vmatpush1.xpose.msra.mxu0 0.0
    %860 = vmatprep.subr.mxu0 0.0
    %861 = vmatpush1.xpose.msra.mxu0 0.0
    %862 = vmatprep.subr.mxu0 0.0
    %863 = vmatpush1.xpose.msra.mxu0 0.0
    %864 = vmatprep.subr.mxu0 0.0
    %865 = vmatpush1.xpose.msra.mxu0 0.0
    %866 = vmatprep.subr.mxu0 0.0
    %867 = vmatpush1.xpose.msra.mxu0 0.0
    %868 = vmatprep.subr.mxu0 0.0
    %869 = vmatpush1.xpose.msra.mxu0 0.0
    %870 = vmatprep.subr.mxu0 0.0
    %871 = vmatpush1.xpose.msra.mxu0 0.0
    %872 = vmatprep.subr.mxu0 0.0
    %873 = vmatpush1.xpose.msra.mxu0 0.0
    %874 = vmatprep.subr.mxu0 0.0
    %875 = vmatpush1.xpose.msra.mxu0 0.0
    %876 = vmatprep.subr.mxu0 0.0
    %877 = vmatpush1.xpose.msra.mxu0 0.0
    %878 = vmatprep.subr.mxu0 0.0
    %879 = vmatpush1.xpose.msra.mxu0 0.0
    %880 = vmatprep.subr.mxu0 0.0
    %881 = vmatpush1.xpose.msra.mxu0 0.0
    %882 = vmatprep.subr.mxu0 0.0
    %883 = vmatpush1.xpose.msra.mxu0 0.0
    %884 = vmatprep.subr.mxu0 0.0
    %885 = vmatpush1.xpose.msra.mxu0 0.0
    %886 = vmatprep.subr.mxu0 0.0
    %887 = vmatpush1.xpose.msra.mxu0 0.0
    %888 = vmatprep.subr.mxu0 0.0
    %889 = vmatpush1.xpose.msra.mxu0 0.0
    %890 = vmatprep.subr.mxu0 0.0
    %891 = vmatpush1.xpose.msra.mxu0 0.0
    %892 = vmatprep.subr.mxu0 0.0
    %893 = vmatpush1.xpose.msra.mxu0 0.0
    %894 = vmatprep.subr.mxu0 0.0
    %895 = vmatpush1.xpose.msra.mxu0 0.0
    %896 = vmatprep.subr.mxu0 0.0
    %897 = vmatpush1.xpose.msra.mxu0 0.0
    %898 = vmatprep.subr.mxu0 0.0
    %899 = vmatpush1.xpose.msra.mxu0 0.0
    %900 = vmatprep.subr.mxu0 0.0
    %901 = vmatpush1.xpose.msra.mxu0 0.0
    %902 = vmatprep.subr.mxu0 0.0
    %903 = vmatpush1.xpose.msra.mxu0 0.0
    %904 = vmatprep.subr.mxu0 0.0
    %905 = vmatpush1.xpose.msra.mxu0 0.0
    %906 = vmatprep.subr.mxu0 0.0
    %907 = vmatpush1.xpose.msra.mxu0 0.0
    %908 = vmatprep.subr.mxu0 0.0
    %909 = vmatpush1.xpose.msra.mxu0 0.0
    %910 = vmatprep.subr.mxu0 0.0
    %911 = vmatpush1.xpose.msra.mxu0 0.0
    %912 = vmatprep.subr.mxu0 0.0
    %913 = vmatpush1.xpose.msra.mxu0 0.0
    %914 = vmatprep.subr.mxu0 0.0
    %915 = vmatpush1.xpose.msra.mxu0 0.0
    %916 = vmatprep.mubr.f32.mxu0 0.0
    %917 = vmatmul.mubr.f32.gmra.mrb[0].mxu0 %v848
    %v918 = vpop.f32.mrb[0].mxu0
    %v919 = vadd.f32 0.0, %v918
    %v920 = vpop.f32.mrb[0].mxu0
    %921 = vdwg.mxu0
    %v922 = vsel %vm403, %v368, 0
    %v924 = vsel %vm403, %v382, 0
    %926 = vmatprep.subr.mxu0 0.0
    %927 = vmatpush1.xpose.msra.mxu0 %v924
    %928 = vmatprep.subr.mxu0 0.0
    %929 = vmatpush1.xpose.msra.mxu0 0.0
    %930 = vmatprep.subr.mxu0 0.0
    %931 = vmatpush1.xpose.msra.mxu0 0.0
    %932 = vmatprep.subr.mxu0 0.0
    %933 = vmatpush1.xpose.msra.mxu0 0.0
    %934 = vmatprep.subr.mxu0 0.0
    %935 = vmatpush1.xpose.msra.mxu0 0.0
    %936 = vmatprep.subr.mxu0 0.0
    %937 = vmatpush1.xpose.msra.mxu0 0.0
    %938 = vmatprep.subr.mxu0 0.0
    %939 = vmatpush1.xpose.msra.mxu0 0.0
    %940 = vmatprep.subr.mxu0 0.0
    %941 = vmatpush1.xpose.msra.mxu0 0.0
    %942 = vmatprep.subr.mxu0 0.0
    %943 = vmatpush1.xpose.msra.mxu0 0.0
    %944 = vmatprep.subr.mxu0 0.0
    %945 = vmatpush1.xpose.msra.mxu0 0.0
    %946 = vmatprep.subr.mxu0 0.0
    %947 = vmatpush1.xpose.msra.mxu0 0.0
    %948 = vmatprep.subr.mxu0 0.0
    %949 = vmatpush1.xpose.msra.mxu0 0.0
    %950 = vmatprep.subr.mxu0 0.0
    %951 = vmatpush1.xpose.msra.mxu0 0.0
    %952 = vmatprep.subr.mxu0 0.0
    %953 = vmatpush1.xpose.msra.mxu0 0.0
    %954 = vmatprep.subr.mxu0 0.0
    %955 = vmatpush1.xpose.msra.mxu0 0.0
    %956 = vmatprep.subr.mxu0 0.0
    %957 = vmatpush1.xpose.msra.mxu0 0.0
    %958 = vmatprep.subr.mxu0 0.0
    %959 = vmatpush1.xpose.msra.mxu0 0.0
    %960 = vmatprep.subr.mxu0 0.0
    %961 = vmatpush1.xpose.msra.mxu0 0.0
    %962 = vmatprep.subr.mxu0 0.0
    %963 = vmatpush1.xpose.msra.mxu0 0.0
    %964 = vmatprep.subr.mxu0 0.0
    %965 = vmatpush1.xpose.msra.mxu0 0.0
    %966 = vmatprep.subr.mxu0 0.0
    %967 = vmatpush1.xpose.msra.mxu0 0.0
    %968 = vmatprep.subr.mxu0 0.0
    %969 = vmatpush1.xpose.msra.mxu0 0.0
    %970 = vmatprep.subr.mxu0 0.0
    %971 = vmatpush1.xpose.msra.mxu0 0.0
    %972 = vmatprep.subr.mxu0 0.0
    %973 = vmatpush1.xpose.msra.mxu0 0.0
    %974 = vmatprep.subr.mxu0 0.0
    %975 = vmatpush1.xpose.msra.mxu0 0.0
    %976 = vmatprep.subr.mxu0 0.0
    %977 = vmatpush1.xpose.msra.mxu0 0.0
    %978 = vmatprep.subr.mxu0 0.0
    %979 = vmatpush1.xpose.msra.mxu0 0.0
    %980 = vmatprep.subr.mxu0 0.0
    %981 = vmatpush1.xpose.msra.mxu0 0.0
    %982 = vmatprep.subr.mxu0 0.0
    %983 = vmatpush1.xpose.msra.mxu0 0.0
    %984 = vmatprep.subr.mxu0 0.0
    %985 = vmatpush1.xpose.msra.mxu0 0.0
    %986 = vmatprep.subr.mxu0 0.0
    %987 = vmatpush1.xpose.msra.mxu0 0.0
    %988 = vmatprep.subr.mxu0 0.0
    %989 = vmatpush1.xpose.msra.mxu0 0.0
    %990 = vmatprep.mubr.f32.mxu0 0.0
    %991 = vmatmul.mubr.f32.gmra.mrb[0].mxu0 %v922
    %v992 = vpop.f32.mrb[0].mxu0
    %v993 = vadd.f32 0.0, %v992
    %v994 = vpop.f32.mrb[0].mxu0
    %995 = vdwg.mxu0
    %v996 = vadd.f32 %v475, %v54
    %v997 = vadd.f32 %v549, %v55
    %v998 = vadd.f32 %v623, %v54
    %v999 = vadd.f32 %v697, %v55
    %v1000 = vadd.f32 %v771, %v54
    %v1001 = vadd.f32 %v845, %v55
    %v1002 = vadd.f32 %v919, %v54
    %v1003 = vadd.f32 %v993, %v55
    %v1004 = vsel %vm403, %v996, -inf
    %1005 = vmax.xlane.f32.xlu0 %v1004
    %v1006 = vpop.xlane.xlu0 %1005
    %v1007 = vsel %vm403, %v997, -inf
    %1008 = vmax.xlane.f32.xlu0 %v1007
    %v1009 = vpop.xlane.xlu0 %1008
    %v1010 = vsel %vm403, %v998, -inf
    %1011 = vmax.xlane.f32.xlu0 %v1010
    %v1012 = vpop.xlane.xlu0 %1011
    %v1013 = vsel %vm403, %v999, -inf
    %1014 = vmax.xlane.f32.xlu0 %v1013
    %v1015 = vpop.xlane.xlu0 %1014
    %v1016 = vsel %vm403, %v1000, -inf
    %1017 = vmax.xlane.f32.xlu0 %v1016
    %v1018 = vpop.xlane.xlu0 %1017
    %v1019 = vsel %vm403, %v1001, -inf
    %1020 = vmax.xlane.f32.xlu0 %v1019
    %v1021 = vpop.xlane.xlu0 %1020
    %v1022 = vsel %vm403, %v1002, -inf
    %1023 = vmax.xlane.f32.xlu0 %v1022
    %v1024 = vpop.xlane.xlu0 %1023
    %v1025 = vsel %vm403, %v1003, -inf
    %1026 = vmax.xlane.f32.xlu0 %v1025
    %v1027 = vpop.xlane.xlu0 %1026
    %v1028 = vsub.f32 %v996, %v1006
    %v1029 = vsub.f32 %v997, %v1009
    %v1030 = vsub.f32 %v998, %v1012
    %v1031 = vsub.f32 %v999, %v1015
    %v1032 = vsub.f32 %v1000, %v1018
    %v1033 = vsub.f32 %v1001, %v1021
    %v1034 = vsub.f32 %v1002, %v1024
    %v1035 = vsub.f32 %v1003, %v1027
    %v1036 = vmul.f32 %v1028, 1.442695
    %v1037 = vpow.pop %v1036
    %v1038 = vmul.f32 %v1029, 1.442695
    %v1039 = vpow.pop %v1038
    %v1040 = vmul.f32 %v1030, 1.442695
    %v1041 = vpow.pop %v1040
    %v1042 = vmul.f32 %v1031, 1.442695
    %v1043 = vpow.pop %v1042
    %v1044 = vmul.f32 %v1032, 1.442695
    %v1045 = vpow.pop %v1044
    %v1046 = vmul.f32 %v1033, 1.442695
    %v1047 = vpow.pop %v1046
    %v1048 = vmul.f32 %v1034, 1.442695
    %v1049 = vpow.pop %v1048
    %v1050 = vmul.f32 %v1035, 1.442695
    %v1051 = vpow.pop %v1050
    %v1052 = vsel %vm403, %v1037, 0.0
    %1053 = vadd.xlane.f32.xlu0 %v1052
    %v1054 = vpop.xlane.xlu0 %1053
    %v1055 = vsel %vm403, %v1039, 0.0
    %1056 = vadd.xlane.f32.xlu0 %v1055
    %v1057 = vpop.xlane.xlu0 %1056
    %v1058 = vsel %vm403, %v1041, 0.0
    %1059 = vadd.xlane.f32.xlu0 %v1058
    %v1060 = vpop.xlane.xlu0 %1059
    %v1061 = vsel %vm403, %v1043, 0.0
    %1062 = vadd.xlane.f32.xlu0 %v1061
    %v1063 = vpop.xlane.xlu0 %1062
    %v1064 = vsel %vm403, %v1045, 0.0
    %1065 = vadd.xlane.f32.xlu0 %v1064
    %v1066 = vpop.xlane.xlu0 %1065
    %v1067 = vsel %vm403, %v1047, 0.0
    %1068 = vadd.xlane.f32.xlu0 %v1067
    %v1069 = vpop.xlane.xlu0 %1068
    %v1070 = vsel %vm403, %v1049, 0.0
    %1071 = vadd.xlane.f32.xlu0 %v1070
    %v1072 = vpop.xlane.xlu0 %1071
    %v1073 = vsel %vm403, %v1051, 0.0
    %1074 = vadd.xlane.f32.xlu0 %v1073
    %v1075 = vpop.xlane.xlu0 %1074
    %v1076 = vrcp.pop %v1054
    %v1077 = vmul.f32 %v1037, %v1076
    %v1078 = vrcp.pop %v1057
    %v1079 = vmul.f32 %v1039, %v1078
    %v1080 = vrcp.pop %v1060
    %v1081 = vmul.f32 %v1041, %v1080
    %v1082 = vrcp.pop %v1063
    %v1083 = vmul.f32 %v1043, %v1082
    %v1084 = vrcp.pop %v1066
    %v1085 = vmul.f32 %v1045, %v1084
    %v1086 = vrcp.pop %v1069
    %v1087 = vmul.f32 %v1047, %v1086
    %v1088 = vrcp.pop %v1072
    %v1089 = vmul.f32 %v1049, %v1088
    %v1090 = vrcp.pop %v1075
    %v1091 = vmul.f32 %v1051, %v1090
    %v1093 = vsel %vm403, %v1077, 0
    %1095 = vmatprep.subr.mxu0 0.0
    %1096 = vmatpush1.msra.mxu0 %v347
    %1097 = vmatprep.subr.mxu0 0.0
    %1098 = vmatpush1.msra.mxu0 0.0
    %1099 = vmatprep.subr.mxu0 0.0
    %1100 = vmatpush1.msra.mxu0 0.0
    %1101 = vmatprep.subr.mxu0 0.0
    %1102 = vmatpush1.msra.mxu0 0.0
    %1103 = vmatprep.subr.mxu0 0.0
    %1104 = vmatpush1.msra.mxu0 0.0
    %1105 = vmatprep.subr.mxu0 0.0
    %1106 = vmatpush1.msra.mxu0 0.0
    %1107 = vmatprep.subr.mxu0 0.0
    %1108 = vmatpush1.msra.mxu0 0.0
    %1109 = vmatprep.subr.mxu0 0.0
    %1110 = vmatpush1.msra.mxu0 0.0
    %1111 = vmatprep.subr.mxu0 0.0
    %1112 = vmatpush1.msra.mxu0 0.0
    %1113 = vmatprep.subr.mxu0 0.0
    %1114 = vmatpush1.msra.mxu0 0.0
    %1115 = vmatprep.subr.mxu0 0.0
    %1116 = vmatpush1.msra.mxu0 0.0
    %1117 = vmatprep.subr.mxu0 0.0
    %1118 = vmatpush1.msra.mxu0 0.0
    %1119 = vmatprep.subr.mxu0 0.0
    %1120 = vmatpush1.msra.mxu0 0.0
    %1121 = vmatprep.subr.mxu0 0.0
    %1122 = vmatpush1.msra.mxu0 0.0
    %1123 = vmatprep.subr.mxu0 0.0
    %1124 = vmatpush1.msra.mxu0 0.0
    %1125 = vmatprep.subr.mxu0 0.0
    %1126 = vmatpush1.msra.mxu0 0.0
    %1127 = vmatprep.subr.mxu0 0.0
    %1128 = vmatpush1.msra.mxu0 0.0
    %1129 = vmatprep.subr.mxu0 0.0
    %1130 = vmatpush1.msra.mxu0 0.0
    %1131 = vmatprep.subr.mxu0 0.0
    %1132 = vmatpush1.msra.mxu0 0.0
    %1133 = vmatprep.subr.mxu0 0.0
    %1134 = vmatpush1.msra.mxu0 0.0
    %1135 = vmatprep.subr.mxu0 0.0
    %1136 = vmatpush1.msra.mxu0 0.0
    %1137 = vmatprep.subr.mxu0 0.0
    %1138 = vmatpush1.msra.mxu0 0.0
    %1139 = vmatprep.subr.mxu0 0.0
    %1140 = vmatpush1.msra.mxu0 0.0
    %1141 = vmatprep.subr.mxu0 0.0
    %1142 = vmatpush1.msra.mxu0 0.0
    %1143 = vmatprep.subr.mxu0 0.0
    %1144 = vmatpush1.msra.mxu0 0.0
    %1145 = vmatprep.subr.mxu0 0.0
    %1146 = vmatpush1.msra.mxu0 0.0
    %1147 = vmatprep.subr.mxu0 0.0
    %1148 = vmatpush1.msra.mxu0 0.0
    %1149 = vmatprep.subr.mxu0 0.0
    %1150 = vmatpush1.msra.mxu0 0.0
    %1151 = vmatprep.subr.mxu0 0.0
    %1152 = vmatpush1.msra.mxu0 0.0
    %1153 = vmatprep.subr.mxu0 0.0
    %1154 = vmatpush1.msra.mxu0 0.0
    %1155 = vmatprep.subr.mxu0 0.0
    %1156 = vmatpush1.msra.mxu0 0.0
    %1157 = vmatprep.subr.mxu0 0.0
    %1158 = vmatpush1.msra.mxu0 0.0
    %1159 = vmatprep.mubr.f32.mxu0 0.0
    %1160 = vmatmul.mubr.f32.gmra.mrb[0].mxu0 %v1093
    %v1161 = vpop.f32.mrb[0].mxu0
    %v1162 = vadd.f32 0.0, %v1161
    %v1163 = vpop.f32.mrb[0].mxu0
    %1164 = vdwg.mxu0
    %v1166 = vsel %vm403, %v1079, 0
    %1168 = vmatprep.subr.mxu0 0.0
    %1169 = vmatpush1.msra.mxu0 %v352
    %1170 = vmatprep.subr.mxu0 0.0
    %1171 = vmatpush1.msra.mxu0 0.0
    %1172 = vmatprep.subr.mxu0 0.0
    %1173 = vmatpush1.msra.mxu0 0.0
    %1174 = vmatprep.subr.mxu0 0.0
    %1175 = vmatpush1.msra.mxu0 0.0
    %1176 = vmatprep.subr.mxu0 0.0
    %1177 = vmatpush1.msra.mxu0 0.0
    %1178 = vmatprep.subr.mxu0 0.0
    %1179 = vmatpush1.msra.mxu0 0.0
    %1180 = vmatprep.subr.mxu0 0.0
    %1181 = vmatpush1.msra.mxu0 0.0
    %1182 = vmatprep.subr.mxu0 0.0
    %1183 = vmatpush1.msra.mxu0 0.0
    %1184 = vmatprep.subr.mxu0 0.0
    %1185 = vmatpush1.msra.mxu0 0.0
    %1186 = vmatprep.subr.mxu0 0.0
    %1187 = vmatpush1.msra.mxu0 0.0
    %1188 = vmatprep.subr.mxu0 0.0
    %1189 = vmatpush1.msra.mxu0 0.0
    %1190 = vmatprep.subr.mxu0 0.0
    %1191 = vmatpush1.msra.mxu0 0.0
    %1192 = vmatprep.subr.mxu0 0.0
    %1193 = vmatpush1.msra.mxu0 0.0
    %1194 = vmatprep.subr.mxu0 0.0
    %1195 = vmatpush1.msra.mxu0 0.0
    %1196 = vmatprep.subr.mxu0 0.0
    %1197 = vmatpush1.msra.mxu0 0.0
    %1198 = vmatprep.subr.mxu0 0.0
    %1199 = vmatpush1.msra.mxu0 0.0
    %1200 = vmatprep.subr.mxu0 0.0
    %1201 = vmatpush1.msra.mxu0 0.0
    %1202 = vmatprep.subr.mxu0 0.0
    %1203 = vmatpush1.msra.mxu0 0.0
    %1204 = vmatprep.subr.mxu0 0.0
    %1205 = vmatpush1.msra.mxu0 0.0
    %1206 = vmatprep.subr.mxu0 0.0
    %1207 = vmatpush1.msra.mxu0 0.0
    %1208 = vmatprep.subr.mxu0 0.0
    %1209 = vmatpush1.msra.mxu0 0.0
    %1210 = vmatprep.subr.mxu0 0.0
    %1211 = vmatpush1.msra.mxu0 0.0
    %1212 = vmatprep.subr.mxu0 0.0
    %1213 = vmatpush1.msra.mxu0 0.0
    %1214 = vmatprep.subr.mxu0 0.0
    %1215 = vmatpush1.msra.mxu0 0.0
    %1216 = vmatprep.subr.mxu0 0.0
    %1217 = vmatpush1.msra.mxu0 0.0
    %1218 = vmatprep.subr.mxu0 0.0
    %1219 = vmatpush1.msra.mxu0 0.0
    %1220 = vmatprep.subr.mxu0 0.0
    %1221 = vmatpush1.msra.mxu0 0.0
    %1222 = vmatprep.subr.mxu0 0.0
    %1223 = vmatpush1.msra.mxu0 0.0
    %1224 = vmatprep.subr.mxu0 0.0
    %1225 = vmatpush1.msra.mxu0 0.0
    %1226 = vmatprep.subr.mxu0 0.0
    %1227 = vmatpush1.msra.mxu0 0.0
    %1228 = vmatprep.subr.mxu0 0.0
    %1229 = vmatpush1.msra.mxu0 0.0
    %1230 = vmatprep.subr.mxu0 0.0
    %1231 = vmatpush1.msra.mxu0 0.0
    %1232 = vmatprep.mubr.f32.mxu0 0.0
    %1233 = vmatmul.mubr.f32.gmra.mrb[0].mxu0 %v1166
    %v1234 = vpop.f32.mrb[0].mxu0
    %v1235 = vadd.f32 0.0, %v1234
    %v1236 = vpop.f32.mrb[0].mxu0
    %1237 = vdwg.mxu0
    %v1239 = vsel %vm403, %v1081, 0
    %1241 = vmatprep.subr.mxu0 0.0
    %1242 = vmatpush1.msra.mxu0 %v386
    %1243 = vmatprep.subr.mxu0 0.0
    %1244 = vmatpush1.msra.mxu0 0.0
    %1245 = vmatprep.subr.mxu0 0.0
    %1246 = vmatpush1.msra.mxu0 0.0
    %1247 = vmatprep.subr.mxu0 0.0
    %1248 = vmatpush1.msra.mxu0 0.0
    %1249 = vmatprep.subr.mxu0 0.0
    %1250 = vmatpush1.msra.mxu0 0.0
    %1251 = vmatprep.subr.mxu0 0.0
    %1252 = vmatpush1.msra.mxu0 0.0
    %1253 = vmatprep.subr.mxu0 0.0
    %1254 = vmatpush1.msra.mxu0 0.0
    %1255 = vmatprep.subr.mxu0 0.0
    %1256 = vmatpush1.msra.mxu0 0.0
    %1257 = vmatprep.subr.mxu0 0.0
    %1258 = vmatpush1.msra.mxu0 0.0
    %1259 = vmatprep.subr.mxu0 0.0
    %1260 = vmatpush1.msra.mxu0 0.0
    %1261 = vmatprep.subr.mxu0 0.0
    %1262 = vmatpush1.msra.mxu0 0.0
    %1263 = vmatprep.subr.mxu0 0.0
    %1264 = vmatpush1.msra.mxu0 0.0
    %1265 = vmatprep.subr.mxu0 0.0
    %1266 = vmatpush1.msra.mxu0 0.0
    %1267 = vmatprep.subr.mxu0 0.0
    %1268 = vmatpush1.msra.mxu0 0.0
    %1269 = vmatprep.subr.mxu0 0.0
    %1270 = vmatpush1.msra.mxu0 0.0
    %1271 = vmatprep.subr.mxu0 0.0
    %1272 = vmatpush1.msra.mxu0 0.0
    %1273 = vmatprep.subr.mxu0 0.0
    %1274 = vmatpush1.msra.mxu0 0.0
    %1275 = vmatprep.subr.mxu0 0.0
    %1276 = vmatpush1.msra.mxu0 0.0
    %1277 = vmatprep.subr.mxu0 0.0
    %1278 = vmatpush1.msra.mxu0 0.0
    %1279 = vmatprep.subr.mxu0 0.0
    %1280 = vmatpush1.msra.mxu0 0.0
    %1281 = vmatprep.subr.mxu0 0.0
    %1282 = vmatpush1.msra.mxu0 0.0
    %1283 = vmatprep.subr.mxu0 0.0
    %1284 = vmatpush1.msra.mxu0 0.0
    %1285 = vmatprep.subr.mxu0 0.0
    %1286 = vmatpush1.msra.mxu0 0.0
    %1287 = vmatprep.subr.mxu0 0.0
    %1288 = vmatpush1.msra.mxu0 0.0
    %1289 = vmatprep.subr.mxu0 0.0
    %1290 = vmatpush1.msra.mxu0 0.0
    %1291 = vmatprep.subr.mxu0 0.0
    %1292 = vmatpush1.msra.mxu0 0.0
    %1293 = vmatprep.subr.mxu0 0.0
    %1294 = vmatpush1.msra.mxu0 0.0
    %1295 = vmatprep.subr.mxu0 0.0
    %1296 = vmatpush1.msra.mxu0 0.0
    %1297 = vmatprep.subr.mxu0 0.0
    %1298 = vmatpush1.msra.mxu0 0.0
    %1299 = vmatprep.subr.mxu0 0.0
    %1300 = vmatpush1.msra.mxu0 0.0
    %1301 = vmatprep.subr.mxu0 0.0
    %1302 = vmatpush1.msra.mxu0 0.0
    %1303 = vmatprep.subr.mxu0 0.0
    %1304 = vmatpush1.msra.mxu0 0.0
    %1305 = vmatprep.mubr.f32.mxu0 0.0
    %1306 = vmatmul.mubr.f32.gmra.mrb[0].mxu0 %v1239
    %v1307 = vpop.f32.mrb[0].mxu0
    %v1308 = vadd.f32 0.0, %v1307
    %v1309 = vpop.f32.mrb[0].mxu0
    %1310 = vdwg.mxu0
    %v1312 = vsel %vm403, %v1083, 0
    %1314 = vmatprep.subr.mxu0 0.0
    %1315 = vmatpush1.msra.mxu0 %v388
    %1316 = vmatprep.subr.mxu0 0.0
    %1317 = vmatpush1.msra.mxu0 0.0
    %1318 = vmatprep.subr.mxu0 0.0
    %1319 = vmatpush1.msra.mxu0 0.0
    %1320 = vmatprep.subr.mxu0 0.0
    %1321 = vmatpush1.msra.mxu0 0.0
    %1322 = vmatprep.subr.mxu0 0.0
    %1323 = vmatpush1.msra.mxu0 0.0
    %1324 = vmatprep.subr.mxu0 0.0
    %1325 = vmatpush1.msra.mxu0 0.0
    %1326 = vmatprep.subr.mxu0 0.0
    %1327 = vmatpush1.msra.mxu0 0.0
    %1328 = vmatprep.subr.mxu0 0.0
    %1329 = vmatpush1.msra.mxu0 0.0
    %1330 = vmatprep.subr.mxu0 0.0
    %1331 = vmatpush1.msra.mxu0 0.0
    %1332 = vmatprep.subr.mxu0 0.0
    %1333 = vmatpush1.msra.mxu0 0.0
    %1334 = vmatprep.subr.mxu0 0.0
    %1335 = vmatpush1.msra.mxu0 0.0
    %1336 = vmatprep.subr.mxu0 0.0
    %1337 = vmatpush1.msra.mxu0 0.0
    %1338 = vmatprep.subr.mxu0 0.0
    %1339 = vmatpush1.msra.mxu0 0.0
    %1340 = vmatprep.subr.mxu0 0.0
    %1341 = vmatpush1.msra.mxu0 0.0
    %1342 = vmatprep.subr.mxu0 0.0
    %1343 = vmatpush1.msra.mxu0 0.0
    %1344 = vmatprep.subr.mxu0 0.0
    %1345 = vmatpush1.msra.mxu0 0.0
    %1346 = vmatprep.subr.mxu0 0.0
    %1347 = vmatpush1.msra.mxu0 0.0
    %1348 = vmatprep.subr.mxu0 0.0
    %1349 = vmatpush1.msra.mxu0 0.0
    %1350 = vmatprep.subr.mxu0 0.0
    %1351 = vmatpush1.msra.mxu0 0.0
    %1352 = vmatprep.subr.mxu0 0.0
    %1353 = vmatpush1.msra.mxu0 0.0
    %1354 = vmatprep.subr.mxu0 0.0
    %1355 = vmatpush1.msra.mxu0 0.0
    %1356 = vmatprep.subr.mxu0 0.0
    %1357 = vmatpush1.msra.mxu0 0.0
    %1358 = vmatprep.subr.mxu0 0.0
    %1359 = vmatpush1.msra.mxu0 0.0
    %1360 = vmatprep.subr.mxu0 0.0
    %1361 = vmatpush1.msra.mxu0 0.0
    %1362 = vmatprep.subr.mxu0 0.0
    %1363 = vmatpush1.msra.mxu0 0.0
    %1364 = vmatprep.subr.mxu0 0.0
    %1365 = vmatpush1.msra.mxu0 0.0
    %1366 = vmatprep.subr.mxu0 0.0
    %1367 = vmatpush1.msra.mxu0 0.0
    %1368 = vmatprep.subr.mxu0 0.0
    %1369 = vmatpush1.msra.mxu0 0.0
    %1370 = vmatprep.subr.mxu0 0.0
    %1371 = vmatpush1.msra.mxu0 0.0
    %1372 = vmatprep.subr.mxu0 0.0
    %1373 = vmatpush1.msra.mxu0 0.0
    %1374 = vmatprep.subr.mxu0 0.0
    %1375 = vmatpush1.msra.mxu0 0.0
    %1376 = vmatprep.subr.mxu0 0.0
    %1377 = vmatpush1.msra.mxu0 0.0
    %1378 = vmatprep.mubr.f32.mxu0 0.0
    %1379 = vmatmul.mubr.f32.gmra.mrb[0].mxu0 %v1312
    %v1380 = vpop.f32.mrb[0].mxu0
    %v1381 = vadd.f32 0.0, %v1380
    %v1382 = vpop.f32.mrb[0].mxu0
    %1383 = vdwg.mxu0
    %v1385 = vsel %vm403, %v1085, 0
    %1387 = vmatprep.subr.mxu0 0.0
    %1388 = vmatpush1.msra.mxu0 %v392
    %1389 = vmatprep.subr.mxu0 0.0
    %1390 = vmatpush1.msra.mxu0 0.0
    %1391 = vmatprep.subr.mxu0 0.0
    %1392 = vmatpush1.msra.mxu0 0.0
    %1393 = vmatprep.subr.mxu0 0.0
    %1394 = vmatpush1.msra.mxu0 0.0
    %1395 = vmatprep.subr.mxu0 0.0
    %1396 = vmatpush1.msra.mxu0 0.0
    %1397 = vmatprep.subr.mxu0 0.0
    %1398 = vmatpush1.msra.mxu0 0.0
    %1399 = vmatprep.subr.mxu0 0.0
    %1400 = vmatpush1.msra.mxu0 0.0
    %1401 = vmatprep.subr.mxu0 0.0
    %1402 = vmatpush1.msra.mxu0 0.0
    %1403 = vmatprep.subr.mxu0 0.0
    %1404 = vmatpush1.msra.mxu0 0.0
    %1405 = vmatprep.subr.mxu0 0.0
    %1406 = vmatpush1.msra.mxu0 0.0
    %1407 = vmatprep.subr.mxu0 0.0
    %1408 = vmatpush1.msra.mxu0 0.0
    %1409 = vmatprep.subr.mxu0 0.0
    %1410 = vmatpush1.msra.mxu0 0.0
    %1411 = vmatprep.subr.mxu0 0.0
    %1412 = vmatpush1.msra.mxu0 0.0
    %1413 = vmatprep.subr.mxu0 0.0
    %1414 = vmatpush1.msra.mxu0 0.0
    %1415 = vmatprep.subr.mxu0 0.0
    %1416 = vmatpush1.msra.mxu0 0.0
    %1417 = vmatprep.subr.mxu0 0.0
    %1418 = vmatpush1.msra.mxu0 0.0
    %1419 = vmatprep.subr.mxu0 0.0
    %1420 = vmatpush1.msra.mxu0 0.0
    %1421 = vmatprep.subr.mxu0 0.0
    %1422 = vmatpush1.msra.mxu0 0.0
    %1423 = vmatprep.subr.mxu0 0.0
    %1424 = vmatpush1.msra.mxu0 0.0
    %1425 = vmatprep.subr.mxu0 0.0
    %1426 = vmatpush1.msra.mxu0 0.0
    %1427 = vmatprep.subr.mxu0 0.0
    %1428 = vmatpush1.msra.mxu0 0.0
    %1429 = vmatprep.subr.mxu0 0.0
    %1430 = vmatpush1.msra.mxu0 0.0
    %1431 = vmatprep.subr.mxu0 0.0
    %1432 = vmatpush1.msra.mxu0 0.0
    %1433 = vmatprep.subr.mxu0 0.0
    %1434 = vmatpush1.msra.mxu0 0.0
    %1435 = vmatprep.subr.mxu0 0.0
    %1436 = vmatpush1.msra.mxu0 0.0
    %1437 = vmatprep.subr.mxu0 0.0
    %1438 = vmatpush1.msra.mxu0 0.0
    %1439 = vmatprep.subr.mxu0 0.0
    %1440 = vmatpush1.msra.mxu0 0.0
    %1441 = vmatprep.subr.mxu0 0.0
    %1442 = vmatpush1.msra.mxu0 0.0
    %1443 = vmatprep.subr.mxu0 0.0
    %1444 = vmatpush1.msra.mxu0 0.0
    %1445 = vmatprep.subr.mxu0 0.0
    %1446 = vmatpush1.msra.mxu0 0.0
    %1447 = vmatprep.subr.mxu0 0.0
    %1448 = vmatpush1.msra.mxu0 0.0
    %1449 = vmatprep.subr.mxu0 0.0
    %1450 = vmatpush1.msra.mxu0 0.0
    %1451 = vmatprep.mubr.f32.mxu0 0.0
    %1452 = vmatmul.mubr.f32.gmra.mrb[0].mxu0 %v1385
    %v1453 = vpop.f32.mrb[0].mxu0
    %v1454 = vadd.f32 0.0, %v1453
    %v1455 = vpop.f32.mrb[0].mxu0
    %1456 = vdwg.mxu0
    %v1458 = vsel %vm403, %v1087, 0
    %1460 = vmatprep.subr.mxu0 0.0
    %1461 = vmatpush1.msra.mxu0 %v394
    %1462 = vmatprep.subr.mxu0 0.0
    %1463 = vmatpush1.msra.mxu0 0.0
    %1464 = vmatprep.subr.mxu0 0.0
    %1465 = vmatpush1.msra.mxu0 0.0
    %1466 = vmatprep.subr.mxu0 0.0
    %1467 = vmatpush1.msra.mxu0 0.0
    %1468 = vmatprep.subr.mxu0 0.0
    %1469 = vmatpush1.msra.mxu0 0.0
    %1470 = vmatprep.subr.mxu0 0.0
    %1471 = vmatpush1.msra.mxu0 0.0
    %1472 = vmatprep.subr.mxu0 0.0
    %1473 = vmatpush1.msra.mxu0 0.0
    %1474 = vmatprep.subr.mxu0 0.0
    %1475 = vmatpush1.msra.mxu0 0.0
    %1476 = vmatprep.subr.mxu0 0.0
    %1477 = vmatpush1.msra.mxu0 0.0
    %1478 = vmatprep.subr.mxu0 0.0
    %1479 = vmatpush1.msra.mxu0 0.0
    %1480 = vmatprep.subr.mxu0 0.0
    %1481 = vmatpush1.msra.mxu0 0.0
    %1482 = vmatprep.subr.mxu0 0.0
    %1483 = vmatpush1.msra.mxu0 0.0
    %1484 = vmatprep.subr.mxu0 0.0
    %1485 = vmatpush1.msra.mxu0 0.0
    %1486 = vmatprep.subr.mxu0 0.0
    %1487 = vmatpush1.msra.mxu0 0.0
    %1488 = vmatprep.subr.mxu0 0.0
    %1489 = vmatpush1.msra.mxu0 0.0
    %1490 = vmatprep.subr.mxu0 0.0
    %1491 = vmatpush1.msra.mxu0 0.0
    %1492 = vmatprep.subr.mxu0 0.0
    %1493 = vmatpush1.msra.mxu0 0.0
    %1494 = vmatprep.subr.mxu0 0.0
    %1495 = vmatpush1.msra.mxu0 0.0
    %1496 = vmatprep.subr.mxu0 0.0
    %1497 = vmatpush1.msra.mxu0 0.0
    %1498 = vmatprep.subr.mxu0 0.0
    %1499 = vmatpush1.msra.mxu0 0.0
    %1500 = vmatprep.subr.mxu0 0.0
    %1501 = vmatpush1.msra.mxu0 0.0
    %1502 = vmatprep.subr.mxu0 0.0
    %1503 = vmatpush1.msra.mxu0 0.0
    %1504 = vmatprep.subr.mxu0 0.0
    %1505 = vmatpush1.msra.mxu0 0.0
    %1506 = vmatprep.subr.mxu0 0.0
    %1507 = vmatpush1.msra.mxu0 0.0
    %1508 = vmatprep.subr.mxu0 0.0
    %1509 = vmatpush1.msra.mxu0 0.0
    %1510 = vmatprep.subr.mxu0 0.0
    %1511 = vmatpush1.msra.mxu0 0.0
    %1512 = vmatprep.subr.mxu0 0.0
    %1513 = vmatpush1.msra.mxu0 0.0
    %1514 = vmatprep.subr.mxu0 0.0
    %1515 = vmatpush1.msra.mxu0 0.0
    %1516 = vmatprep.subr.mxu0 0.0
    %1517 = vmatpush1.msra.mxu0 0.0
    %1518 = vmatprep.subr.mxu0 0.0
    %1519 = vmatpush1.msra.mxu0 0.0
    %1520 = vmatprep.subr.mxu0 0.0
    %1521 = vmatpush1.msra.mxu0 0.0
    %1522 = vmatprep.subr.mxu0 0.0
    %1523 = vmatpush1.msra.mxu0 0.0
    %1524 = vmatprep.mubr.f32.mxu0 0.0
    %1525 = vmatmul.mubr.f32.gmra.mrb[0].mxu0 %v1458
    %v1526 = vpop.f32.mrb[0].mxu0
    %v1527 = vadd.f32 0.0, %v1526
    %v1528 = vpop.f32.mrb[0].mxu0
    %1529 = vdwg.mxu0
    %v1531 = vsel %vm403, %v1089, 0
    %1533 = vmatprep.subr.mxu0 0.0
    %1534 = vmatpush1.msra.mxu0 %v398
    %1535 = vmatprep.subr.mxu0 0.0
    %1536 = vmatpush1.msra.mxu0 0.0
    %1537 = vmatprep.subr.mxu0 0.0
    %1538 = vmatpush1.msra.mxu0 0.0
    %1539 = vmatprep.subr.mxu0 0.0
    %1540 = vmatpush1.msra.mxu0 0.0
    %1541 = vmatprep.subr.mxu0 0.0
    %1542 = vmatpush1.msra.mxu0 0.0
    %1543 = vmatprep.subr.mxu0 0.0
    %1544 = vmatpush1.msra.mxu0 0.0
    %1545 = vmatprep.subr.mxu0 0.0
    %1546 = vmatpush1.msra.mxu0 0.0
    %1547 = vmatprep.subr.mxu0 0.0
    %1548 = vmatpush1.msra.mxu0 0.0
    %1549 = vmatprep.subr.mxu0 0.0
    %1550 = vmatpush1.msra.mxu0 0.0
    %1551 = vmatprep.subr.mxu0 0.0
    %1552 = vmatpush1.msra.mxu0 0.0
    %1553 = vmatprep.subr.mxu0 0.0
    %1554 = vmatpush1.msra.mxu0 0.0
    %1555 = vmatprep.subr.mxu0 0.0
    %1556 = vmatpush1.msra.mxu0 0.0
    %1557 = vmatprep.subr.mxu0 0.0
    %1558 = vmatpush1.msra.mxu0 0.0
    %1559 = vmatprep.subr.mxu0 0.0
    %1560 = vmatpush1.msra.mxu0 0.0
    %1561 = vmatprep.subr.mxu0 0.0
    %1562 = vmatpush1.msra.mxu0 0.0
    %1563 = vmatprep.subr.mxu0 0.0
    %1564 = vmatpush1.msra.mxu0 0.0
    %1565 = vmatprep.subr.mxu0 0.0
    %1566 = vmatpush1.msra.mxu0 0.0
    %1567 = vmatprep.subr.mxu0 0.0
    %1568 = vmatpush1.msra.mxu0 0.0
    %1569 = vmatprep.subr.mxu0 0.0
    %1570 = vmatpush1.msra.mxu0 0.0
    %1571 = vmatprep.subr.mxu0 0.0
    %1572 = vmatpush1.msra.mxu0 0.0
    %1573 = vmatprep.subr.mxu0 0.0
    %1574 = vmatpush1.msra.mxu0 0.0
    %1575 = vmatprep.subr.mxu0 0.0
    %1576 = vmatpush1.msra.mxu0 0.0
    %1577 = vmatprep.subr.mxu0 0.0
    %1578 = vmatpush1.msra.mxu0 0.0
    %1579 = vmatprep.subr.mxu0 0.0
    %1580 = vmatpush1.msra.mxu0 0.0
    %1581 = vmatprep.subr.mxu0 0.0
    %1582 = vmatpush1.msra.mxu0 0.0
    %1583 = vmatprep.subr.mxu0 0.0
    %1584 = vmatpush1.msra.mxu0 0.0
    %1585 = vmatprep.subr.mxu0 0.0
    %1586 = vmatpush1.msra.mxu0 0.0
    %1587 = vmatprep.subr.mxu0 0.0
    %1588 = vmatpush1.msra.mxu0 0.0
    %1589 = vmatprep.subr.mxu0 0.0
    %1590 = vmatpush1.msra.mxu0 0.0
    %1591 = vmatprep.subr.mxu0 0.0
    %1592 = vmatpush1.msra.mxu0 0.0
    %1593 = vmatprep.subr.mxu0 0.0
    %1594 = vmatpush1.msra.mxu0 0.0
    %1595 = vmatprep.subr.mxu0 0.0
    %1596 = vmatpush1.msra.mxu0 0.0
    %1597 = vmatprep.mubr.f32.mxu0 0.0
    %1598 = vmatmul.mubr.f32.gmra.mrb[0].mxu0 %v1531
    %v1599 = vpop.f32.mrb[0].mxu0
    %v1600 = vadd.f32 0.0, %v1599
    %v1601 = vpop.f32.mrb[0].mxu0
    %1602 = vdwg.mxu0
    %v1604 = vsel %vm403, %v1091, 0
    %1606 = vmatprep.subr.mxu0 0.0
    %1607 = vmatpush1.msra.mxu0 %v400
    %1608 = vmatprep.subr.mxu0 0.0
    %1609 = vmatpush1.msra.mxu0 0.0
    %1610 = vmatprep.subr.mxu0 0.0
    %1611 = vmatpush1.msra.mxu0 0.0
    %1612 = vmatprep.subr.mxu0 0.0
    %1613 = vmatpush1.msra.mxu0 0.0
    %1614 = vmatprep.subr.mxu0 0.0
    %1615 = vmatpush1.msra.mxu0 0.0
    %1616 = vmatprep.subr.mxu0 0.0
    %1617 = vmatpush1.msra.mxu0 0.0
    %1618 = vmatprep.subr.mxu0 0.0
    %1619 = vmatpush1.msra.mxu0 0.0
    %1620 = vmatprep.subr.mxu0 0.0
    %1621 = vmatpush1.msra.mxu0 0.0
    %1622 = vmatprep.subr.mxu0 0.0
    %1623 = vmatpush1.msra.mxu0 0.0
    %1624 = vmatprep.subr.mxu0 0.0
    %1625 = vmatpush1.msra.mxu0 0.0
    %1626 = vmatprep.subr.mxu0 0.0
    %1627 = vmatpush1.msra.mxu0 0.0
    %1628 = vmatprep.subr.mxu0 0.0
    %1629 = vmatpush1.msra.mxu0 0.0
    %1630 = vmatprep.subr.mxu0 0.0
    %1631 = vmatpush1.msra.mxu0 0.0
    %1632 = vmatprep.subr.mxu0 0.0
    %1633 = vmatpush1.msra.mxu0 0.0
    %1634 = vmatprep.subr.mxu0 0.0
    %1635 = vmatpush1.msra.mxu0 0.0
    %1636 = vmatprep.subr.mxu0 0.0
    %1637 = vmatpush1.msra.mxu0 0.0
    %1638 = vmatprep.subr.mxu0 0.0
    %1639 = vmatpush1.msra.mxu0 0.0
    %1640 = vmatprep.subr.mxu0 0.0
    %1641 = vmatpush1.msra.mxu0 0.0
    %1642 = vmatprep.subr.mxu0 0.0
    %1643 = vmatpush1.msra.mxu0 0.0
    %1644 = vmatprep.subr.mxu0 0.0
    %1645 = vmatpush1.msra.mxu0 0.0
    %1646 = vmatprep.subr.mxu0 0.0
    %1647 = vmatpush1.msra.mxu0 0.0
    %1648 = vmatprep.subr.mxu0 0.0
    %1649 = vmatpush1.msra.mxu0 0.0
    %1650 = vmatprep.subr.mxu0 0.0
    %1651 = vmatpush1.msra.mxu0 0.0
    %1652 = vmatprep.subr.mxu0 0.0
    %1653 = vmatpush1.msra.mxu0 0.0
    %1654 = vmatprep.subr.mxu0 0.0
    %1655 = vmatpush1.msra.mxu0 0.0
    %1656 = vmatprep.subr.mxu0 0.0
    %1657 = vmatpush1.msra.mxu0 0.0
    %1658 = vmatprep.subr.mxu0 0.0
    %1659 = vmatpush1.msra.mxu0 0.0
    %1660 = vmatprep.subr.mxu0 0.0
    %1661 = vmatpush1.msra.mxu0 0.0
    %1662 = vmatprep.subr.mxu0 0.0
    %1663 = vmatpush1.msra.mxu0 0.0
    %1664 = vmatprep.subr.mxu0 0.0
    %1665 = vmatpush1.msra.mxu0 0.0
    %1666 = vmatprep.subr.mxu0 0.0
    %1667 = vmatpush1.msra.mxu0 0.0
    %1668 = vmatprep.subr.mxu0 0.0
    %1669 = vmatpush1.msra.mxu0 0.0
    %1670 = vmatprep.mubr.f32.mxu0 0.0
    %1671 = vmatmul.mubr.f32.gmra.mrb[0].mxu0 %v1604
    %v1672 = vpop.f32.mrb[0].mxu0
    %v1673 = vadd.f32 0.0, %v1672
    %v1674 = vpop.f32.mrb[0].mxu0
    %1675 = vdwg.mxu0
    %1678 = vrot.lane.b32.xlu0 %v1308, 8
    %v1679 = vpop.permute.xlu0 %1678
    %1680 = vrot.lane.b32.xlu0 %v1381, 8
    %v1681 = vpop.permute.xlu0 %1680
    %1686 = vrot.lane.b32.xlu0 %v1454, 16
    %v1687 = vpop.permute.xlu0 %1686
    %1688 = vrot.lane.b32.xlu0 %v1527, 16
    %v1689 = vpop.permute.xlu0 %1688
    %1694 = vrot.lane.b32.xlu0 %v1600, 24
    %v1695 = vpop.permute.xlu0 %1694
    %1696 = vrot.lane.b32.xlu0 %v1673, 24
    %v1697 = vpop.permute.xlu0 %1696
    %v1700 = vsel %vm403, %v1162, %v1679
    %v1701 = vsel %vm403, %v1235, %v1681
    %vm1702 = vcmask 130048
    %v1703 = vsel %vm1702, %v1700, %v1687
    %v1704 = vsel %vm1702, %v1701, %v1689
    %vm1705 = vcmask 195584
    %v1706 = vsel %vm1705, %v1703, %v1695
    %v1707 = vsel %vm1705, %v1704, %v1697
    %s1708 = scalar_lea.vmem %s2, 96
    %v1709 = vld [vmem:[%s1708] sm:$0xff]
    %v1710 = vld [vmem:[%s1708 + $0x8] sm:$0xff]
    %v1711 = vld [vmem:[%s1708 + $0x10] sm:$0xff]
    %v1712 = vld [vmem:[%s1708 + $0x18] sm:$0xff]
    %v1713 = vlaneseq
    %v1714 = vshrl.u32 %v1713, 7
    %v1715 = vsub.s32 3, %v1714
    %v1716 = vrot.slane %v56, %v1715
    %v1718 = vsel %vm58, %v1706, 0
    %v1721 = vsel %vm58, %v1707, 0
    %1723 = vmatprep.subr.mxu0 0.0
    %1724 = vmatpush1.msra.mxu0 %v1709
    %1725 = vmatprep.subr.mxu0 0.0
    %1726 = vmatpush1.msra.mxu0 %v1710
    %1727 = vmatprep.subr.mxu0 0.0
    %1728 = vmatpush1.msra.mxu0 %v1711
    %1729 = vmatprep.subr.mxu0 0.0
    %1730 = vmatpush1.msra.mxu0 %v1712
    %1731 = vmatprep.subr.mxu0 0.0
    %1732 = vmatpush1.msra.mxu0 0.0
    %1733 = vmatprep.subr.mxu0 0.0
    %1734 = vmatpush1.msra.mxu0 0.0
    %1735 = vmatprep.subr.mxu0 0.0
    %1736 = vmatpush1.msra.mxu0 0.0
    %1737 = vmatprep.subr.mxu0 0.0
    %1738 = vmatpush1.msra.mxu0 0.0
    %1739 = vmatprep.subr.mxu0 0.0
    %1740 = vmatpush1.msra.mxu0 0.0
    %1741 = vmatprep.subr.mxu0 0.0
    %1742 = vmatpush1.msra.mxu0 0.0
    %1743 = vmatprep.subr.mxu0 0.0
    %1744 = vmatpush1.msra.mxu0 0.0
    %1745 = vmatprep.subr.mxu0 0.0
    %1746 = vmatpush1.msra.mxu0 0.0
    %1747 = vmatprep.subr.mxu0 0.0
    %1748 = vmatpush1.msra.mxu0 0.0
    %1749 = vmatprep.subr.mxu0 0.0
    %1750 = vmatpush1.msra.mxu0 0.0
    %1751 = vmatprep.subr.mxu0 0.0
    %1752 = vmatpush1.msra.mxu0 0.0
    %1753 = vmatprep.subr.mxu0 0.0
    %1754 = vmatpush1.msra.mxu0 0.0
    %1755 = vmatprep.subr.mxu0 0.0
    %1756 = vmatpush1.msra.mxu0 0.0
    %1757 = vmatprep.subr.mxu0 0.0
    %1758 = vmatpush1.msra.mxu0 0.0
    %1759 = vmatprep.subr.mxu0 0.0
    %1760 = vmatpush1.msra.mxu0 0.0
    %1761 = vmatprep.subr.mxu0 0.0
    %1762 = vmatpush1.msra.mxu0 0.0
    %1763 = vmatprep.subr.mxu0 0.0
    %1764 = vmatpush1.msra.mxu0 0.0
    %1765 = vmatprep.subr.mxu0 0.0
    %1766 = vmatpush1.msra.mxu0 0.0
    %1767 = vmatprep.subr.mxu0 0.0
    %1768 = vmatpush1.msra.mxu0 0.0
    %1769 = vmatprep.subr.mxu0 0.0
    %1770 = vmatpush1.msra.mxu0 0.0
    %1771 = vmatprep.subr.mxu0 0.0
    %1772 = vmatpush1.msra.mxu0 0.0
    %1773 = vmatprep.subr.mxu0 0.0
    %1774 = vmatpush1.msra.mxu0 0.0
    %1775 = vmatprep.subr.mxu0 0.0
    %1776 = vmatpush1.msra.mxu0 0.0
    %1777 = vmatprep.subr.mxu0 0.0
    %1778 = vmatpush1.msra.mxu0 0.0
    %1779 = vmatprep.subr.mxu0 0.0
    %1780 = vmatpush1.msra.mxu0 0.0
    %1781 = vmatprep.subr.mxu0 0.0
    %1782 = vmatpush1.msra.mxu0 0.0
    %1783 = vmatprep.subr.mxu0 0.0
    %1784 = vmatpush1.msra.mxu0 0.0
    %1785 = vmatprep.subr.mxu0 0.0
    %1786 = vmatpush1.msra.mxu0 0.0
    %1787 = vmatprep.mubr.f32.mxu0 0.0
    %1788 = vmatmul.mubr.f32.gmra.mrb[0].mxu0 %v1718
    %v1789 = vpop.f32.mrb[0].mxu0
    %v1790 = vadd.f32 %v1716, %v1789
    %v1791 = vpop.f32.mrb[0].mxu0
    %1792 = vmatprep.mubr.f32.mxu0 0.0
    %1793 = vmatmul.mubr.f32.gmra.mrb[0].mxu0 %v1721
    %v1794 = vpop.f32.mrb[0].mxu0
    %v1795 = vadd.f32 %v1716, %v1794
    %v1796 = vpop.f32.mrb[0].mxu0
    %1797 = vdwg.mxu0
    %v1798 = vadd.f32 %v52, %v1790
    %v1799 = vadd.f32 %v53, %v1795
    %v1800 = vsel %vm58, %v1798, 0.0
    %1801 = vadd.xlane.f32.xlu0 %v1800
    %v1802 = vpop.xlane.xlu0 %1801
    %v1803 = vsel %vm58, %v1799, 0.0
    %1804 = vadd.xlane.f32.xlu0 %v1803
    %v1805 = vpop.xlane.xlu0 %1804
    %v1806 = vmul.f32 %v1802, %v65
    %v1807 = vmul.f32 %v1805, %v65
    %v1808 = vsub.f32 %v1798, %v1806
    %v1809 = vsub.f32 %v1799, %v1807
    %v1810 = vmul.f32 %v1808, %v1808
    %v1811 = vmul.f32 %v1809, %v1809
    %v1812 = vsel %vm58, %v1810, 0.0
    %1813 = vadd.xlane.f32.xlu0 %v1812
    %v1814 = vpop.xlane.xlu0 %1813
    %v1815 = vsel %vm58, %v1811, 0.0
    %1816 = vadd.xlane.f32.xlu0 %v1815
    %v1817 = vpop.xlane.xlu0 %1816
    %v1818 = vmul.f32 %v1814, %v65
    %v1819 = vmul.f32 %v1817, %v65
    %v1820 = vlaneseq
    %v1821 = vshrl.u32 %v1820, 7
    %v1822 = vsub.s32 0, %v1821
    %v1823 = vrot.slane %v57, %v1822
    %v1824 = vmul.f32 %v1823, %v1808
    %v1825 = vmul.f32 %v1823, %v1809
    %v1826 = vadd.f32 %v1818, 1e-05
    %v1827 = vadd.f32 %v1819, 1e-05
    %v1828 = vrsqrt.pop %v1826
    %v1829 = vrsqrt.pop %v1827
    %v1830 = vmul.f32 %v1824, %v1828
    %v1831 = vmul.f32 %v1825, %v1829
    %v1832 = vlaneseq
    %v1833 = vshrl.u32 %v1832, 7
    %v1834 = vsub.s32 1, %v1833
    %v1835 = vrot.slane %v57, %v1834
    %v1836 = vadd.f32 %v1830, %v1835
    %v1837 = vadd.f32 %v1831, %v1835
    %v1838 = vld [vmem:[#allocation5] sm:$0xff]
    %v1839 = vld [vmem:[#allocation5 + $0x8] sm:$0xff]
    %v1840 = vld [vmem:[#allocation5 + $0x10] sm:$0xff]
    %v1841 = vld [vmem:[#allocation5 + $0x18] sm:$0xff]
    %v1842 = vlaneseq
    %v1843 = vshrl.u32 %v1842, 7
    %v1844 = vsub.s32 4, %v1843
    %v1845 = vrot.slane %v56, %v1844
    %v1847 = vsel %vm58, %v1836, 0
    %v1850 = vsel %vm58, %v1837, 0
    %1852 = vmatprep.subr.mxu0 0.0
    %1853 = vmatpush1.msra.mxu0 %v1838
    %1854 = vmatprep.subr.mxu0 0.0
    %1855 = vmatpush1.msra.mxu0 %v1839
    %1856 = vmatprep.subr.mxu0 0.0
    %1857 = vmatpush1.msra.mxu0 %v1840
    %1858 = vmatprep.subr.mxu0 0.0
    %1859 = vmatpush1.msra.mxu0 %v1841
    %1860 = vmatprep.subr.mxu0 0.0
    %1861 = vmatpush1.msra.mxu0 0.0
    %1862 = vmatprep.subr.mxu0 0.0
    %1863 = vmatpush1.msra.mxu0 0.0
    %1864 = vmatprep.subr.mxu0 0.0
    %1865 = vmatpush1.msra.mxu0 0.0
    %1866 = vmatprep.subr.mxu0 0.0
    %1867 = vmatpush1.msra.mxu0 0.0
    %1868 = vmatprep.subr.mxu0 0.0
    %1869 = vmatpush1.msra.mxu0 0.0
    %1870 = vmatprep.subr.mxu0 0.0
    %1871 = vmatpush1.msra.mxu0 0.0
    %1872 = vmatprep.subr.mxu0 0.0
    %1873 = vmatpush1.msra.mxu0 0.0
    %1874 = vmatprep.subr.mxu0 0.0
    %1875 = vmatpush1.msra.mxu0 0.0
    %1876 = vmatprep.subr.mxu0 0.0
    %1877 = vmatpush1.msra.mxu0 0.0
    %1878 = vmatprep.subr.mxu0 0.0
    %1879 = vmatpush1.msra.mxu0 0.0
    %1880 = vmatprep.subr.mxu0 0.0
    %1881 = vmatpush1.msra.mxu0 0.0
    %1882 = vmatprep.subr.mxu0 0.0
    %1883 = vmatpush1.msra.mxu0 0.0
    %1884 = vmatprep.subr.mxu0 0.0
    %1885 = vmatpush1.msra.mxu0 0.0
    %1886 = vmatprep.subr.mxu0 0.0
    %1887 = vmatpush1.msra.mxu0 0.0
    %1888 = vmatprep.subr.mxu0 0.0
    %1889 = vmatpush1.msra.mxu0 0.0
    %1890 = vmatprep.subr.mxu0 0.0
    %1891 = vmatpush1.msra.mxu0 0.0
    %1892 = vmatprep.subr.mxu0 0.0
    %1893 = vmatpush1.msra.mxu0 0.0
    %1894 = vmatprep.subr.mxu0 0.0
    %1895 = vmatpush1.msra.mxu0 0.0
    %1896 = vmatprep.subr.mxu0 0.0
    %1897 = vmatpush1.msra.mxu0 0.0
    %1898 = vmatprep.subr.mxu0 0.0
    %1899 = vmatpush1.msra.mxu0 0.0
    %1900 = vmatprep.subr.mxu0 0.0
    %1901 = vmatpush1.msra.mxu0 0.0
    %1902 = vmatprep.subr.mxu0 0.0
    %1903 = vmatpush1.msra.mxu0 0.0
    %1904 = vmatprep.subr.mxu0 0.0
    %1905 = vmatpush1.msra.mxu0 0.0
    %1906 = vmatprep.subr.mxu0 0.0
    %1907 = vmatpush1.msra.mxu0 0.0
    %1908 = vmatprep.subr.mxu0 0.0
    %1909 = vmatpush1.msra.mxu0 0.0
    %1910 = vmatprep.subr.mxu0 0.0
    %1911 = vmatpush1.msra.mxu0 0.0
    %1912 = vmatprep.subr.mxu0 0.0
    %1913 = vmatpush1.msra.mxu0 0.0
    %1914 = vmatprep.subr.mxu0 0.0
    %1915 = vmatpush1.msra.mxu0 0.0
    %1916 = vmatprep.mubr.f32.mxu0 0.0
    %1917 = vmatmul.mubr.f32.gmra.mrb[0].mxu0 %v1847
    %v1918 = vpop.f32.mrb[0].mxu0
    %v1919 = vadd.f32 %v1845, %v1918
    %v1920 = vpop.f32.mrb[0].mxu0
    %1921 = vmatprep.mubr.f32.mxu0 0.0
    %1922 = vmatmul.mubr.f32.gmra.mrb[0].mxu0 %v1850
    %v1923 = vpop.f32.mrb[0].mxu0
    %v1924 = vadd.f32 %v1845, %v1923
    %v1925 = vpop.f32.mrb[0].mxu0
    %1926 = vdwg.mxu0
    %v1927 = vmax.f32 %v1919, 0.0
    %v1928 = vmax.f32 %v1924, 0.0
    %v1929 = vld [vmem:[%s4] sm:$0xff]
    %v1930 = vld [vmem:[%s4 + $0x8] sm:$0xff]
    %v1931 = vld [vmem:[%s4 + $0x10] sm:$0xff]
    %v1932 = vld [vmem:[%s4 + $0x18] sm:$0xff]
    %v1933 = vld [vmem:[%s4 + $0x20] sm:$0xff]
    %v1934 = vld [vmem:[%s4 + $0x28] sm:$0xff]
    %v1935 = vld [vmem:[%s4 + $0x30] sm:$0xff]
    %v1936 = vld [vmem:[%s4 + $0x38] sm:$0xff]
    %v1937 = vlaneseq
    %v1938 = vshrl.u32 %v1937, 7
    %v1939 = vsub.s32 5, %v1938
    %v1940 = vrot.slane %v56, %v1939
    %vm1941 = vcmask 523264
    %v1943 = vsel %vm1941, %v1927, 0
    %v1946 = vsel %vm1941, %v1928, 0
    %1948 = vmatprep.subr.mxu0 0.0
    %1949 = vmatpush1.msra.mxu0 %v1929
    %1950 = vmatprep.subr.mxu0 0.0
    %1951 = vmatpush1.msra.mxu0 %v1930
    %1952 = vmatprep.subr.mxu0 0.0
    %1953 = vmatpush1.msra.mxu0 %v1931
    %1954 = vmatprep.subr.mxu0 0.0
    %1955 = vmatpush1.msra.mxu0 %v1932
    %1956 = vmatprep.subr.mxu0 0.0
    %1957 = vmatpush1.msra.mxu0 %v1933
    %1958 = vmatprep.subr.mxu0 0.0
    %1959 = vmatpush1.msra.mxu0 %v1934
    %1960 = vmatprep.subr.mxu0 0.0
    %1961 = vmatpush1.msra.mxu0 %v1935
    %1962 = vmatprep.subr.mxu0 0.0
    %1963 = vmatpush1.msra.mxu0 %v1936
    %1964 = vmatprep.subr.mxu0 0.0
    %1965 = vmatpush1.msra.mxu0 0.0
    %1966 = vmatprep.subr.mxu0 0.0
    %1967 = vmatpush1.msra.mxu0 0.0
    %1968 = vmatprep.subr.mxu0 0.0
    %1969 = vmatpush1.msra.mxu0 0.0
    %1970 = vmatprep.subr.mxu0 0.0
    %1971 = vmatpush1.msra.mxu0 0.0
    %1972 = vmatprep.subr.mxu0 0.0
    %1973 = vmatpush1.msra.mxu0 0.0
    %1974 = vmatprep.subr.mxu0 0.0
    %1975 = vmatpush1.msra.mxu0 0.0
    %1976 = vmatprep.subr.mxu0 0.0
    %1977 = vmatpush1.msra.mxu0 0.0
    %1978 = vmatprep.subr.mxu0 0.0
    %1979 = vmatpush1.msra.mxu0 0.0
    %1980 = vmatprep.subr.mxu0 0.0
    %1981 = vmatpush1.msra.mxu0 0.0
    %1982 = vmatprep.subr.mxu0 0.0
    %1983 = vmatpush1.msra.mxu0 0.0
    %1984 = vmatprep.subr.mxu0 0.0
    %1985 = vmatpush1.msra.mxu0 0.0
    %1986 = vmatprep.subr.mxu0 0.0
    %1987 = vmatpush1.msra.mxu0 0.0
    %1988 = vmatprep.subr.mxu0 0.0
    %1989 = vmatpush1.msra.mxu0 0.0
    %1990 = vmatprep.subr.mxu0 0.0
    %1991 = vmatpush1.msra.mxu0 0.0
    %1992 = vmatprep.subr.mxu0 0.0
    %1993 = vmatpush1.msra.mxu0 0.0
    %1994 = vmatprep.subr.mxu0 0.0
    %1995 = vmatpush1.msra.mxu0 0.0
    %1996 = vmatprep.subr.mxu0 0.0
    %1997 = vmatpush1.msra.mxu0 0.0
    %1998 = vmatprep.subr.mxu0 0.0
    %1999 = vmatpush1.msra.mxu0 0.0
    %2000 = vmatprep.subr.mxu0 0.0
    %2001 = vmatpush1.msra.mxu0 0.0
    %2002 = vmatprep.subr.mxu0 0.0
    %2003 = vmatpush1.msra.mxu0 0.0
    %2004 = vmatprep.subr.mxu0 0.0
    %2005 = vmatpush1.msra.mxu0 0.0
    %2006 = vmatprep.subr.mxu0 0.0
    %2007 = vmatpush1.msra.mxu0 0.0
    %2008 = vmatprep.subr.mxu0 0.0
    %2009 = vmatpush1.msra.mxu0 0.0
    %2010 = vmatprep.subr.mxu0 0.0
    %2011 = vmatpush1.msra.mxu0 0.0
    %2012 = vmatprep.mubr.f32.mxu0 0.0
    %2013 = vmatmul.mubr.f32.gmra.mrb[0].mxu0 %v1943
    %v2014 = vpop.f32.mrb[0].mxu0
    %v2015 = vadd.f32 %v1940, %v2014
    %v2016 = vpop.f32.mrb[0].mxu0
    %2017 = vmatprep.mubr.f32.mxu0 0.0
    %2018 = vmatmul.mubr.f32.gmra.mrb[0].mxu0 %v1946
    %v2019 = vpop.f32.mrb[0].mxu0
    %v2020 = vadd.f32 %v1940, %v2019
    %v2021 = vpop.f32.mrb[0].mxu0
    %2022 = vdwg.mxu0
    %v2023 = vadd.f32 %v1798, %v2015
    %v2024 = vadd.f32 %v1799, %v2020
    %s2025 = scalar_lea.vmem %s5, 16
    %v2026 = vld [vmem:[%s2025] sm:$0xff]
    %v2027 = vld [vmem:[%s2025 + $0x8] sm:$0x3]
    %v2028 = vsel %vm58, %v2023, 0.0
    %2029 = vadd.xlane.f32.xlu0 %v2028
    %v2030 = vpop.xlane.xlu0 %2029
    %v2031 = vsel %vm58, %v2024, 0.0
    %2032 = vadd.xlane.f32.xlu0 %v2031
    %v2033 = vpop.xlane.xlu0 %2032
    %v2034 = vmul.f32 %v2030, %v65
    %v2035 = vmul.f32 %v2033, %v65
    %v2036 = vsub.f32 %v2023, %v2034
    %v2037 = vsub.f32 %v2024, %v2035
    %v2038 = vmul.f32 %v2036, %v2036
    %v2039 = vmul.f32 %v2037, %v2037
    %v2040 = vsel %vm58, %v2038, 0.0
    %2041 = vadd.xlane.f32.xlu0 %v2040
    %v2042 = vpop.xlane.xlu0 %2041
    %v2043 = vsel %vm58, %v2039, 0.0
    %2044 = vadd.xlane.f32.xlu0 %v2043
    %v2045 = vpop.xlane.xlu0 %2044
    %v2046 = vmul.f32 %v2042, %v65
    %v2047 = vmul.f32 %v2045, %v65
    %v2048 = vlaneseq
    %v2049 = vshrl.u32 %v2048, 7
    %v2050 = vsub.s32 6, %v2049
    %v2051 = vrot.slane %v2026, %v2050
    %v2052 = vmul.f32 %v2051, %v2036
    %v2053 = vmul.f32 %v2051, %v2037
    %v2054 = vadd.f32 %v2046, 1e-05
    %v2055 = vadd.f32 %v2047, 1e-05
    %v2056 = vrsqrt.pop %v2054
    %v2057 = vrsqrt.pop %v2055
    %v2058 = vmul.f32 %v2052, %v2056
    %v2059 = vmul.f32 %v2053, %v2057
    %v2060 = vlaneseq
    %v2061 = vshrl.u32 %v2060, 7
    %v2062 = vsub.s32 7, %v2061
    %v2063 = vrot.slane %v2026, %v2062
    %v2064 = vadd.f32 %v2058, %v2063
    %v2065 = vadd.f32 %v2059, %v2063
    %s2066 = scalar_lea.vmem %s2, 128
    %v2067 = vld [vmem:[%s2066] sm:$0xff]
    %v2068 = vld [vmem:[%s2066 + $0x8] sm:$0xff]
    %v2069 = vld [vmem:[%s2066 + $0x10] sm:$0xff]
    %v2070 = vld [vmem:[%s2066 + $0x18] sm:$0xff]
    %v2071 = vlaneseq
    %v2072 = vshrl.u32 %v2071, 7
    %v2073 = vsub.s32 0, %v2072
    %v2074 = vrot.slane %v2026, %v2073
    %v2076 = vsel %vm58, %v2064, 0
    %v2079 = vsel %vm58, %v2065, 0
    %2081 = vmatprep.subr.mxu0 0.0
    %2082 = vmatpush1.msra.mxu0 %v2067
    %2083 = vmatprep.subr.mxu0 0.0
    %2084 = vmatpush1.msra.mxu0 %v2068
    %2085 = vmatprep.subr.mxu0 0.0
    %2086 = vmatpush1.msra.mxu0 %v2069
    %2087 = vmatprep.subr.mxu0 0.0
    %2088 = vmatpush1.msra.mxu0 %v2070
    %2089 = vmatprep.subr.mxu0 0.0
    %2090 = vmatpush1.msra.mxu0 0.0
    %2091 = vmatprep.subr.mxu0 0.0
    %2092 = vmatpush1.msra.mxu0 0.0
    %2093 = vmatprep.subr.mxu0 0.0
    %2094 = vmatpush1.msra.mxu0 0.0
    %2095 = vmatprep.subr.mxu0 0.0
    %2096 = vmatpush1.msra.mxu0 0.0
    %2097 = vmatprep.subr.mxu0 0.0
    %2098 = vmatpush1.msra.mxu0 0.0
    %2099 = vmatprep.subr.mxu0 0.0
    %2100 = vmatpush1.msra.mxu0 0.0
    %2101 = vmatprep.subr.mxu0 0.0
    %2102 = vmatpush1.msra.mxu0 0.0
    %2103 = vmatprep.subr.mxu0 0.0
    %2104 = vmatpush1.msra.mxu0 0.0
    %2105 = vmatprep.subr.mxu0 0.0
    %2106 = vmatpush1.msra.mxu0 0.0
    %2107 = vmatprep.subr.mxu0 0.0
    %2108 = vmatpush1.msra.mxu0 0.0
    %2109 = vmatprep.subr.mxu0 0.0
    %2110 = vmatpush1.msra.mxu0 0.0
    %2111 = vmatprep.subr.mxu0 0.0
    %2112 = vmatpush1.msra.mxu0 0.0
    %2113 = vmatprep.subr.mxu0 0.0
    %2114 = vmatpush1.msra.mxu0 0.0
    %2115 = vmatprep.subr.mxu0 0.0
    %2116 = vmatpush1.msra.mxu0 0.0
    %2117 = vmatprep.subr.mxu0 0.0
    %2118 = vmatpush1.msra.mxu0 0.0
    %2119 = vmatprep.subr.mxu0 0.0
    %2120 = vmatpush1.msra.mxu0 0.0
    %2121 = vmatprep.subr.mxu0 0.0
    %2122 = vmatpush1.msra.mxu0 0.0
    %2123 = vmatprep.subr.mxu0 0.0
    %2124 = vmatpush1.msra.mxu0 0.0
    %2125 = vmatprep.subr.mxu0 0.0
    %2126 = vmatpush1.msra.mxu0 0.0
    %2127 = vmatprep.subr.mxu0 0.0
    %2128 = vmatpush1.msra.mxu0 0.0
    %2129 = vmatprep.subr.mxu0 0.0
    %2130 = vmatpush1.msra.mxu0 0.0
    %2131 = vmatprep.subr.mxu0 0.0
    %2132 = vmatpush1.msra.mxu0 0.0
    %2133 = vmatprep.subr.mxu0 0.0
    %2134 = vmatpush1.msra.mxu0 0.0
    %2135 = vmatprep.subr.mxu0 0.0
    %2136 = vmatpush1.msra.mxu0 0.0
    %2137 = vmatprep.subr.mxu0 0.0
    %2138 = vmatpush1.msra.mxu0 0.0
    %2139 = vmatprep.subr.mxu0 0.0
    %2140 = vmatpush1.msra.mxu0 0.0
    %2141 = vmatprep.subr.mxu0 0.0
    %2142 = vmatpush1.msra.mxu0 0.0
    %2143 = vmatprep.subr.mxu0 0.0
    %2144 = vmatpush1.msra.mxu0 0.0
    %2145 = vmatprep.mubr.f32.mxu0 0.0
    %2146 = vmatmul.mubr.f32.gmra.mrb[0].mxu0 %v2076
    %v2147 = vpop.f32.mrb[0].mxu0
    %v2148 = vadd.f32 %v2074, %v2147
    %v2149 = vpop.f32.mrb[0].mxu0
    %2150 = vmatprep.mubr.f32.mxu0 0.0
    %2151 = vmatmul.mubr.f32.gmra.mrb[0].mxu0 %v2079
    %v2152 = vpop.f32.mrb[0].mxu0
    %v2153 = vadd.f32 %v2074, %v2152
    %v2154 = vpop.f32.mrb[0].mxu0
    %2155 = vdwg.mxu0
    %s2156 = scalar_lea.vmem %s2, 160
    %v2157 = vld [vmem:[%s2156] sm:$0xff]
    %v2158 = vld [vmem:[%s2156 + $0x8] sm:$0xff]
    %v2159 = vld [vmem:[%s2156 + $0x10] sm:$0xff]
    %v2160 = vld [vmem:[%s2156 + $0x18] sm:$0xff]
    %v2161 = vlaneseq
    %v2162 = vshrl.u32 %v2161, 7
    %v2163 = vsub.s32 1, %v2162
    %v2164 = vrot.slane %v2026, %v2163
    %2165 = vmatprep.subr.mxu0 0.0
    %2166 = vmatpush1.msra.mxu0 %v2157
    %2167 = vmatprep.subr.mxu0 0.0
    %2168 = vmatpush1.msra.mxu0 %v2158
    %2169 = vmatprep.subr.mxu0 0.0
    %2170 = vmatpush1.msra.mxu0 %v2159
    %2171 = vmatprep.subr.mxu0 0.0
    %2172 = vmatpush1.msra.mxu0 %v2160
    %2173 = vmatprep.subr.mxu0 0.0
    %2174 = vmatpush1.msra.mxu0 0.0
    %2175 = vmatprep.subr.mxu0 0.0
    %2176 = vmatpush1.msra.mxu0 0.0
    %2177 = vmatprep.subr.mxu0 0.0
    %2178 = vmatpush1.msra.mxu0 0.0
    %2179 = vmatprep.subr.mxu0 0.0
    %2180 = vmatpush1.msra.mxu0 0.0
    %2181 = vmatprep.subr.mxu0 0.0
    %2182 = vmatpush1.msra.mxu0 0.0
    %2183 = vmatprep.subr.mxu0 0.0
    %2184 = vmatpush1.msra.mxu0 0.0
    %2185 = vmatprep.subr.mxu0 0.0
    %2186 = vmatpush1.msra.mxu0 0.0
    %2187 = vmatprep.subr.mxu0 0.0
    %2188 = vmatpush1.msra.mxu0 0.0
    %2189 = vmatprep.subr.mxu0 0.0
    %2190 = vmatpush1.msra.mxu0 0.0
    %2191 = vmatprep.subr.mxu0 0.0
    %2192 = vmatpush1.msra.mxu0 0.0
    %2193 = vmatprep.subr.mxu0 0.0
    %2194 = vmatpush1.msra.mxu0 0.0
    %2195 = vmatprep.subr.mxu0 0.0
    %2196 = vmatpush1.msra.mxu0 0.0
    %2197 = vmatprep.subr.mxu0 0.0
    %2198 = vmatpush1.msra.mxu0 0.0
    %2199 = vmatprep.subr.mxu0 0.0
    %2200 = vmatpush1.msra.mxu0 0.0
    %2201 = vmatprep.subr.mxu0 0.0
    %2202 = vmatpush1.msra.mxu0 0.0
    %2203 = vmatprep.subr.mxu0 0.0
    %2204 = vmatpush1.msra.mxu0 0.0
    %2205 = vmatprep.subr.mxu0 0.0
    %2206 = vmatpush1.msra.mxu0 0.0
    %2207 = vmatprep.subr.mxu0 0.0
    %2208 = vmatpush1.msra.mxu0 0.0
    %2209 = vmatprep.subr.mxu0 0.0
    %2210 = vmatpush1.msra.mxu0 0.0
    %2211 = vmatprep.subr.mxu0 0.0
    %2212 = vmatpush1.msra.mxu0 0.0
    %2213 = vmatprep.subr.mxu0 0.0
    %2214 = vmatpush1.msra.mxu0 0.0
    %2215 = vmatprep.subr.mxu0 0.0
    %2216 = vmatpush1.msra.mxu0 0.0
    %2217 = vmatprep.subr.mxu0 0.0
    %2218 = vmatpush1.msra.mxu0 0.0
    %2219 = vmatprep.subr.mxu0 0.0
    %2220 = vmatpush1.msra.mxu0 0.0
    %2221 = vmatprep.subr.mxu0 0.0
    %2222 = vmatpush1.msra.mxu0 0.0
    %2223 = vmatprep.subr.mxu0 0.0
    %2224 = vmatpush1.msra.mxu0 0.0
    %2225 = vmatprep.subr.mxu0 0.0
    %2226 = vmatpush1.msra.mxu0 0.0
    %2227 = vmatprep.subr.mxu0 0.0
    %2228 = vmatpush1.msra.mxu0 0.0
    %2229 = vmatprep.mubr.f32.mxu0 0.0
    %2230 = vmatmul.mubr.f32.gmra.mrb[0].mxu0 %v2076
    %v2231 = vpop.f32.mrb[0].mxu0
    %v2232 = vadd.f32 %v2164, %v2231
    %v2233 = vpop.f32.mrb[0].mxu0
    %2234 = vmatprep.mubr.f32.mxu0 0.0
    %2235 = vmatmul.mubr.f32.gmra.mrb[0].mxu0 %v2079
    %v2236 = vpop.f32.mrb[0].mxu0
    %v2237 = vadd.f32 %v2164, %v2236
    %v2238 = vpop.f32.mrb[0].mxu0
    %2239 = vdwg.mxu0
    %s2240 = scalar_lea.vmem %s2, 192
    %v2241 = vld [vmem:[%s2240] sm:$0xff]
    %v2242 = vld [vmem:[%s2240 + $0x8] sm:$0xff]
    %v2243 = vld [vmem:[%s2240 + $0x10] sm:$0xff]
    %v2244 = vld [vmem:[%s2240 + $0x18] sm:$0xff]
    %v2245 = vlaneseq
    %v2246 = vshrl.u32 %v2245, 7
    %v2247 = vsub.s32 2, %v2246
    %v2248 = vrot.slane %v2026, %v2247
    %2249 = vmatprep.subr.mxu0 0.0
    %2250 = vmatpush1.msra.mxu0 %v2241
    %2251 = vmatprep.subr.mxu0 0.0
    %2252 = vmatpush1.msra.mxu0 %v2242
    %2253 = vmatprep.subr.mxu0 0.0
    %2254 = vmatpush1.msra.mxu0 %v2243
    %2255 = vmatprep.subr.mxu0 0.0
    %2256 = vmatpush1.msra.mxu0 %v2244
    %2257 = vmatprep.subr.mxu0 0.0
    %2258 = vmatpush1.msra.mxu0 0.0
    %2259 = vmatprep.subr.mxu0 0.0
    %2260 = vmatpush1.msra.mxu0 0.0
    %2261 = vmatprep.subr.mxu0 0.0
    %2262 = vmatpush1.msra.mxu0 0.0
    %2263 = vmatprep.subr.mxu0 0.0
    %2264 = vmatpush1.msra.mxu0 0.0
    %2265 = vmatprep.subr.mxu0 0.0
    %2266 = vmatpush1.msra.mxu0 0.0
    %2267 = vmatprep.subr.mxu0 0.0
    %2268 = vmatpush1.msra.mxu0 0.0
    %2269 = vmatprep.subr.mxu0 0.0
    %2270 = vmatpush1.msra.mxu0 0.0
    %2271 = vmatprep.subr.mxu0 0.0
    %2272 = vmatpush1.msra.mxu0 0.0
    %2273 = vmatprep.subr.mxu0 0.0
    %2274 = vmatpush1.msra.mxu0 0.0
    %2275 = vmatprep.subr.mxu0 0.0
    %2276 = vmatpush1.msra.mxu0 0.0
    %2277 = vmatprep.subr.mxu0 0.0
    %2278 = vmatpush1.msra.mxu0 0.0
    %2279 = vmatprep.subr.mxu0 0.0
    %2280 = vmatpush1.msra.mxu0 0.0
    %2281 = vmatprep.subr.mxu0 0.0
    %2282 = vmatpush1.msra.mxu0 0.0
    %2283 = vmatprep.subr.mxu0 0.0
    %2284 = vmatpush1.msra.mxu0 0.0
    %2285 = vmatprep.subr.mxu0 0.0
    %2286 = vmatpush1.msra.mxu0 0.0
    %2287 = vmatprep.subr.mxu0 0.0
    %2288 = vmatpush1.msra.mxu0 0.0
    %2289 = vmatprep.subr.mxu0 0.0
    %2290 = vmatpush1.msra.mxu0 0.0
    %2291 = vmatprep.subr.mxu0 0.0
    %2292 = vmatpush1.msra.mxu0 0.0
    %2293 = vmatprep.subr.mxu0 0.0
    %2294 = vmatpush1.msra.mxu0 0.0
    %2295 = vmatprep.subr.mxu0 0.0
    %2296 = vmatpush1.msra.mxu0 0.0
    %2297 = vmatprep.subr.mxu0 0.0
    %2298 = vmatpush1.msra.mxu0 0.0
    %2299 = vmatprep.subr.mxu0 0.0
    %2300 = vmatpush1.msra.mxu0 0.0
    %2301 = vmatprep.subr.mxu0 0.0
    %2302 = vmatpush1.msra.mxu0 0.0
    %2303 = vmatprep.subr.mxu0 0.0
    %2304 = vmatpush1.msra.mxu0 0.0
    %2305 = vmatprep.subr.mxu0 0.0
    %2306 = vmatpush1.msra.mxu0 0.0
    %2307 = vmatprep.subr.mxu0 0.0
    %2308 = vmatpush1.msra.mxu0 0.0
    %2309 = vmatprep.subr.mxu0 0.0
    %2310 = vmatpush1.msra.mxu0 0.0
    %2311 = vmatprep.subr.mxu0 0.0
    %2312 = vmatpush1.msra.mxu0 0.0
    %2313 = vmatprep.mubr.f32.mxu0 0.0
    %2314 = vmatmul.mubr.f32.gmra.mrb[0].mxu0 %v2076
    %v2315 = vpop.f32.mrb[0].mxu0
    %v2316 = vadd.f32 %v2248, %v2315
    %v2317 = vpop.f32.mrb[0].mxu0
    %2318 = vmatprep.mubr.f32.mxu0 0.0
    %2319 = vmatmul.mubr.f32.gmra.mrb[0].mxu0 %v2079
    %v2320 = vpop.f32.mrb[0].mxu0
    %v2321 = vadd.f32 %v2248, %v2320
    %v2322 = vpop.f32.mrb[0].mxu0
    %2323 = vdwg.mxu0
    %2326 = vrot.lane.b32.xlu0 %v2148, 120
    %v2327 = vpop.permute.xlu0 %2326
    %2328 = vrot.lane.b32.xlu0 %v2153, 120
    %v2329 = vpop.permute.xlu0 %2328
    %2330 = vrot.lane.b32.xlu0 %v2148, 112
    %v2331 = vpop.permute.xlu0 %2330
    %2332 = vrot.lane.b32.xlu0 %v2153, 112
    %v2333 = vpop.permute.xlu0 %2332
    %2334 = vrot.lane.b32.xlu0 %v2148, 104
    %v2335 = vpop.permute.xlu0 %2334
    %2336 = vrot.lane.b32.xlu0 %v2153, 104
    %v2337 = vpop.permute.xlu0 %2336
    %2340 = vrot.lane.b32.xlu0 %v2232, 120
    %v2341 = vpop.permute.xlu0 %2340
    %2342 = vrot.lane.b32.xlu0 %v2237, 120
    %v2343 = vpop.permute.xlu0 %2342
    %2344 = vrot.lane.b32.xlu0 %v2232, 112
    %v2345 = vpop.permute.xlu0 %2344
    %2346 = vrot.lane.b32.xlu0 %v2237, 112
    %v2347 = vpop.permute.xlu0 %2346
    %2348 = vrot.lane.b32.xlu0 %v2232, 104
    %v2349 = vpop.permute.xlu0 %2348
    %2350 = vrot.lane.b32.xlu0 %v2237, 104
    %v2351 = vpop.permute.xlu0 %2350
    %2354 = vrot.lane.b32.xlu0 %v2316, 120
    %v2355 = vpop.permute.xlu0 %2354
    %2356 = vrot.lane.b32.xlu0 %v2321, 120
    %v2357 = vpop.permute.xlu0 %2356
    %2360 = vrot.lane.b32.xlu0 %v2316, 112
    %v2361 = vpop.permute.xlu0 %2360
    %2362 = vrot.lane.b32.xlu0 %v2321, 112
    %v2363 = vpop.permute.xlu0 %2362
    %2366 = vrot.lane.b32.xlu0 %v2316, 104
    %v2367 = vpop.permute.xlu0 %2366
    %2368 = vrot.lane.b32.xlu0 %v2321, 104
    %v2369 = vpop.permute.xlu0 %2368
    %v2372 = vsel %vm403, %v2148, 0
    %v2374 = vsel %vm403, %v2232, 0
    %2376 = vmatprep.subr.mxu0 0.0
    %2377 = vmatpush1.xpose.msra.mxu0 %v2374
    %2378 = vmatprep.subr.mxu0 0.0
    %2379 = vmatpush1.xpose.msra.mxu0 0.0
    %2380 = vmatprep.subr.mxu0 0.0
    %2381 = vmatpush1.xpose.msra.mxu0 0.0
    %2382 = vmatprep.subr.mxu0 0.0
    %2383 = vmatpush1.xpose.msra.mxu0 0.0
    %2384 = vmatprep.subr.mxu0 0.0
    %2385 = vmatpush1.xpose.msra.mxu0 0.0
    %2386 = vmatprep.subr.mxu0 0.0
    %2387 = vmatpush1.xpose.msra.mxu0 0.0
    %2388 = vmatprep.subr.mxu0 0.0
    %2389 = vmatpush1.xpose.msra.mxu0 0.0
    %2390 = vmatprep.subr.mxu0 0.0
    %2391 = vmatpush1.xpose.msra.mxu0 0.0
    %2392 = vmatprep.subr.mxu0 0.0
    %2393 = vmatpush1.xpose.msra.mxu0 0.0
    %2394 = vmatprep.subr.mxu0 0.0
    %2395 = vmatpush1.xpose.msra.mxu0 0.0
    %2396 = vmatprep.subr.mxu0 0.0
    %2397 = vmatpush1.xpose.msra.mxu0 0.0
    %2398 = vmatprep.subr.mxu0 0.0
    %2399 = vmatpush1.xpose.msra.mxu0 0.0
    %2400 = vmatprep.subr.mxu0 0.0
    %2401 = vmatpush1.xpose.msra.mxu0 0.0
    %2402 = vmatprep.subr.mxu0 0.0
    %2403 = vmatpush1.xpose.msra.mxu0 0.0
    %2404 = vmatprep.subr.mxu0 0.0
    %2405 = vmatpush1.xpose.msra.mxu0 0.0
    %2406 = vmatprep.subr.mxu0 0.0
    %2407 = vmatpush1.xpose.msra.mxu0 0.0
    %2408 = vmatprep.subr.mxu0 0.0
    %2409 = vmatpush1.xpose.msra.mxu0 0.0
    %2410 = vmatprep.subr.mxu0 0.0
    %2411 = vmatpush1.xpose.msra.mxu0 0.0
    %2412 = vmatprep.subr.mxu0 0.0
    %2413 = vmatpush1.xpose.msra.mxu0 0.0
    %2414 = vmatprep.subr.mxu0 0.0
    %2415 = vmatpush1.xpose.msra.mxu0 0.0
    %2416 = vmatprep.subr.mxu0 0.0
    %2417 = vmatpush1.xpose.msra.mxu0 0.0
    %2418 = vmatprep.subr.mxu0 0.0
    %2419 = vmatpush1.xpose.msra.mxu0 0.0
    %2420 = vmatprep.subr.mxu0 0.0
    %2421 = vmatpush1.xpose.msra.mxu0 0.0
    %2422 = vmatprep.subr.mxu0 0.0
    %2423 = vmatpush1.xpose.msra.mxu0 0.0
    %2424 = vmatprep.subr.mxu0 0.0
    %2425 = vmatpush1.xpose.msra.mxu0 0.0
    %2426 = vmatprep.subr.mxu0 0.0
    %2427 = vmatpush1.xpose.msra.mxu0 0.0
    %2428 = vmatprep.subr.mxu0 0.0
    %2429 = vmatpush1.xpose.msra.mxu0 0.0
    %2430 = vmatprep.subr.mxu0 0.0
    %2431 = vmatpush1.xpose.msra.mxu0 0.0
    %2432 = vmatprep.subr.mxu0 0.0
    %2433 = vmatpush1.xpose.msra.mxu0 0.0
    %2434 = vmatprep.subr.mxu0 0.0
    %2435 = vmatpush1.xpose.msra.mxu0 0.0
    %2436 = vmatprep.subr.mxu0 0.0
    %2437 = vmatpush1.xpose.msra.mxu0 0.0
    %2438 = vmatprep.subr.mxu0 0.0
    %2439 = vmatpush1.xpose.msra.mxu0 0.0
    %2440 = vmatprep.mubr.f32.mxu0 0.0
    %2441 = vmatmul.mubr.f32.gmra.mrb[0].mxu0 %v2372
    %v2442 = vpop.f32.mrb[0].mxu0
    %v2443 = vadd.f32 0.0, %v2442
    %v2444 = vpop.f32.mrb[0].mxu0
    %2445 = vdwg.mxu0
    %v2446 = vsel %vm403, %v2153, 0
    %v2448 = vsel %vm403, %v2237, 0
    %2450 = vmatprep.subr.mxu0 0.0
    %2451 = vmatpush1.xpose.msra.mxu0 %v2448
    %2452 = vmatprep.subr.mxu0 0.0
    %2453 = vmatpush1.xpose.msra.mxu0 0.0
    %2454 = vmatprep.subr.mxu0 0.0
    %2455 = vmatpush1.xpose.msra.mxu0 0.0
    %2456 = vmatprep.subr.mxu0 0.0
    %2457 = vmatpush1.xpose.msra.mxu0 0.0
    %2458 = vmatprep.subr.mxu0 0.0
    %2459 = vmatpush1.xpose.msra.mxu0 0.0
    %2460 = vmatprep.subr.mxu0 0.0
    %2461 = vmatpush1.xpose.msra.mxu0 0.0
    %2462 = vmatprep.subr.mxu0 0.0
    %2463 = vmatpush1.xpose.msra.mxu0 0.0
    %2464 = vmatprep.subr.mxu0 0.0
    %2465 = vmatpush1.xpose.msra.mxu0 0.0
    %2466 = vmatprep.subr.mxu0 0.0
    %2467 = vmatpush1.xpose.msra.mxu0 0.0
    %2468 = vmatprep.subr.mxu0 0.0
    %2469 = vmatpush1.xpose.msra.mxu0 0.0
    %2470 = vmatprep.subr.mxu0 0.0
    %2471 = vmatpush1.xpose.msra.mxu0 0.0
    %2472 = vmatprep.subr.mxu0 0.0
    %2473 = vmatpush1.xpose.msra.mxu0 0.0
    %2474 = vmatprep.subr.mxu0 0.0
    %2475 = vmatpush1.xpose.msra.mxu0 0.0
    %2476 = vmatprep.subr.mxu0 0.0
    %2477 = vmatpush1.xpose.msra.mxu0 0.0
    %2478 = vmatprep.subr.mxu0 0.0
    %2479 = vmatpush1.xpose.msra.mxu0 0.0
    %2480 = vmatprep.subr.mxu0 0.0
    %2481 = vmatpush1.xpose.msra.mxu0 0.0
    %2482 = vmatprep.subr.mxu0 0.0
    %2483 = vmatpush1.xpose.msra.mxu0 0.0
    %2484 = vmatprep.subr.mxu0 0.0
    %2485 = vmatpush1.xpose.msra.mxu0 0.0
    %2486 = vmatprep.subr.mxu0 0.0
    %2487 = vmatpush1.xpose.msra.mxu0 0.0
    %2488 = vmatprep.subr.mxu0 0.0
    %2489 = vmatpush1.xpose.msra.mxu0 0.0
    %2490 = vmatprep.subr.mxu0 0.0
    %2491 = vmatpush1.xpose.msra.mxu0 0.0
    %2492 = vmatprep.subr.mxu0 0.0
    %2493 = vmatpush1.xpose.msra.mxu0 0.0
    %2494 = vmatprep.subr.mxu0 0.0
    %2495 = vmatpush1.xpose.msra.mxu0 0.0
    %2496 = vmatprep.subr.mxu0 0.0
    %2497 = vmatpush1.xpose.msra.mxu0 0.0
    %2498 = vmatprep.subr.mxu0 0.0
    %2499 = vmatpush1.xpose.msra.mxu0 0.0
    %2500 = vmatprep.subr.mxu0 0.0
    %2501 = vmatpush1.xpose.msra.mxu0 0.0
    %2502 = vmatprep.subr.mxu0 0.0
    %2503 = vmatpush1.xpose.msra.mxu0 0.0
    %2504 = vmatprep.subr.mxu0 0.0
    %2505 = vmatpush1.xpose.msra.mxu0 0.0
    %2506 = vmatprep.subr.mxu0 0.0
    %2507 = vmatpush1.xpose.msra.mxu0 0.0
    %2508 = vmatprep.subr.mxu0 0.0
    %2509 = vmatpush1.xpose.msra.mxu0 0.0
    %2510 = vmatprep.subr.mxu0 0.0
    %2511 = vmatpush1.xpose.msra.mxu0 0.0
    %2512 = vmatprep.subr.mxu0 0.0
    %2513 = vmatpush1.xpose.msra.mxu0 0.0
    %2514 = vmatprep.mubr.f32.mxu0 0.0
    %2515 = vmatmul.mubr.f32.gmra.mrb[0].mxu0 %v2446
    %v2516 = vpop.f32.mrb[0].mxu0
    %v2517 = vadd.f32 0.0, %v2516
    %v2518 = vpop.f32.mrb[0].mxu0
    %2519 = vdwg.mxu0
    %v2520 = vsel %vm403, %v2327, 0
    %v2522 = vsel %vm403, %v2341, 0
    %2524 = vmatprep.subr.mxu0 0.0
    %2525 = vmatpush1.xpose.msra.mxu0 %v2522
    %2526 = vmatprep.subr.mxu0 0.0
    %2527 = vmatpush1.xpose.msra.mxu0 0.0
    %2528 = vmatprep.subr.mxu0 0.0
    %2529 = vmatpush1.xpose.msra.mxu0 0.0
    %2530 = vmatprep.subr.mxu0 0.0
    %2531 = vmatpush1.xpose.msra.mxu0 0.0
    %2532 = vmatprep.subr.mxu0 0.0
    %2533 = vmatpush1.xpose.msra.mxu0 0.0
    %2534 = vmatprep.subr.mxu0 0.0
    %2535 = vmatpush1.xpose.msra.mxu0 0.0
    %2536 = vmatprep.subr.mxu0 0.0
    %2537 = vmatpush1.xpose.msra.mxu0 0.0
    %2538 = vmatprep.subr.mxu0 0.0
    %2539 = vmatpush1.xpose.msra.mxu0 0.0
    %2540 = vmatprep.subr.mxu0 0.0
    %2541 = vmatpush1.xpose.msra.mxu0 0.0
    %2542 = vmatprep.subr.mxu0 0.0
    %2543 = vmatpush1.xpose.msra.mxu0 0.0
    %2544 = vmatprep.subr.mxu0 0.0
    %2545 = vmatpush1.xpose.msra.mxu0 0.0
    %2546 = vmatprep.subr.mxu0 0.0
    %2547 = vmatpush1.xpose.msra.mxu0 0.0
    %2548 = vmatprep.subr.mxu0 0.0
    %2549 = vmatpush1.xpose.msra.mxu0 0.0
    %2550 = vmatprep.subr.mxu0 0.0
    %2551 = vmatpush1.xpose.msra.mxu0 0.0
    %2552 = vmatprep.subr.mxu0 0.0
    %2553 = vmatpush1.xpose.msra.mxu0 0.0
    %2554 = vmatprep.subr.mxu0 0.0
    %2555 = vmatpush1.xpose.msra.mxu0 0.0
    %2556 = vmatprep.subr.mxu0 0.0
    %2557 = vmatpush1.xpose.msra.mxu0 0.0
    %2558 = vmatprep.subr.mxu0 0.0
    %2559 = vmatpush1.xpose.msra.mxu0 0.0
    %2560 = vmatprep.subr.mxu0 0.0
    %2561 = vmatpush1.xpose.msra.mxu0 0.0
    %2562 = vmatprep.subr.mxu0 0.0
    %2563 = vmatpush1.xpose.msra.mxu0 0.0
    %2564 = vmatprep.subr.mxu0 0.0
    %2565 = vmatpush1.xpose.msra.mxu0 0.0
    %2566 = vmatprep.subr.mxu0 0.0
    %2567 = vmatpush1.xpose.msra.mxu0 0.0
    %2568 = vmatprep.subr.mxu0 0.0
    %2569 = vmatpush1.xpose.msra.mxu0 0.0
    %2570 = vmatprep.subr.mxu0 0.0
    %2571 = vmatpush1.xpose.msra.mxu0 0.0
    %2572 = vmatprep.subr.mxu0 0.0
    %2573 = vmatpush1.xpose.msra.mxu0 0.0
    %2574 = vmatprep.subr.mxu0 0.0
    %2575 = vmatpush1.xpose.msra.mxu0 0.0
    %2576 = vmatprep.subr.mxu0 0.0
    %2577 = vmatpush1.xpose.msra.mxu0 0.0
    %2578 = vmatprep.subr.mxu0 0.0
    %2579 = vmatpush1.xpose.msra.mxu0 0.0
    %2580 = vmatprep.subr.mxu0 0.0
    %2581 = vmatpush1.xpose.msra.mxu0 0.0
    %2582 = vmatprep.subr.mxu0 0.0
    %2583 = vmatpush1.xpose.msra.mxu0 0.0
    %2584 = vmatprep.subr.mxu0 0.0
    %2585 = vmatpush1.xpose.msra.mxu0 0.0
    %2586 = vmatprep.subr.mxu0 0.0
    %2587 = vmatpush1.xpose.msra.mxu0 0.0
    %2588 = vmatprep.mubr.f32.mxu0 0.0
    %2589 = vmatmul.mubr.f32.gmra.mrb[0].mxu0 %v2520
    %v2590 = vpop.f32.mrb[0].mxu0
    %v2591 = vadd.f32 0.0, %v2590
    %v2592 = vpop.f32.mrb[0].mxu0
    %2593 = vdwg.mxu0
    %v2594 = vsel %vm403, %v2329, 0
    %v2596 = vsel %vm403, %v2343, 0
    %2598 = vmatprep.subr.mxu0 0.0
    %2599 = vmatpush1.xpose.msra.mxu0 %v2596
    %2600 = vmatprep.subr.mxu0 0.0
    %2601 = vmatpush1.xpose.msra.mxu0 0.0
    %2602 = vmatprep.subr.mxu0 0.0
    %2603 = vmatpush1.xpose.msra.mxu0 0.0
    %2604 = vmatprep.subr.mxu0 0.0
    %2605 = vmatpush1.xpose.msra.mxu0 0.0
    %2606 = vmatprep.subr.mxu0 0.0
    %2607 = vmatpush1.xpose.msra.mxu0 0.0
    %2608 = vmatprep.subr.mxu0 0.0
    %2609 = vmatpush1.xpose.msra.mxu0 0.0
    %2610 = vmatprep.subr.mxu0 0.0
    %2611 = vmatpush1.xpose.msra.mxu0 0.0
    %2612 = vmatprep.subr.mxu0 0.0
    %2613 = vmatpush1.xpose.msra.mxu0 0.0
    %2614 = vmatprep.subr.mxu0 0.0
    %2615 = vmatpush1.xpose.msra.mxu0 0.0
    %2616 = vmatprep.subr.mxu0 0.0
    %2617 = vmatpush1.xpose.msra.mxu0 0.0
    %2618 = vmatprep.subr.mxu0 0.0
    %2619 = vmatpush1.xpose.msra.mxu0 0.0
    %2620 = vmatprep.subr.mxu0 0.0
    %2621 = vmatpush1.xpose.msra.mxu0 0.0
    %2622 = vmatprep.subr.mxu0 0.0
    %2623 = vmatpush1.xpose.msra.mxu0 0.0
    %2624 = vmatprep.subr.mxu0 0.0
    %2625 = vmatpush1.xpose.msra.mxu0 0.0
    %2626 = vmatprep.subr.mxu0 0.0
    %2627 = vmatpush1.xpose.msra.mxu0 0.0
    %2628 = vmatprep.subr.mxu0 0.0
    %2629 = vmatpush1.xpose.msra.mxu0 0.0
    %2630 = vmatprep.subr.mxu0 0.0
    %2631 = vmatpush1.xpose.msra.mxu0 0.0
    %2632 = vmatprep.subr.mxu0 0.0
    %2633 = vmatpush1.xpose.msra.mxu0 0.0
    %2634 = vmatprep.subr.mxu0 0.0
    %2635 = vmatpush1.xpose.msra.mxu0 0.0
    %2636 = vmatprep.subr.mxu0 0.0
    %2637 = vmatpush1.xpose.msra.mxu0 0.0
    %2638 = vmatprep.subr.mxu0 0.0
    %2639 = vmatpush1.xpose.msra.mxu0 0.0
    %2640 = vmatprep.subr.mxu0 0.0
    %2641 = vmatpush1.xpose.msra.mxu0 0.0
    %2642 = vmatprep.subr.mxu0 0.0
    %2643 = vmatpush1.xpose.msra.mxu0 0.0
    %2644 = vmatprep.subr.mxu0 0.0
    %2645 = vmatpush1.xpose.msra.mxu0 0.0
    %2646 = vmatprep.subr.mxu0 0.0
    %2647 = vmatpush1.xpose.msra.mxu0 0.0
    %2648 = vmatprep.subr.mxu0 0.0
    %2649 = vmatpush1.xpose.msra.mxu0 0.0
    %2650 = vmatprep.subr.mxu0 0.0
    %2651 = vmatpush1.xpose.msra.mxu0 0.0
    %2652 = vmatprep.subr.mxu0 0.0
    %2653 = vmatpush1.xpose.msra.mxu0 0.0
    %2654 = vmatprep.subr.mxu0 0.0
    %2655 = vmatpush1.xpose.msra.mxu0 0.0
    %2656 = vmatprep.subr.mxu0 0.0
    %2657 = vmatpush1.xpose.msra.mxu0 0.0
    %2658 = vmatprep.subr.mxu0 0.0
    %2659 = vmatpush1.xpose.msra.mxu0 0.0
    %2660 = vmatprep.subr.mxu0 0.0
    %2661 = vmatpush1.xpose.msra.mxu0 0.0
    %2662 = vmatprep.mubr.f32.mxu0 0.0
    %2663 = vmatmul.mubr.f32.gmra.mrb[0].mxu0 %v2594
    %v2664 = vpop.f32.mrb[0].mxu0
    %v2665 = vadd.f32 0.0, %v2664
    %v2666 = vpop.f32.mrb[0].mxu0
    %2667 = vdwg.mxu0
    %v2668 = vsel %vm403, %v2331, 0
    %v2670 = vsel %vm403, %v2345, 0
    %2672 = vmatprep.subr.mxu0 0.0
    %2673 = vmatpush1.xpose.msra.mxu0 %v2670
    %2674 = vmatprep.subr.mxu0 0.0
    %2675 = vmatpush1.xpose.msra.mxu0 0.0
    %2676 = vmatprep.subr.mxu0 0.0
    %2677 = vmatpush1.xpose.msra.mxu0 0.0
    %2678 = vmatprep.subr.mxu0 0.0
    %2679 = vmatpush1.xpose.msra.mxu0 0.0
    %2680 = vmatprep.subr.mxu0 0.0
    %2681 = vmatpush1.xpose.msra.mxu0 0.0
    %2682 = vmatprep.subr.mxu0 0.0
    %2683 = vmatpush1.xpose.msra.mxu0 0.0
    %2684 = vmatprep.subr.mxu0 0.0
    %2685 = vmatpush1.xpose.msra.mxu0 0.0
    %2686 = vmatprep.subr.mxu0 0.0
    %2687 = vmatpush1.xpose.msra.mxu0 0.0
    %2688 = vmatprep.subr.mxu0 0.0
    %2689 = vmatpush1.xpose.msra.mxu0 0.0
    %2690 = vmatprep.subr.mxu0 0.0
    %2691 = vmatpush1.xpose.msra.mxu0 0.0
    %2692 = vmatprep.subr.mxu0 0.0
    %2693 = vmatpush1.xpose.msra.mxu0 0.0
    %2694 = vmatprep.subr.mxu0 0.0
    %2695 = vmatpush1.xpose.msra.mxu0 0.0
    %2696 = vmatprep.subr.mxu0 0.0
    %2697 = vmatpush1.xpose.msra.mxu0 0.0
    %2698 = vmatprep.subr.mxu0 0.0
    %2699 = vmatpush1.xpose.msra.mxu0 0.0
    %2700 = vmatprep.subr.mxu0 0.0
    %2701 = vmatpush1.xpose.msra.mxu0 0.0
    %2702 = vmatprep.subr.mxu0 0.0
    %2703 = vmatpush1.xpose.msra.mxu0 0.0
    %2704 = vmatprep.subr.mxu0 0.0
    %2705 = vmatpush1.xpose.msra.mxu0 0.0
    %2706 = vmatprep.subr.mxu0 0.0
    %2707 = vmatpush1.xpose.msra.mxu0 0.0
    %2708 = vmatprep.subr.mxu0 0.0
    %2709 = vmatpush1.xpose.msra.mxu0 0.0
    %2710 = vmatprep.subr.mxu0 0.0
    %2711 = vmatpush1.xpose.msra.mxu0 0.0
    %2712 = vmatprep.subr.mxu0 0.0
    %2713 = vmatpush1.xpose.msra.mxu0 0.0
    %2714 = vmatprep.subr.mxu0 0.0
    %2715 = vmatpush1.xpose.msra.mxu0 0.0
    %2716 = vmatprep.subr.mxu0 0.0
    %2717 = vmatpush1.xpose.msra.mxu0 0.0
    %2718 = vmatprep.subr.mxu0 0.0
    %2719 = vmatpush1.xpose.msra.mxu0 0.0
    %2720 = vmatprep.subr.mxu0 0.0
    %2721 = vmatpush1.xpose.msra.mxu0 0.0
    %2722 = vmatprep.subr.mxu0 0.0
    %2723 = vmatpush1.xpose.msra.mxu0 0.0
    %2724 = vmatprep.subr.mxu0 0.0
    %2725 = vmatpush1.xpose.msra.mxu0 0.0
    %2726 = vmatprep.subr.mxu0 0.0
    %2727 = vmatpush1.xpose.msra.mxu0 0.0
    %2728 = vmatprep.subr.mxu0 0.0
    %2729 = vmatpush1.xpose.msra.mxu0 0.0
    %2730 = vmatprep.subr.mxu0 0.0
    %2731 = vmatpush1.xpose.msra.mxu0 0.0
    %2732 = vmatprep.subr.mxu0 0.0
    %2733 = vmatpush1.xpose.msra.mxu0 0.0
    %2734 = vmatprep.subr.mxu0 0.0
    %2735 = vmatpush1.xpose.msra.mxu0 0.0
    %2736 = vmatprep.mubr.f32.mxu0 0.0
    %2737 = vmatmul.mubr.f32.gmra.mrb[0].mxu0 %v2668
    %v2738 = vpop.f32.mrb[0].mxu0
    %v2739 = vadd.f32 0.0, %v2738
    %v2740 = vpop.f32.mrb[0].mxu0
    %2741 = vdwg.mxu0
    %v2742 = vsel %vm403, %v2333, 0
    %v2744 = vsel %vm403, %v2347, 0
    %2746 = vmatprep.subr.mxu0 0.0
    %2747 = vmatpush1.xpose.msra.mxu0 %v2744
    %2748 = vmatprep.subr.mxu0 0.0
    %2749 = vmatpush1.xpose.msra.mxu0 0.0
    %2750 = vmatprep.subr.mxu0 0.0
    %2751 = vmatpush1.xpose.msra.mxu0 0.0
    %2752 = vmatprep.subr.mxu0 0.0
    %2753 = vmatpush1.xpose.msra.mxu0 0.0
    %2754 = vmatprep.subr.mxu0 0.0
    %2755 = vmatpush1.xpose.msra.mxu0 0.0
    %2756 = vmatprep.subr.mxu0 0.0
    %2757 = vmatpush1.xpose.msra.mxu0 0.0
    %2758 = vmatprep.subr.mxu0 0.0
    %2759 = vmatpush1.xpose.msra.mxu0 0.0
    %2760 = vmatprep.subr.mxu0 0.0
    %2761 = vmatpush1.xpose.msra.mxu0 0.0
    %2762 = vmatprep.subr.mxu0 0.0
    %2763 = vmatpush1.xpose.msra.mxu0 0.0
    %2764 = vmatprep.subr.mxu0 0.0
    %2765 = vmatpush1.xpose.msra.mxu0 0.0
    %2766 = vmatprep.subr.mxu0 0.0
    %2767 = vmatpush1.xpose.msra.mxu0 0.0
    %2768 = vmatprep.subr.mxu0 0.0
    %2769 = vmatpush1.xpose.msra.mxu0 0.0
    %2770 = vmatprep.subr.mxu0 0.0
    %2771 = vmatpush1.xpose.msra.mxu0 0.0
    %2772 = vmatprep.subr.mxu0 0.0
    %2773 = vmatpush1.xpose.msra.mxu0 0.0
    %2774 = vmatprep.subr.mxu0 0.0
    %2775 = vmatpush1.xpose.msra.mxu0 0.0
    %2776 = vmatprep.subr.mxu0 0.0
    %2777 = vmatpush1.xpose.msra.mxu0 0.0
    %2778 = vmatprep.subr.mxu0 0.0
    %2779 = vmatpush1.xpose.msra.mxu0 0.0
    %2780 = vmatprep.subr.mxu0 0.0
    %2781 = vmatpush1.xpose.msra.mxu0 0.0
    %2782 = vmatprep.subr.mxu0 0.0
    %2783 = vmatpush1.xpose.msra.mxu0 0.0
    %2784 = vmatprep.subr.mxu0 0.0
    %2785 = vmatpush1.xpose.msra.mxu0 0.0
    %2786 = vmatprep.subr.mxu0 0.0
    %2787 = vmatpush1.xpose.msra.mxu0 0.0
    %2788 = vmatprep.subr.mxu0 0.0
    %2789 = vmatpush1.xpose.msra.mxu0 0.0
    %2790 = vmatprep.subr.mxu0 0.0
    %2791 = vmatpush1.xpose.msra.mxu0 0.0
    %2792 = vmatprep.subr.mxu0 0.0
    %2793 = vmatpush1.xpose.msra.mxu0 0.0
    %2794 = vmatprep.subr.mxu0 0.0
    %2795 = vmatpush1.xpose.msra.mxu0 0.0
    %2796 = vmatprep.subr.mxu0 0.0
    %2797 = vmatpush1.xpose.msra.mxu0 0.0
    %2798 = vmatprep.subr.mxu0 0.0
    %2799 = vmatpush1.xpose.msra.mxu0 0.0
    %2800 = vmatprep.subr.mxu0 0.0
    %2801 = vmatpush1.xpose.msra.mxu0 0.0
    %2802 = vmatprep.subr.mxu0 0.0
    %2803 = vmatpush1.xpose.msra.mxu0 0.0
    %2804 = vmatprep.subr.mxu0 0.0
    %2805 = vmatpush1.xpose.msra.mxu0 0.0
    %2806 = vmatprep.subr.mxu0 0.0
    %2807 = vmatpush1.xpose.msra.mxu0 0.0
    %2808 = vmatprep.subr.mxu0 0.0
    %2809 = vmatpush1.xpose.msra.mxu0 0.0
    %2810 = vmatprep.mubr.f32.mxu0 0.0
    %2811 = vmatmul.mubr.f32.gmra.mrb[0].mxu0 %v2742
    %v2812 = vpop.f32.mrb[0].mxu0
    %v2813 = vadd.f32 0.0, %v2812
    %v2814 = vpop.f32.mrb[0].mxu0
    %2815 = vdwg.mxu0
    %v2816 = vsel %vm403, %v2335, 0
    %v2818 = vsel %vm403, %v2349, 0
    %2820 = vmatprep.subr.mxu0 0.0
    %2821 = vmatpush1.xpose.msra.mxu0 %v2818
    %2822 = vmatprep.subr.mxu0 0.0
    %2823 = vmatpush1.xpose.msra.mxu0 0.0
    %2824 = vmatprep.subr.mxu0 0.0
    %2825 = vmatpush1.xpose.msra.mxu0 0.0
    %2826 = vmatprep.subr.mxu0 0.0
    %2827 = vmatpush1.xpose.msra.mxu0 0.0
    %2828 = vmatprep.subr.mxu0 0.0
    %2829 = vmatpush1.xpose.msra.mxu0 0.0
    %2830 = vmatprep.subr.mxu0 0.0
    %2831 = vmatpush1.xpose.msra.mxu0 0.0
    %2832 = vmatprep.subr.mxu0 0.0
    %2833 = vmatpush1.xpose.msra.mxu0 0.0
    %2834 = vmatprep.subr.mxu0 0.0
    %2835 = vmatpush1.xpose.msra.mxu0 0.0
    %2836 = vmatprep.subr.mxu0 0.0
    %2837 = vmatpush1.xpose.msra.mxu0 0.0
    %2838 = vmatprep.subr.mxu0 0.0
    %2839 = vmatpush1.xpose.msra.mxu0 0.0
    %2840 = vmatprep.subr.mxu0 0.0
    %2841 = vmatpush1.xpose.msra.mxu0 0.0
    %2842 = vmatprep.subr.mxu0 0.0
    %2843 = vmatpush1.xpose.msra.mxu0 0.0
    %2844 = vmatprep.subr.mxu0 0.0
    %2845 = vmatpush1.xpose.msra.mxu0 0.0
    %2846 = vmatprep.subr.mxu0 0.0
    %2847 = vmatpush1.xpose.msra.mxu0 0.0
    %2848 = vmatprep.subr.mxu0 0.0
    %2849 = vmatpush1.xpose.msra.mxu0 0.0
    %2850 = vmatprep.subr.mxu0 0.0
    %2851 = vmatpush1.xpose.msra.mxu0 0.0
    %2852 = vmatprep.subr.mxu0 0.0
    %2853 = vmatpush1.xpose.msra.mxu0 0.0
    %2854 = vmatprep.subr.mxu0 0.0
    %2855 = vmatpush1.xpose.msra.mxu0 0.0
    %2856 = vmatprep.subr.mxu0 0.0
    %2857 = vmatpush1.xpose.msra.mxu0 0.0
    %2858 = vmatprep.subr.mxu0 0.0
    %2859 = vmatpush1.xpose.msra.mxu0 0.0
    %2860 = vmatprep.subr.mxu0 0.0
    %2861 = vmatpush1.xpose.msra.mxu0 0.0
    %2862 = vmatprep.subr.mxu0 0.0
    %2863 = vmatpush1.xpose.msra.mxu0 0.0
    %2864 = vmatprep.subr.mxu0 0.0
    %2865 = vmatpush1.xpose.msra.mxu0 0.0
    %2866 = vmatprep.subr.mxu0 0.0
    %2867 = vmatpush1.xpose.msra.mxu0 0.0
    %2868 = vmatprep.subr.mxu0 0.0
    %2869 = vmatpush1.xpose.msra.mxu0 0.0
    %2870 = vmatprep.subr.mxu0 0.0
    %2871 = vmatpush1.xpose.msra.mxu0 0.0
    %2872 = vmatprep.subr.mxu0 0.0
    %2873 = vmatpush1.xpose.msra.mxu0 0.0
    %2874 = vmatprep.subr.mxu0 0.0
    %2875 = vmatpush1.xpose.msra.mxu0 0.0
    %2876 = vmatprep.subr.mxu0 0.0
    %2877 = vmatpush1.xpose.msra.mxu0 0.0
    %2878 = vmatprep.subr.mxu0 0.0
    %2879 = vmatpush1.xpose.msra.mxu0 0.0
    %2880 = vmatprep.subr.mxu0 0.0
    %2881 = vmatpush1.xpose.msra.mxu0 0.0
    %2882 = vmatprep.subr.mxu0 0.0
    %2883 = vmatpush1.xpose.msra.mxu0 0.0
    %2884 = vmatprep.mubr.f32.mxu0 0.0
    %2885 = vmatmul.mubr.f32.gmra.mrb[0].mxu0 %v2816
    %v2886 = vpop.f32.mrb[0].mxu0
    %v2887 = vadd.f32 0.0, %v2886
    %v2888 = vpop.f32.mrb[0].mxu0
    %2889 = vdwg.mxu0
    %v2890 = vsel %vm403, %v2337, 0
    %v2892 = vsel %vm403, %v2351, 0
    %2894 = vmatprep.subr.mxu0 0.0
    %2895 = vmatpush1.xpose.msra.mxu0 %v2892
    %2896 = vmatprep.subr.mxu0 0.0
    %2897 = vmatpush1.xpose.msra.mxu0 0.0
    %2898 = vmatprep.subr.mxu0 0.0
    %2899 = vmatpush1.xpose.msra.mxu0 0.0
    %2900 = vmatprep.subr.mxu0 0.0
    %2901 = vmatpush1.xpose.msra.mxu0 0.0
    %2902 = vmatprep.subr.mxu0 0.0
    %2903 = vmatpush1.xpose.msra.mxu0 0.0
    %2904 = vmatprep.subr.mxu0 0.0
    %2905 = vmatpush1.xpose.msra.mxu0 0.0
    %2906 = vmatprep.subr.mxu0 0.0
    %2907 = vmatpush1.xpose.msra.mxu0 0.0
    %2908 = vmatprep.subr.mxu0 0.0
    %2909 = vmatpush1.xpose.msra.mxu0 0.0
    %2910 = vmatprep.subr.mxu0 0.0
    %2911 = vmatpush1.xpose.msra.mxu0 0.0
    %2912 = vmatprep.subr.mxu0 0.0
    %2913 = vmatpush1.xpose.msra.mxu0 0.0
    %2914 = vmatprep.subr.mxu0 0.0
    %2915 = vmatpush1.xpose.msra.mxu0 0.0
    %2916 = vmatprep.subr.mxu0 0.0
    %2917 = vmatpush1.xpose.msra.mxu0 0.0
    %2918 = vmatprep.subr.mxu0 0.0
    %2919 = vmatpush1.xpose.msra.mxu0 0.0
    %2920 = vmatprep.subr.mxu0 0.0
    %2921 = vmatpush1.xpose.msra.mxu0 0.0
    %2922 = vmatprep.subr.mxu0 0.0
    %2923 = vmatpush1.xpose.msra.mxu0 0.0
    %2924 = vmatprep.subr.mxu0 0.0
    %2925 = vmatpush1.xpose.msra.mxu0 0.0
    %2926 = vmatprep.subr.mxu0 0.0
    %2927 = vmatpush1.xpose.msra.mxu0 0.0
    %2928 = vmatprep.subr.mxu0 0.0
    %2929 = vmatpush1.xpose.msra.mxu0 0.0
    %2930 = vmatprep.subr.mxu0 0.0
    %2931 = vmatpush1.xpose.msra.mxu0 0.0
    %2932 = vmatprep.subr.mxu0 0.0
    %2933 = vmatpush1.xpose.msra.mxu0 0.0
    %2934 = vmatprep.subr.mxu0 0.0
    %2935 = vmatpush1.xpose.msra.mxu0 0.0
    %2936 = vmatprep.subr.mxu0 0.0
    %2937 = vmatpush1.xpose.msra.mxu0 0.0
    %2938 = vmatprep.subr.mxu0 0.0
    %2939 = vmatpush1.xpose.msra.mxu0 0.0
    %2940 = vmatprep.subr.mxu0 0.0
    %2941 = vmatpush1.xpose.msra.mxu0 0.0
    %2942 = vmatprep.subr.mxu0 0.0
    %2943 = vmatpush1.xpose.msra.mxu0 0.0
    %2944 = vmatprep.subr.mxu0 0.0
    %2945 = vmatpush1.xpose.msra.mxu0 0.0
    %2946 = vmatprep.subr.mxu0 0.0
    %2947 = vmatpush1.xpose.msra.mxu0 0.0
    %2948 = vmatprep.subr.mxu0 0.0
    %2949 = vmatpush1.xpose.msra.mxu0 0.0
    %2950 = vmatprep.subr.mxu0 0.0
    %2951 = vmatpush1.xpose.msra.mxu0 0.0
    %2952 = vmatprep.subr.mxu0 0.0
    %2953 = vmatpush1.xpose.msra.mxu0 0.0
    %2954 = vmatprep.subr.mxu0 0.0
    %2955 = vmatpush1.xpose.msra.mxu0 0.0
    %2956 = vmatprep.subr.mxu0 0.0
    %2957 = vmatpush1.xpose.msra.mxu0 0.0
    %2958 = vmatprep.mubr.f32.mxu0 0.0
    %2959 = vmatmul.mubr.f32.gmra.mrb[0].mxu0 %v2890
    %v2960 = vpop.f32.mrb[0].mxu0
    %v2961 = vadd.f32 0.0, %v2960
    %v2962 = vpop.f32.mrb[0].mxu0
    %2963 = vdwg.mxu0
    %v2964 = vadd.f32 %v2443, %v54
    %v2965 = vadd.f32 %v2517, %v55
    %v2966 = vadd.f32 %v2591, %v54
    %v2967 = vadd.f32 %v2665, %v55
    %v2968 = vadd.f32 %v2739, %v54
    %v2969 = vadd.f32 %v2813, %v55
    %v2970 = vadd.f32 %v2887, %v54
    %v2971 = vadd.f32 %v2961, %v55
    %v2972 = vsel %vm403, %v2964, -inf
    %2973 = vmax.xlane.f32.xlu0 %v2972
    %v2974 = vpop.xlane.xlu0 %2973
    %v2975 = vsel %vm403, %v2965, -inf
    %2976 = vmax.xlane.f32.xlu0 %v2975
    %v2977 = vpop.xlane.xlu0 %2976
    %v2978 = vsel %vm403, %v2966, -inf
    %2979 = vmax.xlane.f32.xlu0 %v2978
    %v2980 = vpop.xlane.xlu0 %2979
    %v2981 = vsel %vm403, %v2967, -inf
    %2982 = vmax.xlane.f32.xlu0 %v2981
    %v2983 = vpop.xlane.xlu0 %2982
    %v2984 = vsel %vm403, %v2968, -inf
    %2985 = vmax.xlane.f32.xlu0 %v2984
    %v2986 = vpop.xlane.xlu0 %2985
    %v2987 = vsel %vm403, %v2969, -inf
    %2988 = vmax.xlane.f32.xlu0 %v2987
    %v2989 = vpop.xlane.xlu0 %2988
    %v2990 = vsel %vm403, %v2970, -inf
    %2991 = vmax.xlane.f32.xlu0 %v2990
    %v2992 = vpop.xlane.xlu0 %2991
    %v2993 = vsel %vm403, %v2971, -inf
    %2994 = vmax.xlane.f32.xlu0 %v2993
    %v2995 = vpop.xlane.xlu0 %2994
    %v2996 = vsub.f32 %v2964, %v2974
    %v2997 = vsub.f32 %v2965, %v2977
    %v2998 = vsub.f32 %v2966, %v2980
    %v2999 = vsub.f32 %v2967, %v2983
    %v3000 = vsub.f32 %v2968, %v2986
    %v3001 = vsub.f32 %v2969, %v2989
    %v3002 = vsub.f32 %v2970, %v2992
    %v3003 = vsub.f32 %v2971, %v2995
    %v3004 = vmul.f32 %v2996, 1.442695
    %v3005 = vpow.pop %v3004
    %v3006 = vmul.f32 %v2997, 1.442695
    %v3007 = vpow.pop %v3006
    %v3008 = vmul.f32 %v2998, 1.442695
    %v3009 = vpow.pop %v3008
    %v3010 = vmul.f32 %v2999, 1.442695
    %v3011 = vpow.pop %v3010
    %v3012 = vmul.f32 %v3000, 1.442695
    %v3013 = vpow.pop %v3012
    %v3014 = vmul.f32 %v3001, 1.442695
    %v3015 = vpow.pop %v3014
    %v3016 = vmul.f32 %v3002, 1.442695
    %v3017 = vpow.pop %v3016
    %v3018 = vmul.f32 %v3003, 1.442695
    %v3019 = vpow.pop %v3018
    %v3020 = vsel %vm403, %v3005, 0.0
    %3021 = vadd.xlane.f32.xlu0 %v3020
    %v3022 = vpop.xlane.xlu0 %3021
    %v3023 = vsel %vm403, %v3007, 0.0
    %3024 = vadd.xlane.f32.xlu0 %v3023
    %v3025 = vpop.xlane.xlu0 %3024
    %v3026 = vsel %vm403, %v3009, 0.0
    %3027 = vadd.xlane.f32.xlu0 %v3026
    %v3028 = vpop.xlane.xlu0 %3027
    %v3029 = vsel %vm403, %v3011, 0.0
    %3030 = vadd.xlane.f32.xlu0 %v3029
    %v3031 = vpop.xlane.xlu0 %3030
    %v3032 = vsel %vm403, %v3013, 0.0
    %3033 = vadd.xlane.f32.xlu0 %v3032
    %v3034 = vpop.xlane.xlu0 %3033
    %v3035 = vsel %vm403, %v3015, 0.0
    %3036 = vadd.xlane.f32.xlu0 %v3035
    %v3037 = vpop.xlane.xlu0 %3036
    %v3038 = vsel %vm403, %v3017, 0.0
    %3039 = vadd.xlane.f32.xlu0 %v3038
    %v3040 = vpop.xlane.xlu0 %3039
    %v3041 = vsel %vm403, %v3019, 0.0
    %3042 = vadd.xlane.f32.xlu0 %v3041
    %v3043 = vpop.xlane.xlu0 %3042
    %v3044 = vrcp.pop %v3022
    %v3045 = vmul.f32 %v3005, %v3044
    %v3046 = vrcp.pop %v3025
    %v3047 = vmul.f32 %v3007, %v3046
    %v3048 = vrcp.pop %v3028
    %v3049 = vmul.f32 %v3009, %v3048
    %v3050 = vrcp.pop %v3031
    %v3051 = vmul.f32 %v3011, %v3050
    %v3052 = vrcp.pop %v3034
    %v3053 = vmul.f32 %v3013, %v3052
    %v3054 = vrcp.pop %v3037
    %v3055 = vmul.f32 %v3015, %v3054
    %v3056 = vrcp.pop %v3040
    %v3057 = vmul.f32 %v3017, %v3056
    %v3058 = vrcp.pop %v3043
    %v3059 = vmul.f32 %v3019, %v3058
    %v3061 = vsel %vm403, %v3045, 0
    %3063 = vmatprep.subr.mxu0 0.0
    %3064 = vmatpush1.msra.mxu0 %v2316
    %3065 = vmatprep.subr.mxu0 0.0
    %3066 = vmatpush1.msra.mxu0 0.0
    %3067 = vmatprep.subr.mxu0 0.0
    %3068 = vmatpush1.msra.mxu0 0.0
    %3069 = vmatprep.subr.mxu0 0.0
    %3070 = vmatpush1.msra.mxu0 0.0
    %3071 = vmatprep.subr.mxu0 0.0
    %3072 = vmatpush1.msra.mxu0 0.0
    %3073 = vmatprep.subr.mxu0 0.0
    %3074 = vmatpush1.msra.mxu0 0.0
    %3075 = vmatprep.subr.mxu0 0.0
    %3076 = vmatpush1.msra.mxu0 0.0
    %3077 = vmatprep.subr.mxu0 0.0
    %3078 = vmatpush1.msra.mxu0 0.0
    %3079 = vmatprep.subr.mxu0 0.0
    %3080 = vmatpush1.msra.mxu0 0.0
    %3081 = vmatprep.subr.mxu0 0.0
    %3082 = vmatpush1.msra.mxu0 0.0
    %3083 = vmatprep.subr.mxu0 0.0
    %3084 = vmatpush1.msra.mxu0 0.0
    %3085 = vmatprep.subr.mxu0 0.0
    %3086 = vmatpush1.msra.mxu0 0.0
    %3087 = vmatprep.subr.mxu0 0.0
    %3088 = vmatpush1.msra.mxu0 0.0
    %3089 = vmatprep.subr.mxu0 0.0
    %3090 = vmatpush1.msra.mxu0 0.0
    %3091 = vmatprep.subr.mxu0 0.0
    %3092 = vmatpush1.msra.mxu0 0.0
    %3093 = vmatprep.subr.mxu0 0.0
    %3094 = vmatpush1.msra.mxu0 0.0
    %3095 = vmatprep.subr.mxu0 0.0
    %3096 = vmatpush1.msra.mxu0 0.0
    %3097 = vmatprep.subr.mxu0 0.0
    %3098 = vmatpush1.msra.mxu0 0.0
    %3099 = vmatprep.subr.mxu0 0.0
    %3100 = vmatpush1.msra.mxu0 0.0
    %3101 = vmatprep.subr.mxu0 0.0
    %3102 = vmatpush1.msra.mxu0 0.0
    %3103 = vmatprep.subr.mxu0 0.0
    %3104 = vmatpush1.msra.mxu0 0.0
    %3105 = vmatprep.subr.mxu0 0.0
    %3106 = vmatpush1.msra.mxu0 0.0
    %3107 = vmatprep.subr.mxu0 0.0
    %3108 = vmatpush1.msra.mxu0 0.0
    %3109 = vmatprep.subr.mxu0 0.0
    %3110 = vmatpush1.msra.mxu0 0.0
    %3111 = vmatprep.subr.mxu0 0.0
    %3112 = vmatpush1.msra.mxu0 0.0
    %3113 = vmatprep.subr.mxu0 0.0
    %3114 = vmatpush1.msra.mxu0 0.0
    %3115 = vmatprep.subr.mxu0 0.0
    %3116 = vmatpush1.msra.mxu0 0.0
    %3117 = vmatprep.subr.mxu0 0.0
    %3118 = vmatpush1.msra.mxu0 0.0
    %3119 = vmatprep.subr.mxu0 0.0
    %3120 = vmatpush1.msra.mxu0 0.0
    %3121 = vmatprep.subr.mxu0 0.0
    %3122 = vmatpush1.msra.mxu0 0.0
    %3123 = vmatprep.subr.mxu0 0.0
    %3124 = vmatpush1.msra.mxu0 0.0
    %3125 = vmatprep.subr.mxu0 0.0
    %3126 = vmatpush1.msra.mxu0 0.0
    %3127 = vmatprep.mubr.f32.mxu0 0.0
    %3128 = vmatmul.mubr.f32.gmra.mrb[0].mxu0 %v3061
    %v3129 = vpop.f32.mrb[0].mxu0
    %v3130 = vadd.f32 0.0, %v3129
    %v3131 = vpop.f32.mrb[0].mxu0
    %3132 = vdwg.mxu0
    %v3134 = vsel %vm403, %v3047, 0
    %3136 = vmatprep.subr.mxu0 0.0
    %3137 = vmatpush1.msra.mxu0 %v2321
    %3138 = vmatprep.subr.mxu0 0.0
    %3139 = vmatpush1.msra.mxu0 0.0
    %3140 = vmatprep.subr.mxu0 0.0
    %3141 = vmatpush1.msra.mxu0 0.0
    %3142 = vmatprep.subr.mxu0 0.0
    %3143 = vmatpush1.msra.mxu0 0.0
    %3144 = vmatprep.subr.mxu0 0.0
    %3145 = vmatpush1.msra.mxu0 0.0
    %3146 = vmatprep.subr.mxu0 0.0
    %3147 = vmatpush1.msra.mxu0 0.0
    %3148 = vmatprep.subr.mxu0 0.0
    %3149 = vmatpush1.msra.mxu0 0.0
    %3150 = vmatprep.subr.mxu0 0.0
    %3151 = vmatpush1.msra.mxu0 0.0
    %3152 = vmatprep.subr.mxu0 0.0
    %3153 = vmatpush1.msra.mxu0 0.0
    %3154 = vmatprep.subr.mxu0 0.0
    %3155 = vmatpush1.msra.mxu0 0.0
    %3156 = vmatprep.subr.mxu0 0.0
    %3157 = vmatpush1.msra.mxu0 0.0
    %3158 = vmatprep.subr.mxu0 0.0
    %3159 = vmatpush1.msra.mxu0 0.0
    %3160 = vmatprep.subr.mxu0 0.0
    %3161 = vmatpush1.msra.mxu0 0.0
    %3162 = vmatprep.subr.mxu0 0.0
    %3163 = vmatpush1.msra.mxu0 0.0
    %3164 = vmatprep.subr.mxu0 0.0
    %3165 = vmatpush1.msra.mxu0 0.0
    %3166 = vmatprep.subr.mxu0 0.0
    %3167 = vmatpush1.msra.mxu0 0.0
    %3168 = vmatprep.subr.mxu0 0.0
    %3169 = vmatpush1.msra.mxu0 0.0
    %3170 = vmatprep.subr.mxu0 0.0
    %3171 = vmatpush1.msra.mxu0 0.0
    %3172 = vmatprep.subr.mxu0 0.0
    %3173 = vmatpush1.msra.mxu0 0.0
    %3174 = vmatprep.subr.mxu0 0.0
    %3175 = vmatpush1.msra.mxu0 0.0
    %3176 = vmatprep.subr.mxu0 0.0
    %3177 = vmatpush1.msra.mxu0 0.0
    %3178 = vmatprep.subr.mxu0 0.0
    %3179 = vmatpush1.msra.mxu0 0.0
    %3180 = vmatprep.subr.mxu0 0.0
    %3181 = vmatpush1.msra.mxu0 0.0
    %3182 = vmatprep.subr.mxu0 0.0
    %3183 = vmatpush1.msra.mxu0 0.0
    %3184 = vmatprep.subr.mxu0 0.0
    %3185 = vmatpush1.msra.mxu0 0.0
    %3186 = vmatprep.subr.mxu0 0.0
    %3187 = vmatpush1.msra.mxu0 0.0
    %3188 = vmatprep.subr.mxu0 0.0
    %3189 = vmatpush1.msra.mxu0 0.0
    %3190 = vmatprep.subr.mxu0 0.0
    %3191 = vmatpush1.msra.mxu0 0.0
    %3192 = vmatprep.subr.mxu0 0.0
    %3193 = vmatpush1.msra.mxu0 0.0
    %3194 = vmatprep.subr.mxu0 0.0
    %3195 = vmatpush1.msra.mxu0 0.0
    %3196 = vmatprep.subr.mxu0 0.0
    %3197 = vmatpush1.msra.mxu0 0.0
    %3198 = vmatprep.subr.mxu0 0.0
    %3199 = vmatpush1.msra.mxu0 0.0
    %3200 = vmatprep.mubr.f32.mxu0 0.0
    %3201 = vmatmul.mubr.f32.gmra.mrb[0].mxu0 %v3134
    %v3202 = vpop.f32.mrb[0].mxu0
    %v3203 = vadd.f32 0.0, %v3202
    %v3204 = vpop.f32.mrb[0].mxu0
    %3205 = vdwg.mxu0
    %v3207 = vsel %vm403, %v3049, 0
    %3209 = vmatprep.subr.mxu0 0.0
    %3210 = vmatpush1.msra.mxu0 %v2355
    %3211 = vmatprep.subr.mxu0 0.0
    %3212 = vmatpush1.msra.mxu0 0.0
    %3213 = vmatprep.subr.mxu0 0.0
    %3214 = vmatpush1.msra.mxu0 0.0
    %3215 = vmatprep.subr.mxu0 0.0
    %3216 = vmatpush1.msra.mxu0 0.0
    %3217 = vmatprep.subr.mxu0 0.0
    %3218 = vmatpush1.msra.mxu0 0.0
    %3219 = vmatprep.subr.mxu0 0.0
    %3220 = vmatpush1.msra.mxu0 0.0
    %3221 = vmatprep.subr.mxu0 0.0
    %3222 = vmatpush1.msra.mxu0 0.0
    %3223 = vmatprep.subr.mxu0 0.0
    %3224 = vmatpush1.msra.mxu0 0.0
    %3225 = vmatprep.subr.mxu0 0.0
    %3226 = vmatpush1.msra.mxu0 0.0
    %3227 = vmatprep.subr.mxu0 0.0
    %3228 = vmatpush1.msra.mxu0 0.0
    %3229 = vmatprep.subr.mxu0 0.0
    %3230 = vmatpush1.msra.mxu0 0.0
    %3231 = vmatprep.subr.mxu0 0.0
    %3232 = vmatpush1.msra.mxu0 0.0
    %3233 = vmatprep.subr.mxu0 0.0
    %3234 = vmatpush1.msra.mxu0 0.0
    %3235 = vmatprep.subr.mxu0 0.0
    %3236 = vmatpush1.msra.mxu0 0.0
    %3237 = vmatprep.subr.mxu0 0.0
    %3238 = vmatpush1.msra.mxu0 0.0
    %3239 = vmatprep.subr.mxu0 0.0
    %3240 = vmatpush1.msra.mxu0 0.0
    %3241 = vmatprep.subr.mxu0 0.0
    %3242 = vmatpush1.msra.mxu0 0.0
    %3243 = vmatprep.subr.mxu0 0.0
    %3244 = vmatpush1.msra.mxu0 0.0
    %3245 = vmatprep.subr.mxu0 0.0
    %3246 = vmatpush1.msra.mxu0 0.0
    %3247 = vmatprep.subr.mxu0 0.0
    %3248 = vmatpush1.msra.mxu0 0.0
    %3249 = vmatprep.subr.mxu0 0.0
    %3250 = vmatpush1.msra.mxu0 0.0
    %3251 = vmatprep.subr.mxu0 0.0
    %3252 = vmatpush1.msra.mxu0 0.0
    %3253 = vmatprep.subr.mxu0 0.0
    %3254 = vmatpush1.msra.mxu0 0.0
    %3255 = vmatprep.subr.mxu0 0.0
    %3256 = vmatpush1.msra.mxu0 0.0
    %3257 = vmatprep.subr.mxu0 0.0
    %3258 = vmatpush1.msra.mxu0 0.0
    %3259 = vmatprep.subr.mxu0 0.0
    %3260 = vmatpush1.msra.mxu0 0.0
    %3261 = vmatprep.subr.mxu0 0.0
    %3262 = vmatpush1.msra.mxu0 0.0
    %3263 = vmatprep.subr.mxu0 0.0
    %3264 = vmatpush1.msra.mxu0 0.0
    %3265 = vmatprep.subr.mxu0 0.0
    %3266 = vmatpush1.msra.mxu0 0.0
    %3267 = vmatprep.subr.mxu0 0.0
    %3268 = vmatpush1.msra.mxu0 0.0
    %3269 = vmatprep.subr.mxu0 0.0
    %3270 = vmatpush1.msra.mxu0 0.0
    %3271 = vmatprep.subr.mxu0 0.0
    %3272 = vmatpush1.msra.mxu0 0.0
    %3273 = vmatprep.mubr.f32.mxu0 0.0
    %3274 = vmatmul.mubr.f32.gmra.mrb[0].mxu0 %v3207
    %v3275 = vpop.f32.mrb[0].mxu0
    %v3276 = vadd.f32 0.0, %v3275
    %v3277 = vpop.f32.mrb[0].mxu0
    %3278 = vdwg.mxu0
    %v3280 = vsel %vm403, %v3051, 0
    %3282 = vmatprep.subr.mxu0 0.0
    %3283 = vmatpush1.msra.mxu0 %v2357
    %3284 = vmatprep.subr.mxu0 0.0
    %3285 = vmatpush1.msra.mxu0 0.0
    %3286 = vmatprep.subr.mxu0 0.0
    %3287 = vmatpush1.msra.mxu0 0.0
    %3288 = vmatprep.subr.mxu0 0.0
    %3289 = vmatpush1.msra.mxu0 0.0
    %3290 = vmatprep.subr.mxu0 0.0
    %3291 = vmatpush1.msra.mxu0 0.0
    %3292 = vmatprep.subr.mxu0 0.0
    %3293 = vmatpush1.msra.mxu0 0.0
    %3294 = vmatprep.subr.mxu0 0.0
    %3295 = vmatpush1.msra.mxu0 0.0
    %3296 = vmatprep.subr.mxu0 0.0
    %3297 = vmatpush1.msra.mxu0 0.0
    %3298 = vmatprep.subr.mxu0 0.0
    %3299 = vmatpush1.msra.mxu0 0.0
    %3300 = vmatprep.subr.mxu0 0.0
    %3301 = vmatpush1.msra.mxu0 0.0
    %3302 = vmatprep.subr.mxu0 0.0
    %3303 = vmatpush1.msra.mxu0 0.0
    %3304 = vmatprep.subr.mxu0 0.0
    %3305 = vmatpush1.msra.mxu0 0.0
    %3306 = vmatprep.subr.mxu0 0.0
    %3307 = vmatpush1.msra.mxu0 0.0
    %3308 = vmatprep.subr.mxu0 0.0
    %3309 = vmatpush1.msra.mxu0 0.0
    %3310 = vmatprep.subr.mxu0 0.0
    %3311 = vmatpush1.msra.mxu0 0.0
    %3312 = vmatprep.subr.mxu0 0.0
    %3313 = vmatpush1.msra.mxu0 0.0
    %3314 = vmatprep.subr.mxu0 0.0
    %3315 = vmatpush1.msra.mxu0 0.0
    %3316 = vmatprep.subr.mxu0 0.0
    %3317 = vmatpush1.msra.mxu0 0.0
    %3318 = vmatprep.subr.mxu0 0.0
    %3319 = vmatpush1.msra.mxu0 0.0
    %3320 = vmatprep.subr.mxu0 0.0
    %3321 = vmatpush1.msra.mxu0 0.0
    %3322 = vmatprep.subr.mxu0 0.0
    %3323 = vmatpush1.msra.mxu0 0.0
    %3324 = vmatprep.subr.mxu0 0.0
    %3325 = vmatpush1.msra.mxu0 0.0
    %3326 = vmatprep.subr.mxu0 0.0
    %3327 = vmatpush1.msra.mxu0 0.0
    %3328 = vmatprep.subr.mxu0 0.0
    %3329 = vmatpush1.msra.mxu0 0.0
    %3330 = vmatprep.subr.mxu0 0.0
    %3331 = vmatpush1.msra.mxu0 0.0
    %3332 = vmatprep.subr.mxu0 0.0
    %3333 = vmatpush1.msra.mxu0 0.0
    %3334 = vmatprep.subr.mxu0 0.0
    %3335 = vmatpush1.msra.mxu0 0.0
    %3336 = vmatprep.subr.mxu0 0.0
    %3337 = vmatpush1.msra.mxu0 0.0
    %3338 = vmatprep.subr.mxu0 0.0
    %3339 = vmatpush1.msra.mxu0 0.0
    %3340 = vmatprep.subr.mxu0 0.0
    %3341 = vmatpush1.msra.mxu0 0.0
    %3342 = vmatprep.subr.mxu0 0.0
    %3343 = vmatpush1.msra.mxu0 0.0
    %3344 = vmatprep.subr.mxu0 0.0
    %3345 = vmatpush1.msra.mxu0 0.0
    %3346 = vmatprep.mubr.f32.mxu0 0.0
    %3347 = vmatmul.mubr.f32.gmra.mrb[0].mxu0 %v3280
    %v3348 = vpop.f32.mrb[0].mxu0
    %v3349 = vadd.f32 0.0, %v3348
    %v3350 = vpop.f32.mrb[0].mxu0
    %3351 = vdwg.mxu0
    %v3353 = vsel %vm403, %v3053, 0
    %3355 = vmatprep.subr.mxu0 0.0
    %3356 = vmatpush1.msra.mxu0 %v2361
    %3357 = vmatprep.subr.mxu0 0.0
    %3358 = vmatpush1.msra.mxu0 0.0
    %3359 = vmatprep.subr.mxu0 0.0
    %3360 = vmatpush1.msra.mxu0 0.0
    %3361 = vmatprep.subr.mxu0 0.0
    %3362 = vmatpush1.msra.mxu0 0.0
    %3363 = vmatprep.subr.mxu0 0.0
    %3364 = vmatpush1.msra.mxu0 0.0
    %3365 = vmatprep.subr.mxu0 0.0
    %3366 = vmatpush1.msra.mxu0 0.0
    %3367 = vmatprep.subr.mxu0 0.0
    %3368 = vmatpush1.msra.mxu0 0.0
    %3369 = vmatprep.subr.mxu0 0.0
    %3370 = vmatpush1.msra.mxu0 0.0
    %3371 = vmatprep.subr.mxu0 0.0
    %3372 = vmatpush1.msra.mxu0 0.0
    %3373 = vmatprep.subr.mxu0 0.0
    %3374 = vmatpush1.msra.mxu0 0.0
    %3375 = vmatprep.subr.mxu0 0.0
    %3376 = vmatpush1.msra.mxu0 0.0
    %3377 = vmatprep.subr.mxu0 0.0
    %3378 = vmatpush1.msra.mxu0 0.0
    %3379 = vmatprep.subr.mxu0 0.0
    %3380 = vmatpush1.msra.mxu0 0.0
    %3381 = vmatprep.subr.mxu0 0.0
    %3382 = vmatpush1.msra.mxu0 0.0
    %3383 = vmatprep.subr.mxu0 0.0
    %3384 = vmatpush1.msra.mxu0 0.0
    %3385 = vmatprep.subr.mxu0 0.0
    %3386 = vmatpush1.msra.mxu0 0.0
    %3387 = vmatprep.subr.mxu0 0.0
    %3388 = vmatpush1.msra.mxu0 0.0
    %3389 = vmatprep.subr.mxu0 0.0
    %3390 = vmatpush1.msra.mxu0 0.0
    %3391 = vmatprep.subr.mxu0 0.0
    %3392 = vmatpush1.msra.mxu0 0.0
    %3393 = vmatprep.subr.mxu0 0.0
    %3394 = vmatpush1.msra.mxu0 0.0
    %3395 = vmatprep.subr.mxu0 0.0
    %3396 = vmatpush1.msra.mxu0 0.0
    %3397 = vmatprep.subr.mxu0 0.0
    %3398 = vmatpush1.msra.mxu0 0.0
    %3399 = vmatprep.subr.mxu0 0.0
    %3400 = vmatpush1.msra.mxu0 0.0
    %3401 = vmatprep.subr.mxu0 0.0
    %3402 = vmatpush1.msra.mxu0 0.0
    %3403 = vmatprep.subr.mxu0 0.0
    %3404 = vmatpush1.msra.mxu0 0.0
    %3405 = vmatprep.subr.mxu0 0.0
    %3406 = vmatpush1.msra.mxu0 0.0
    %3407 = vmatprep.subr.mxu0 0.0
    %3408 = vmatpush1.msra.mxu0 0.0
    %3409 = vmatprep.subr.mxu0 0.0
    %3410 = vmatpush1.msra.mxu0 0.0
    %3411 = vmatprep.subr.mxu0 0.0
    %3412 = vmatpush1.msra.mxu0 0.0
    %3413 = vmatprep.subr.mxu0 0.0
    %3414 = vmatpush1.msra.mxu0 0.0
    %3415 = vmatprep.subr.mxu0 0.0
    %3416 = vmatpush1.msra.mxu0 0.0
    %3417 = vmatprep.subr.mxu0 0.0
    %3418 = vmatpush1.msra.mxu0 0.0
    %3419 = vmatprep.mubr.f32.mxu0 0.0
    %3420 = vmatmul.mubr.f32.gmra.mrb[0].mxu0 %v3353
    %v3421 = vpop.f32.mrb[0].mxu0
    %v3422 = vadd.f32 0.0, %v3421
    %v3423 = vpop.f32.mrb[0].mxu0
    %3424 = vdwg.mxu0
    %v3426 = vsel %vm403, %v3055, 0
    %3428 = vmatprep.subr.mxu0 0.0
    %3429 = vmatpush1.msra.mxu0 %v2363
    %3430 = vmatprep.subr.mxu0 0.0
    %3431 = vmatpush1.msra.mxu0 0.0
    %3432 = vmatprep.subr.mxu0 0.0
    %3433 = vmatpush1.msra.mxu0 0.0
    %3434 = vmatprep.subr.mxu0 0.0
    %3435 = vmatpush1.msra.mxu0 0.0
    %3436 = vmatprep.subr.mxu0 0.0
    %3437 = vmatpush1.msra.mxu0 0.0
    %3438 = vmatprep.subr.mxu0 0.0
    %3439 = vmatpush1.msra.mxu0 0.0
    %3440 = vmatprep.subr.mxu0 0.0
    %3441 = vmatpush1.msra.mxu0 0.0
    %3442 = vmatprep.subr.mxu0 0.0
    %3443 = vmatpush1.msra.mxu0 0.0
    %3444 = vmatprep.subr.mxu0 0.0
    %3445 = vmatpush1.msra.mxu0 0.0
    %3446 = vmatprep.subr.mxu0 0.0
    %3447 = vmatpush1.msra.mxu0 0.0
    %3448 = vmatprep.subr.mxu0 0.0
    %3449 = vmatpush1.msra.mxu0 0.0
    %3450 = vmatprep.subr.mxu0 0.0
    %3451 = vmatpush1.msra.mxu0 0.0
    %3452 = vmatprep.subr.mxu0 0.0
    %3453 = vmatpush1.msra.mxu0 0.0
    %3454 = vmatprep.subr.mxu0 0.0
    %3455 = vmatpush1.msra.mxu0 0.0
    %3456 = vmatprep.subr.mxu0 0.0
    %3457 = vmatpush1.msra.mxu0 0.0
    %3458 = vmatprep.subr.mxu0 0.0
    %3459 = vmatpush1.msra.mxu0 0.0
    %3460 = vmatprep.subr.mxu0 0.0
    %3461 = vmatpush1.msra.mxu0 0.0
    %3462 = vmatprep.subr.mxu0 0.0
    %3463 = vmatpush1.msra.mxu0 0.0
    %3464 = vmatprep.subr.mxu0 0.0
    %3465 = vmatpush1.msra.mxu0 0.0
    %3466 = vmatprep.subr.mxu0 0.0
    %3467 = vmatpush1.msra.mxu0 0.0
    %3468 = vmatprep.subr.mxu0 0.0
    %3469 = vmatpush1.msra.mxu0 0.0
    %3470 = vmatprep.subr.mxu0 0.0
    %3471 = vmatpush1.msra.mxu0 0.0
    %3472 = vmatprep.subr.mxu0 0.0
    %3473 = vmatpush1.msra.mxu0 0.0
    %3474 = vmatprep.subr.mxu0 0.0
    %3475 = vmatpush1.msra.mxu0 0.0
    %3476 = vmatprep.subr.mxu0 0.0
    %3477 = vmatpush1.msra.mxu0 0.0
    %3478 = vmatprep.subr.mxu0 0.0
    %3479 = vmatpush1.msra.mxu0 0.0
    %3480 = vmatprep.subr.mxu0 0.0
    %3481 = vmatpush1.msra.mxu0 0.0
    %3482 = vmatprep.subr.mxu0 0.0
    %3483 = vmatpush1.msra.mxu0 0.0
    %3484 = vmatprep.subr.mxu0 0.0
    %3485 = vmatpush1.msra.mxu0 0.0
    %3486 = vmatprep.subr.mxu0 0.0
    %3487 = vmatpush1.msra.mxu0 0.0
    %3488 = vmatprep.subr.mxu0 0.0
    %3489 = vmatpush1.msra.mxu0 0.0
    %3490 = vmatprep.subr.mxu0 0.0
    %3491 = vmatpush1.msra.mxu0 0.0
    %3492 = vmatprep.mubr.f32.mxu0 0.0
    %3493 = vmatmul.mubr.f32.gmra.mrb[0].mxu0 %v3426
    %v3494 = vpop.f32.mrb[0].mxu0
    %v3495 = vadd.f32 0.0, %v3494
    %v3496 = vpop.f32.mrb[0].mxu0
    %3497 = vdwg.mxu0
    %v3499 = vsel %vm403, %v3057, 0
    %3501 = vmatprep.subr.mxu0 0.0
    %3502 = vmatpush1.msra.mxu0 %v2367
    %3503 = vmatprep.subr.mxu0 0.0
    %3504 = vmatpush1.msra.mxu0 0.0
    %3505 = vmatprep.subr.mxu0 0.0
    %3506 = vmatpush1.msra.mxu0 0.0
    %3507 = vmatprep.subr.mxu0 0.0
    %3508 = vmatpush1.msra.mxu0 0.0
    %3509 = vmatprep.subr.mxu0 0.0
    %3510 = vmatpush1.msra.mxu0 0.0
    %3511 = vmatprep.subr.mxu0 0.0
    %3512 = vmatpush1.msra.mxu0 0.0
    %3513 = vmatprep.subr.mxu0 0.0
    %3514 = vmatpush1.msra.mxu0 0.0
    %3515 = vmatprep.subr.mxu0 0.0
    %3516 = vmatpush1.msra.mxu0 0.0
    %3517 = vmatprep.subr.mxu0 0.0
    %3518 = vmatpush1.msra.mxu0 0.0
    %3519 = vmatprep.subr.mxu0 0.0
    %3520 = vmatpush1.msra.mxu0 0.0
    %3521 = vmatprep.subr.mxu0 0.0
    %3522 = vmatpush1.msra.mxu0 0.0
    %3523 = vmatprep.subr.mxu0 0.0
    %3524 = vmatpush1.msra.mxu0 0.0
    %3525 = vmatprep.subr.mxu0 0.0
    %3526 = vmatpush1.msra.mxu0 0.0
    %3527 = vmatprep.subr.mxu0 0.0
    %3528 = vmatpush1.msra.mxu0 0.0
    %3529 = vmatprep.subr.mxu0 0.0
    %3530 = vmatpush1.msra.mxu0 0.0
    %3531 = vmatprep.subr.mxu0 0.0
    %3532 = vmatpush1.msra.mxu0 0.0
    %3533 = vmatprep.subr.mxu0 0.0
    %3534 = vmatpush1.msra.mxu0 0.0
    %3535 = vmatprep.subr.mxu0 0.0
    %3536 = vmatpush1.msra.mxu0 0.0
    %3537 = vmatprep.subr.mxu0 0.0
    %3538 = vmatpush1.msra.mxu0 0.0
    %3539 = vmatprep.subr.mxu0 0.0
    %3540 = vmatpush1.msra.mxu0 0.0
    %3541 = vmatprep.subr.mxu0 0.0
    %3542 = vmatpush1.msra.mxu0 0.0
    %3543 = vmatprep.subr.mxu0 0.0
    %3544 = vmatpush1.msra.mxu0 0.0
    %3545 = vmatprep.subr.mxu0 0.0
    %3546 = vmatpush1.msra.mxu0 0.0
    %3547 = vmatprep.subr.mxu0 0.0
    %3548 = vmatpush1.msra.mxu0 0.0
    %3549 = vmatprep.subr.mxu0 0.0
    %3550 = vmatpush1.msra.mxu0 0.0
    %3551 = vmatprep.subr.mxu0 0.0
    %3552 = vmatpush1.msra.mxu0 0.0
    %3553 = vmatprep.subr.mxu0 0.0
    %3554 = vmatpush1.msra.mxu0 0.0
    %3555 = vmatprep.subr.mxu0 0.0
    %3556 = vmatpush1.msra.mxu0 0.0
    %3557 = vmatprep.subr.mxu0 0.0
    %3558 = vmatpush1.msra.mxu0 0.0
    %3559 = vmatprep.subr.mxu0 0.0
    %3560 = vmatpush1.msra.mxu0 0.0
    %3561 = vmatprep.subr.mxu0 0.0
    %3562 = vmatpush1.msra.mxu0 0.0
    %3563 = vmatprep.subr.mxu0 0.0
    %3564 = vmatpush1.msra.mxu0 0.0
    %3565 = vmatprep.mubr.f32.mxu0 0.0
    %3566 = vmatmul.mubr.f32.gmra.mrb[0].mxu0 %v3499
    %v3567 = vpop.f32.mrb[0].mxu0
    %v3568 = vadd.f32 0.0, %v3567
    %v3569 = vpop.f32.mrb[0].mxu0
    %3570 = vdwg.mxu0
    %v3572 = vsel %vm403, %v3059, 0
    %3574 = vmatprep.subr.mxu0 0.0
    %3575 = vmatpush1.msra.mxu0 %v2369
    %3576 = vmatprep.subr.mxu0 0.0
    %3577 = vmatpush1.msra.mxu0 0.0
    %3578 = vmatprep.subr.mxu0 0.0
    %3579 = vmatpush1.msra.mxu0 0.0
    %3580 = vmatprep.subr.mxu0 0.0
    %3581 = vmatpush1.msra.mxu0 0.0
    %3582 = vmatprep.subr.mxu0 0.0
    %3583 = vmatpush1.msra.mxu0 0.0
    %3584 = vmatprep.subr.mxu0 0.0
    %3585 = vmatpush1.msra.mxu0 0.0
    %3586 = vmatprep.subr.mxu0 0.0
    %3587 = vmatpush1.msra.mxu0 0.0
    %3588 = vmatprep.subr.mxu0 0.0
    %3589 = vmatpush1.msra.mxu0 0.0
    %3590 = vmatprep.subr.mxu0 0.0
    %3591 = vmatpush1.msra.mxu0 0.0
    %3592 = vmatprep.subr.mxu0 0.0
    %3593 = vmatpush1.msra.mxu0 0.0
    %3594 = vmatprep.subr.mxu0 0.0
    %3595 = vmatpush1.msra.mxu0 0.0
    %3596 = vmatprep.subr.mxu0 0.0
    %3597 = vmatpush1.msra.mxu0 0.0
    %3598 = vmatprep.subr.mxu0 0.0
    %3599 = vmatpush1.msra.mxu0 0.0
    %3600 = vmatprep.subr.mxu0 0.0
    %3601 = vmatpush1.msra.mxu0 0.0
    %3602 = vmatprep.subr.mxu0 0.0
    %3603 = vmatpush1.msra.mxu0 0.0
    %3604 = vmatprep.subr.mxu0 0.0
    %3605 = vmatpush1.msra.mxu0 0.0
    %3606 = vmatprep.subr.mxu0 0.0
    %3607 = vmatpush1.msra.mxu0 0.0
    %3608 = vmatprep.subr.mxu0 0.0
    %3609 = vmatpush1.msra.mxu0 0.0
    %3610 = vmatprep.subr.mxu0 0.0
    %3611 = vmatpush1.msra.mxu0 0.0
    %3612 = vmatprep.subr.mxu0 0.0
    %3613 = vmatpush1.msra.mxu0 0.0
    %3614 = vmatprep.subr.mxu0 0.0
    %3615 = vmatpush1.msra.mxu0 0.0
    %3616 = vmatprep.subr.mxu0 0.0
    %3617 = vmatpush1.msra.mxu0 0.0
    %3618 = vmatprep.subr.mxu0 0.0
    %3619 = vmatpush1.msra.mxu0 0.0
    %3620 = vmatprep.subr.mxu0 0.0
    %3621 = vmatpush1.msra.mxu0 0.0
    %3622 = vmatprep.subr.mxu0 0.0
    %3623 = vmatpush1.msra.mxu0 0.0
    %3624 = vmatprep.subr.mxu0 0.0
    %3625 = vmatpush1.msra.mxu0 0.0
    %3626 = vmatprep.subr.mxu0 0.0
    %3627 = vmatpush1.msra.mxu0 0.0
    %3628 = vmatprep.subr.mxu0 0.0
    %3629 = vmatpush1.msra.mxu0 0.0
    %3630 = vmatprep.subr.mxu0 0.0
    %3631 = vmatpush1.msra.mxu0 0.0
    %3632 = vmatprep.subr.mxu0 0.0
    %3633 = vmatpush1.msra.mxu0 0.0
    %3634 = vmatprep.subr.mxu0 0.0
    %3635 = vmatpush1.msra.mxu0 0.0
    %3636 = vmatprep.subr.mxu0 0.0
    %3637 = vmatpush1.msra.mxu0 0.0
    %3638 = vmatprep.mubr.f32.mxu0 0.0
    %3639 = vmatmul.mubr.f32.gmra.mrb[0].mxu0 %v3572
    %v3640 = vpop.f32.mrb[0].mxu0
    %v3641 = vadd.f32 0.0, %v3640
    %v3642 = vpop.f32.mrb[0].mxu0
    %3643 = vdwg.mxu0
    %3646 = vrot.lane.b32.xlu0 %v3276, 8
    %v3647 = vpop.permute.xlu0 %3646
    %3648 = vrot.lane.b32.xlu0 %v3349, 8
    %v3649 = vpop.permute.xlu0 %3648
    %3654 = vrot.lane.b32.xlu0 %v3422, 16
    %v3655 = vpop.permute.xlu0 %3654
    %3656 = vrot.lane.b32.xlu0 %v3495, 16
    %v3657 = vpop.permute.xlu0 %3656
    %3662 = vrot.lane.b32.xlu0 %v3568, 24
    %v3663 = vpop.permute.xlu0 %3662
    %3664 = vrot.lane.b32.xlu0 %v3641, 24
    %v3665 = vpop.permute.xlu0 %3664
    %v3668 = vsel %vm403, %v3130, %v3647
    %v3669 = vsel %vm403, %v3203, %v3649
    %v3670 = vsel %vm1702, %v3668, %v3655
    %v3671 = vsel %vm1702, %v3669, %v3657
    %v3672 = vsel %vm1705, %v3670, %v3663
    %v3673 = vsel %vm1705, %v3671, %v3665
    %s3674 = scalar_lea.vmem %s2, 224
    %v3675 = vld [vmem:[%s3674] sm:$0xff]
    %v3676 = vld [vmem:[%s3674 + $0x8] sm:$0xff]
    %v3677 = vld [vmem:[%s3674 + $0x10] sm:$0xff]
    %v3678 = vld [vmem:[%s3674 + $0x18] sm:$0xff]
    %v3679 = vlaneseq
    %v3680 = vshrl.u32 %v3679, 7
    %v3681 = vsub.s32 3, %v3680
    %v3682 = vrot.slane %v2026, %v3681
    %v3684 = vsel %vm58, %v3672, 0
    %v3687 = vsel %vm58, %v3673, 0
    %3689 = vmatprep.subr.mxu0 0.0
    %3690 = vmatpush1.msra.mxu0 %v3675
    %3691 = vmatprep.subr.mxu0 0.0
    %3692 = vmatpush1.msra.mxu0 %v3676
    %3693 = vmatprep.subr.mxu0 0.0
    %3694 = vmatpush1.msra.mxu0 %v3677
    %3695 = vmatprep.subr.mxu0 0.0
    %3696 = vmatpush1.msra.mxu0 %v3678
    %3697 = vmatprep.subr.mxu0 0.0
    %3698 = vmatpush1.msra.mxu0 0.0
    %3699 = vmatprep.subr.mxu0 0.0
    %3700 = vmatpush1.msra.mxu0 0.0
    %3701 = vmatprep.subr.mxu0 0.0
    %3702 = vmatpush1.msra.mxu0 0.0
    %3703 = vmatprep.subr.mxu0 0.0
    %3704 = vmatpush1.msra.mxu0 0.0
    %3705 = vmatprep.subr.mxu0 0.0
    %3706 = vmatpush1.msra.mxu0 0.0
    %3707 = vmatprep.subr.mxu0 0.0
    %3708 = vmatpush1.msra.mxu0 0.0
    %3709 = vmatprep.subr.mxu0 0.0
    %3710 = vmatpush1.msra.mxu0 0.0
    %3711 = vmatprep.subr.mxu0 0.0
    %3712 = vmatpush1.msra.mxu0 0.0
    %3713 = vmatprep.subr.mxu0 0.0
    %3714 = vmatpush1.msra.mxu0 0.0
    %3715 = vmatprep.subr.mxu0 0.0
    %3716 = vmatpush1.msra.mxu0 0.0
    %3717 = vmatprep.subr.mxu0 0.0
    %3718 = vmatpush1.msra.mxu0 0.0
    %3719 = vmatprep.subr.mxu0 0.0
    %3720 = vmatpush1.msra.mxu0 0.0
    %3721 = vmatprep.subr.mxu0 0.0
    %3722 = vmatpush1.msra.mxu0 0.0
    %3723 = vmatprep.subr.mxu0 0.0
    %3724 = vmatpush1.msra.mxu0 0.0
    %3725 = vmatprep.subr.mxu0 0.0
    %3726 = vmatpush1.msra.mxu0 0.0
    %3727 = vmatprep.subr.mxu0 0.0
    %3728 = vmatpush1.msra.mxu0 0.0
    %3729 = vmatprep.subr.mxu0 0.0
    %3730 = vmatpush1.msra.mxu0 0.0
    %3731 = vmatprep.subr.mxu0 0.0
    %3732 = vmatpush1.msra.mxu0 0.0
    %3733 = vmatprep.subr.mxu0 0.0
    %3734 = vmatpush1.msra.mxu0 0.0
    %3735 = vmatprep.subr.mxu0 0.0
    %3736 = vmatpush1.msra.mxu0 0.0
    %3737 = vmatprep.subr.mxu0 0.0
    %3738 = vmatpush1.msra.mxu0 0.0
    %3739 = vmatprep.subr.mxu0 0.0
    %3740 = vmatpush1.msra.mxu0 0.0
    %3741 = vmatprep.subr.mxu0 0.0
    %3742 = vmatpush1.msra.mxu0 0.0
    %3743 = vmatprep.subr.mxu0 0.0
    %3744 = vmatpush1.msra.mxu0 0.0
    %3745 = vmatprep.subr.mxu0 0.0
    %3746 = vmatpush1.msra.mxu0 0.0
    %3747 = vmatprep.subr.mxu0 0.0
    %3748 = vmatpush1.msra.mxu0 0.0
    %3749 = vmatprep.subr.mxu0 0.0
    %3750 = vmatpush1.msra.mxu0 0.0
    %3751 = vmatprep.subr.mxu0 0.0
    %3752 = vmatpush1.msra.mxu0 0.0
    %3753 = vmatprep.mubr.f32.mxu0 0.0
    %3754 = vmatmul.mubr.f32.gmra.mrb[0].mxu0 %v3684
    %v3755 = vpop.f32.mrb[0].mxu0
    %v3756 = vadd.f32 %v3682, %v3755
    %v3757 = vpop.f32.mrb[0].mxu0
    %3758 = vmatprep.mubr.f32.mxu0 0.0
    %3759 = vmatmul.mubr.f32.gmra.mrb[0].mxu0 %v3687
    %v3760 = vpop.f32.mrb[0].mxu0
    %v3761 = vadd.f32 %v3682, %v3760
    %v3762 = vpop.f32.mrb[0].mxu0
    %3763 = vdwg.mxu0
    %v3764 = vadd.f32 %v2023, %v3756
    %v3765 = vadd.f32 %v2024, %v3761
    %v3766 = vsel %vm58, %v3764, 0.0
    %3767 = vadd.xlane.f32.xlu0 %v3766
    %v3768 = vpop.xlane.xlu0 %3767
    %v3769 = vsel %vm58, %v3765, 0.0
    %3770 = vadd.xlane.f32.xlu0 %v3769
    %v3771 = vpop.xlane.xlu0 %3770
    %v3772 = vmul.f32 %v3768, %v65
    %v3773 = vmul.f32 %v3771, %v65
    %v3774 = vsub.f32 %v3764, %v3772
    %v3775 = vsub.f32 %v3765, %v3773
    %v3776 = vmul.f32 %v3774, %v3774
    %v3777 = vmul.f32 %v3775, %v3775
    %v3778 = vsel %vm58, %v3776, 0.0
    %3779 = vadd.xlane.f32.xlu0 %v3778
    %v3780 = vpop.xlane.xlu0 %3779
    %v3781 = vsel %vm58, %v3777, 0.0
    %3782 = vadd.xlane.f32.xlu0 %v3781
    %v3783 = vpop.xlane.xlu0 %3782
    %v3784 = vmul.f32 %v3780, %v65
    %v3785 = vmul.f32 %v3783, %v65
    %v3786 = vlaneseq
    %v3787 = vshrl.u32 %v3786, 7
    %v3788 = vsub.s32 0, %v3787
    %v3789 = vrot.slane %v2027, %v3788
    %v3790 = vmul.f32 %v3789, %v3774
    %v3791 = vmul.f32 %v3789, %v3775
    %v3792 = vadd.f32 %v3784, 1e-05
    %v3793 = vadd.f32 %v3785, 1e-05
    %v3794 = vrsqrt.pop %v3792
    %v3795 = vrsqrt.pop %v3793
    %v3796 = vmul.f32 %v3790, %v3794
    %v3797 = vmul.f32 %v3791, %v3795
    %v3798 = vlaneseq
    %v3799 = vshrl.u32 %v3798, 7
    %v3800 = vsub.s32 1, %v3799
    %v3801 = vrot.slane %v2027, %v3800
    %v3802 = vadd.f32 %v3796, %v3801
    %v3803 = vadd.f32 %v3797, %v3801
    %s3804 = scalar_lea.vmem [#allocation5], 32
    %v3805 = vld [vmem:[%s3804] sm:$0xff]
    %v3806 = vld [vmem:[%s3804 + $0x8] sm:$0xff]
    %v3807 = vld [vmem:[%s3804 + $0x10] sm:$0xff]
    %v3808 = vld [vmem:[%s3804 + $0x18] sm:$0xff]
    %v3809 = vlaneseq
    %v3810 = vshrl.u32 %v3809, 7
    %v3811 = vsub.s32 4, %v3810
    %v3812 = vrot.slane %v2026, %v3811
    %v3814 = vsel %vm58, %v3802, 0
    %v3817 = vsel %vm58, %v3803, 0
    %3819 = vmatprep.subr.mxu0 0.0
    %3820 = vmatpush1.msra.mxu0 %v3805
    %3821 = vmatprep.subr.mxu0 0.0
    %3822 = vmatpush1.msra.mxu0 %v3806
    %3823 = vmatprep.subr.mxu0 0.0
    %3824 = vmatpush1.msra.mxu0 %v3807
    %3825 = vmatprep.subr.mxu0 0.0
    %3826 = vmatpush1.msra.mxu0 %v3808
    %3827 = vmatprep.subr.mxu0 0.0
    %3828 = vmatpush1.msra.mxu0 0.0
    %3829 = vmatprep.subr.mxu0 0.0
    %3830 = vmatpush1.msra.mxu0 0.0
    %3831 = vmatprep.subr.mxu0 0.0
    %3832 = vmatpush1.msra.mxu0 0.0
    %3833 = vmatprep.subr.mxu0 0.0
    %3834 = vmatpush1.msra.mxu0 0.0
    %3835 = vmatprep.subr.mxu0 0.0
    %3836 = vmatpush1.msra.mxu0 0.0
    %3837 = vmatprep.subr.mxu0 0.0
    %3838 = vmatpush1.msra.mxu0 0.0
    %3839 = vmatprep.subr.mxu0 0.0
    %3840 = vmatpush1.msra.mxu0 0.0
    %3841 = vmatprep.subr.mxu0 0.0
    %3842 = vmatpush1.msra.mxu0 0.0
    %3843 = vmatprep.subr.mxu0 0.0
    %3844 = vmatpush1.msra.mxu0 0.0
    %3845 = vmatprep.subr.mxu0 0.0
    %3846 = vmatpush1.msra.mxu0 0.0
    %3847 = vmatprep.subr.mxu0 0.0
    %3848 = vmatpush1.msra.mxu0 0.0
    %3849 = vmatprep.subr.mxu0 0.0
    %3850 = vmatpush1.msra.mxu0 0.0
    %3851 = vmatprep.subr.mxu0 0.0
    %3852 = vmatpush1.msra.mxu0 0.0
    %3853 = vmatprep.subr.mxu0 0.0
    %3854 = vmatpush1.msra.mxu0 0.0
    %3855 = vmatprep.subr.mxu0 0.0
    %3856 = vmatpush1.msra.mxu0 0.0
    %3857 = vmatprep.subr.mxu0 0.0
    %3858 = vmatpush1.msra.mxu0 0.0
    %3859 = vmatprep.subr.mxu0 0.0
    %3860 = vmatpush1.msra.mxu0 0.0
    %3861 = vmatprep.subr.mxu0 0.0
    %3862 = vmatpush1.msra.mxu0 0.0
    %3863 = vmatprep.subr.mxu0 0.0
    %3864 = vmatpush1.msra.mxu0 0.0
    %3865 = vmatprep.subr.mxu0 0.0
    %3866 = vmatpush1.msra.mxu0 0.0
    %3867 = vmatprep.subr.mxu0 0.0
    %3868 = vmatpush1.msra.mxu0 0.0
    %3869 = vmatprep.subr.mxu0 0.0
    %3870 = vmatpush1.msra.mxu0 0.0
    %3871 = vmatprep.subr.mxu0 0.0
    %3872 = vmatpush1.msra.mxu0 0.0
    %3873 = vmatprep.subr.mxu0 0.0
    %3874 = vmatpush1.msra.mxu0 0.0
    %3875 = vmatprep.subr.mxu0 0.0
    %3876 = vmatpush1.msra.mxu0 0.0
    %3877 = vmatprep.subr.mxu0 0.0
    %3878 = vmatpush1.msra.mxu0 0.0
    %3879 = vmatprep.subr.mxu0 0.0
    %3880 = vmatpush1.msra.mxu0 0.0
    %3881 = vmatprep.subr.mxu0 0.0
    %3882 = vmatpush1.msra.mxu0 0.0
    %3883 = vmatprep.mubr.f32.mxu0 0.0
    %3884 = vmatmul.mubr.f32.gmra.mrb[0].mxu0 %v3814
    %v3885 = vpop.f32.mrb[0].mxu0
    %v3886 = vadd.f32 %v3812, %v3885
    %v3887 = vpop.f32.mrb[0].mxu0
    %3888 = vmatprep.mubr.f32.mxu0 0.0
    %3889 = vmatmul.mubr.f32.gmra.mrb[0].mxu0 %v3817
    %v3890 = vpop.f32.mrb[0].mxu0
    %v3891 = vadd.f32 %v3812, %v3890
    %v3892 = vpop.f32.mrb[0].mxu0
    %3893 = vdwg.mxu0
    %v3894 = vmax.f32 %v3886, 0.0
    %v3895 = vmax.f32 %v3891, 0.0
    %s3896 = scalar_lea.vmem %s4, 64
    %v3897 = vld [vmem:[%s3896] sm:$0xff]
    %v3898 = vld [vmem:[%s3896 + $0x8] sm:$0xff]
    %v3899 = vld [vmem:[%s3896 + $0x10] sm:$0xff]
    %v3900 = vld [vmem:[%s3896 + $0x18] sm:$0xff]
    %v3901 = vld [vmem:[%s3896 + $0x20] sm:$0xff]
    %v3902 = vld [vmem:[%s3896 + $0x28] sm:$0xff]
    %v3903 = vld [vmem:[%s3896 + $0x30] sm:$0xff]
    %v3904 = vld [vmem:[%s3896 + $0x38] sm:$0xff]
    %v3905 = vlaneseq
    %v3906 = vshrl.u32 %v3905, 7
    %v3907 = vsub.s32 5, %v3906
    %v3908 = vrot.slane %v2026, %v3907
    %v3910 = vsel %vm1941, %v3894, 0
    %v3913 = vsel %vm1941, %v3895, 0
    %3915 = vmatprep.subr.mxu0 0.0
    %3916 = vmatpush1.msra.mxu0 %v3897
    %3917 = vmatprep.subr.mxu0 0.0
    %3918 = vmatpush1.msra.mxu0 %v3898
    %3919 = vmatprep.subr.mxu0 0.0
    %3920 = vmatpush1.msra.mxu0 %v3899
    %3921 = vmatprep.subr.mxu0 0.0
    %3922 = vmatpush1.msra.mxu0 %v3900
    %3923 = vmatprep.subr.mxu0 0.0
    %3924 = vmatpush1.msra.mxu0 %v3901
    %3925 = vmatprep.subr.mxu0 0.0
    %3926 = vmatpush1.msra.mxu0 %v3902
    %3927 = vmatprep.subr.mxu0 0.0
    %3928 = vmatpush1.msra.mxu0 %v3903
    %3929 = vmatprep.subr.mxu0 0.0
    %3930 = vmatpush1.msra.mxu0 %v3904
    %3931 = vmatprep.subr.mxu0 0.0
    %3932 = vmatpush1.msra.mxu0 0.0
    %3933 = vmatprep.subr.mxu0 0.0
    %3934 = vmatpush1.msra.mxu0 0.0
    %3935 = vmatprep.subr.mxu0 0.0
    %3936 = vmatpush1.msra.mxu0 0.0
    %3937 = vmatprep.subr.mxu0 0.0
    %3938 = vmatpush1.msra.mxu0 0.0
    %3939 = vmatprep.subr.mxu0 0.0
    %3940 = vmatpush1.msra.mxu0 0.0
    %3941 = vmatprep.subr.mxu0 0.0
    %3942 = vmatpush1.msra.mxu0 0.0
    %3943 = vmatprep.subr.mxu0 0.0
    %3944 = vmatpush1.msra.mxu0 0.0
    %3945 = vmatprep.subr.mxu0 0.0
    %3946 = vmatpush1.msra.mxu0 0.0
    %3947 = vmatprep.subr.mxu0 0.0
    %3948 = vmatpush1.msra.mxu0 0.0
    %3949 = vmatprep.subr.mxu0 0.0
    %3950 = vmatpush1.msra.mxu0 0.0
    %3951 = vmatprep.subr.mxu0 0.0
    %3952 = vmatpush1.msra.mxu0 0.0
    %3953 = vmatprep.subr.mxu0 0.0
    %3954 = vmatpush1.msra.mxu0 0.0
    %3955 = vmatprep.subr.mxu0 0.0
    %3956 = vmatpush1.msra.mxu0 0.0
    %3957 = vmatprep.subr.mxu0 0.0
    %3958 = vmatpush1.msra.mxu0 0.0
    %3959 = vmatprep.subr.mxu0 0.0
    %3960 = vmatpush1.msra.mxu0 0.0
    %3961 = vmatprep.subr.mxu0 0.0
    %3962 = vmatpush1.msra.mxu0 0.0
    %3963 = vmatprep.subr.mxu0 0.0
    %3964 = vmatpush1.msra.mxu0 0.0
    %3965 = vmatprep.subr.mxu0 0.0
    %3966 = vmatpush1.msra.mxu0 0.0
    %3967 = vmatprep.subr.mxu0 0.0
    %3968 = vmatpush1.msra.mxu0 0.0
    %3969 = vmatprep.subr.mxu0 0.0
    %3970 = vmatpush1.msra.mxu0 0.0
    %3971 = vmatprep.subr.mxu0 0.0
    %3972 = vmatpush1.msra.mxu0 0.0
    %3973 = vmatprep.subr.mxu0 0.0
    %3974 = vmatpush1.msra.mxu0 0.0
    %3975 = vmatprep.subr.mxu0 0.0
    %3976 = vmatpush1.msra.mxu0 0.0
    %3977 = vmatprep.subr.mxu0 0.0
    %3978 = vmatpush1.msra.mxu0 0.0
    %3979 = vmatprep.mubr.f32.mxu0 0.0
    %3980 = vmatmul.mubr.f32.gmra.mrb[0].mxu0 %v3910
    %v3981 = vpop.f32.mrb[0].mxu0
    %v3982 = vadd.f32 %v3908, %v3981
    %v3983 = vpop.f32.mrb[0].mxu0
    %3984 = vmatprep.mubr.f32.mxu0 0.0
    %3985 = vmatmul.mubr.f32.gmra.mrb[0].mxu0 %v3913
    %v3986 = vpop.f32.mrb[0].mxu0
    %v3987 = vadd.f32 %v3908, %v3986
    %v3988 = vpop.f32.mrb[0].mxu0
    %3989 = vdwg.mxu0
    %v3990 = vadd.f32 %v3764, %v3982
    %v3991 = vadd.f32 %v3765, %v3987
    %s3992 = scalar_lea.vmem %s5, 32
    %v3993 = vld [vmem:[%s3992] sm:$0xff]
    %v3994 = vsel %vm58, %v3990, 0.0
    %3995 = vadd.xlane.f32.xlu0 %v3994
    %v3996 = vpop.xlane.xlu0 %3995
    %v3997 = vsel %vm58, %v3991, 0.0
    %3998 = vadd.xlane.f32.xlu0 %v3997
    %v3999 = vpop.xlane.xlu0 %3998
    %v4000 = vmul.f32 %v3996, %v65
    %v4001 = vmul.f32 %v3999, %v65
    %v4002 = vsub.f32 %v3990, %v4000
    %v4003 = vsub.f32 %v3991, %v4001
    %v4004 = vmul.f32 %v4002, %v4002
    %v4005 = vmul.f32 %v4003, %v4003
    %v4006 = vsel %vm58, %v4004, 0.0
    %4007 = vadd.xlane.f32.xlu0 %v4006
    %v4008 = vpop.xlane.xlu0 %4007
    %v4009 = vsel %vm58, %v4005, 0.0
    %4010 = vadd.xlane.f32.xlu0 %v4009
    %v4011 = vpop.xlane.xlu0 %4010
    %v4012 = vmul.f32 %v4008, %v65
    %v4013 = vmul.f32 %v4011, %v65
    %v4014 = vlaneseq
    %v4015 = vshrl.u32 %v4014, 7
    %v4016 = vsub.s32 0, %v4015
    %v4017 = vrot.slane %v3993, %v4016
    %v4018 = vmul.f32 %v4017, %v4002
    %v4019 = vmul.f32 %v4017, %v4003
    %v4020 = vadd.f32 %v4012, 1e-05
    %v4021 = vadd.f32 %v4013, 1e-05
    %v4022 = vrsqrt.pop %v4020
    %v4023 = vrsqrt.pop %v4021
    %v4024 = vmul.f32 %v4018, %v4022
    %v4025 = vmul.f32 %v4019, %v4023
    %v4026 = vlaneseq
    %v4027 = vshrl.u32 %v4026, 7
    %v4028 = vsub.s32 1, %v4027
    %v4029 = vrot.slane %v3993, %v4028
    %v4030 = vadd.f32 %v4024, %v4029
    %v4031 = vadd.f32 %v4025, %v4029
    %4032 = vst.msk [vmem:[#allocation7] sm:$0xff] %vm58, %v4030
    %4033 = vst.msk [vmem:[#allocation7 + $0x8] sm:$0xff] %vm58, %v4031
    // Predicated region
    $region34: #{encoder_forward.1} parent=1 // pred_check
      _
    $region35: #{encoder_forward.1} parent=1 // pred_check_branch
      %4035 = sbr.rel (0) target = $region37
    $region36: #{encoder_forward.1} parent=1 // pred_region
      %s4037 = ssub.s32 256, 256
      %4038 = vsyncadd [#allocation4], %s4037
      %s4039 = sshll.u32 [#allocation7], 4
      %s4040 = int_to_ptr.vmem [resolvable:$true] %s4039
      %4045 = dma.vmem_to_hbm [thread:$0]  %s4040, 256, %s6, [#allocation4], 128, 128, 8
    $region37: #{encoder_forward.1} parent=1 // pred_fallthru
      _
    // Predicated region
    $region38: #{encoder_forward.1} parent=1 // pred_check
      _
    $region39: #{encoder_forward.1} parent=1 // pred_check_branch
      %4047 = sbr.rel (0) target = $region41
    $region40: #{encoder_forward.1} parent=1 // pred_region
      %4048 = dma.done [#allocation4], 256
    $region41: #{encoder_forward.1} parent=1 // pred_fallthru
      _
    %4049 = vsyncpa [#allocation3], 1
    %4050 = vsyncpa [#allocation6], 1
    %4051 = vsyncpa [#allocation4], 1

</llo_original>
